<compile_context>
chip_gen: v6e
topology: v6e:2x2x1
jax: 0.10.0
libtpu: 0.0.40
codegen_flags: <defaults>
</compile_context>

<pallas_src>
import functools
import math

import jax
import jax.numpy as jnp
from jax.experimental import pallas as pl
from jax.experimental.pallas import tpu as pltpu

# ----- config (small synthetic stand-in for esm1 / esm1.args.embed_dim) -----
VOCAB = 33          # ESM alphabet size
PAD_IDX = 1         # ESM padding token index
EMBED_DIM = 32      # esm1.args.embed_dim (scaled down)
NUM_HEADS = 2
HEAD_DIM = EMBED_DIM // NUM_HEADS
FFN_DIM = 64
NUM_LAYERS = 2      # stands in for the 33 transformer layers ("repr_layers=[33]")
MAX_POS = 64
LN_EPS = 1e-5

B = 2               # batch
L = 8               # sequence length INCLUDING BOS/EOS tokens


# ============================ fused Pallas kernel ============================

def _fused_encoder_contact_kernel(
        x_ref, kbias_ref, pos_ref, ln_emb_ref,
        ln1_ref, wq_ref, wk_ref, wv_ref, bq_ref, bk_ref, bv_ref, wo_ref, bo_ref,
        ln2_ref, w1_ref, b1_ref, w2_ref, b2_ref,
        wp_ref, cbias_ref,
        o_ref, *, num_heads):
    """One grid step == bb sequences: full encoder + contact head, VMEM-resident."""
    bb, Lt, D = x_ref.shape
    dh = D // num_heads
    num_layers = wq_ref.shape[0]
    BL = bb * Lt
    scale = 1.0 / math.sqrt(dh)

    def ln(x, g, b):
        mu = jnp.mean(x, axis=-1, keepdims=True)
        xc = x - mu
        var = jnp.mean(xc * xc, axis=-1, keepdims=True)
        return xc * jax.lax.rsqrt(var + LN_EPS) * g + b

    def gelu(z):
        # tanh-approx GELU (single EUP tanh) — stands in for ESM's exact erf GELU.
        return 0.5 * z * (1.0 + jnp.tanh(0.7978845608028654 * (z + 0.044715 * z * z * z)))

    ln_emb = ln_emb_ref[...]                       # (4, D): [pre_g, pre_b, post_g, post_b]
    kbias = kbias_ref[...]                         # (bb, 1, L) key-padding bias (0 / -1e9)

    # ---- embedding + learned positions, pre-LN; flatten batch into matmul rows ----
    x = (x_ref[...] + pos_ref[...]).reshape(BL, D)            # (BL, D)
    x = ln(x, ln_emb[0:1, :], ln_emb[1:2, :])                 # emb_layer_norm_before

    # ---- transformer layers (unrolled; toy config keeps all weights VMEM-resident) ----
    # TODO(synk): for real ESM size (33 layers, D=1280) stream one layer's weights per
    # grid step ("arbitrary" layer axis + x carried in VMEM scratch) instead.
    for l in range(num_layers):
        # pre-LN multi-head self-attention, per-head lane-aligned projections
        h = ln(x, ln1_ref[l, 0:1, :], ln1_ref[l, 1:2, :])
        hb = h.astype(jnp.bfloat16)
        attn = jnp.zeros((BL, D), jnp.float32)
        for hh in range(num_heads):
            q = jnp.dot(hb, wq_ref[l, hh], preferred_element_type=jnp.float32) + bq_ref[l, hh]
            k = jnp.dot(hb, wk_ref[l, hh], preferred_element_type=jnp.float32) + bk_ref[l, hh]
            v = jnp.dot(hb, wv_ref[l, hh], preferred_element_type=jnp.float32) + bv_ref[l, hh]
            q3 = (q * scale).reshape(bb, Lt, dh)
            k3 = k.reshape(bb, Lt, dh)
            v3 = v.reshape(bb, Lt, dh)
            s = jnp.einsum('bqd,bkd->bqk', q3, k3,
                           preferred_element_type=jnp.float32) + kbias       # (bb, L, L)
            s = s - jnp.max(s, axis=-1, keepdims=True)
            p = jnp.exp(s)
            p = p * pl.reciprocal(jnp.sum(p, axis=-1, keepdims=True), approx=True)
            ctx = jnp.einsum('bqk,bkd->bqd', p, v3,
                             preferred_element_type=jnp.float32)             # (bb, L, dh)
            attn = attn + jnp.dot(ctx.reshape(BL, dh).astype(jnp.bfloat16), wo_ref[l, hh],
                                  preferred_element_type=jnp.float32)
        x = x + attn + bo_ref[l]

        # pre-LN feed-forward with tanh-GELU
        h = ln(x, ln2_ref[l, 0:1, :], ln2_ref[l, 1:2, :])
        f = jnp.dot(h.astype(jnp.bfloat16), w1_ref[l],
                    preferred_element_type=jnp.float32) + b1_ref[l]
        f = gelu(f)
        x = x + jnp.dot(f.astype(jnp.bfloat16), w2_ref[l],
                        preferred_element_type=jnp.float32) + b2_ref[l]

    # ---- final LN -> outputs['representations'][33] ----
    hrep = ln(x, ln_emb[2:3, :], ln_emb[3:4, :])              # (BL, D), f32
    hrep3 = hrep.reshape(bb, Lt, D)

    # ---- PairwiseContactPredictionHead (eval: Dropout = identity) ----
    # Under (P + P^T)/2 the antisymmetric diff-feature term cancels exactly and the
    # prod-feature term is already symmetric; only prod-weights + bias survive.
    wp = wp_ref[...]                                          # (2, D), f32
    cbias = cbias_ref[...]                                    # (1, 2)
    for c in range(2):
        hp = hrep3 * wp[c:c + 1, :]                           # (bb, L, D)
        prod = jnp.einsum('bqd,bkd->bqk', hp, hrep3,
                          preferred_element_type=jnp.float32)  # (bb, L, L), symmetric
        o_ref[:, c, :, :] = prod + cbias[:, c:c + 1]


# ============================ params (pre-packed) ============================

def init_params(key):
    """Synthetic ESM-style weights, pre-split per head / pre-transposed for the kernel."""
    def normal(k, shape, dtype=jnp.float32):
        return (0.02 * jax.random.normal(k, shape, dtype=jnp.float32)).astype(dtype)

    D, H, dh, F, NL = EMBED_DIM, NUM_HEADS, HEAD_DIM, FFN_DIM, NUM_LAYERS
    keys = iter(jax.random.split(key, 16))
    ones = jnp.ones((D,), jnp.float32)
    zeros = jnp.zeros((D,), jnp.float32)
    ln_pair = jnp.tile(jnp.stack([ones, zeros])[None], (NL, 1, 1))          # (NL, 2, D)

    return {
        "embed_tokens": normal(next(keys), (VOCAB, D)),
        "embed_positions": normal(next(keys), (MAX_POS, D)),
        # rows: [emb_ln_before.gamma, emb_ln_before.beta, emb_ln_after.gamma, emb_ln_after.beta]
        "ln_emb": jnp.stack([ones, zeros, ones, zeros]),
        "ln1": ln_pair,                                  # per-layer self_attn_layer_norm
        "ln2": ln_pair,                                  # per-layer final_layer_norm
        # per-head, pre-transposed projection weights (bf16 at rest -> MXU inputs)
        "wq": normal(next(keys), (NL, H, D, dh), jnp.bfloat16),
        "wk": normal(next(keys), (NL, H, D, dh), jnp.bfloat16),
        "wv": normal(next(keys), (NL, H, D, dh), jnp.bfloat16),
        "bq": jnp.zeros((NL, H, 1, dh), jnp.float32),
        "bk": jnp.zeros((NL, H, 1, dh), jnp.float32),
        "bv": jnp.zeros((NL, H, 1, dh), jnp.float32),
        "wo": normal(next(keys), (NL, H, dh, D), jnp.bfloat16),
        "bo": jnp.zeros((NL, 1, D), jnp.float32),
        "w1": normal(next(keys), (NL, D, F), jnp.bfloat16),
        "b1": jnp.zeros((NL, 1, F), jnp.float32),
        "w2": normal(next(keys), (NL, F, D), jnp.bfloat16),
        "b2": jnp.zeros((NL, 1, D), jnp.float32),
        # PairwiseContactPredictionHead: nn.Linear(2*D, 2) over [prod, diff] features
        "contact_w": normal(next(keys), (2, 2 * D)),
        "contact_b": jnp.zeros((1, 2), jnp.float32),     # torch bias (2,) kept 2-D for TPU
    }


# ============================ forward (glue + fused kernel) ============================

def _seqs_per_step(batch):
    # v7x has 2 TensorCores/chip: keep a 2-way "parallel" batch axis there.
    # v5e/v6e are single-TC (grid is a serial loop): collapse the batch into one step.
    kind = jax.devices()[0].device_kind.lower()
    if ("v7" in kind or "7x" in kind) and batch % 2 == 0:
        return batch // 2
    return batch


def protein_bert_for_contact_prediction(params, input_ids, protein_length,
                                         targets=None, policy=None,
                                         finetune=True, finetune_emb=True):
    # finetune / finetune_emb only toggle requires_grad (training-time); no forward effect.
    # TODO(synk): `policy` (PAF routing inside ProteinBertModel_paf) not modeled.
    Bt, Lt = input_ids.shape
    D, H, dh, F, NL = EMBED_DIM, NUM_HEADS, HEAD_DIM, FFN_DIM, NUM_LAYERS

    bb = _seqs_per_step(Bt)          # sequences per grid step
    grid = (Bt // bb,)

    # token-embedding gather + key-padding bias stay in XLA (tiny ops); all else fused.
    x = jnp.take(params["embed_tokens"], input_ids, axis=0)                   # (B, L, D)
    kbias = jnp.where(input_ids == PAD_IDX, -1e9, 0.0).astype(jnp.float32)[:, None, :]
    pos = params["embed_positions"][:Lt]                                      # (L, D)
    wp = params["contact_w"][:, :D]   # diff-feature half cancels under symmetrization

    c2 = lambda shape: pl.BlockSpec(shape, lambda g: (0, 0))
    c3 = lambda shape: pl.BlockSpec(shape, lambda g: (0, 0, 0))
    c4 = lambda shape: pl.BlockSpec(shape, lambda g: (0, 0, 0, 0))

    out = pl.pallas_call(
        functools.partial(_fused_encoder_contact_kernel, num_heads=H),
        out_shape=jax.ShapeDtypeStruct((Bt, 2, Lt, Lt), jnp.float32),
        grid=grid,
        in_specs=[
            pl.BlockSpec((bb, Lt, D), lambda g: (g, 0, 0)),        # token embeddings
            pl.BlockSpec((bb, 1, Lt), lambda g: (g, 0, 0)),        # key-padding bias
            c2((Lt, D)),                                           # positions
            c2((4, D)),                                            # emb LN before/after
            c3((NL, 2, D)),                                        # ln1
            c4((NL, H, D, dh)), c4((NL, H, D, dh)), c4((NL, H, D, dh)),   # wq wk wv
            c4((NL, H, 1, dh)), c4((NL, H, 1, dh)), c4((NL, H, 1, dh)),   # bq bk bv
            c4((NL, H, dh, D)),                                    # wo
            c3((NL, 1, D)),                                        # bo
            c3((NL, 2, D)),                                        # ln2
            c3((NL, D, F)), c3((NL, 1, F)),                        # w1 b1
            c3((NL, F, D)), c3((NL, 1, D)),                        # w2 b2
            c2((2, D)),                                            # contact prod-weights
            c2((1, 2)),                                            # contact bias
        ],
        out_specs=pl.BlockSpec((bb, 2, Lt, Lt), lambda g: (g, 0, 0, 0)),
        compiler_params=pltpu.CompilerParams(
            dimension_semantics=("parallel",)),   # shards batch across TCs on v7x
    )(x, kbias, pos, params["ln_emb"], params["ln1"],
      params["wq"], params["wk"], params["wv"],
      params["bq"], params["bk"], params["bv"],
      params["wo"], params["bo"], params["ln2"],
      params["w1"], params["b1"], params["w2"], params["b2"],
      wp, params["contact_b"])

    # BOS/EOS strip, exact (P+P^T)/2 and channel-last layout: tiny XLA ops kept out of
    # the kernel so its output stores stay lane-dense / offset-0.
    pred = out[:, :, 1:-1, 1:-1]
    pred = 0.5 * (pred + jnp.swapaxes(pred, 2, 3))
    prediction = jnp.transpose(pred, (0, 2, 3, 1))                  # (B, L-2, L-2, 2)
    # TODO(synk): targets branch (CrossEntropyLoss + precision_at_l5 metric) omitted;
    # targets=None path is what this script exercises, protein_length is unused then.
    del protein_length, targets
    return (prediction,)


if __name__ == "__main__":
    key = jax.random.PRNGKey(0)
    params = init_params(key)

    input_ids = jax.random.randint(jax.random.fold_in(key, 123),
                                   (B, L), 0, VOCAB, dtype=jnp.int32)
    protein_length = jnp.full((B,), L - 2, dtype=jnp.int32)

    fwd = jax.jit(protein_bert_for_contact_prediction)
    outputs = fwd(params, input_ids, protein_length)
    prediction = outputs[0]
    jax.block_until_ready(prediction)

    assert prediction.shape == (B, L - 2, L - 2, 2), prediction.shape
    assert prediction.dtype == jnp.float32
    assert bool(jnp.all(jnp.isfinite(prediction)))
    # prediction must be symmetric over the two residue axes (reference semantics)
    assert bool(jnp.allclose(prediction, jnp.swapaxes(prediction, 1, 2), atol=1e-5))
    print("KERNEL_OK")
</pallas_src>

<mosaic_0001>
module attributes {stable_mosaic.version = 11 : i64} {
  func.func @_fused_encoder_contact_kernel(%arg0: i32, %arg1: memref<2x8x32xf32, #tpu.memory_space<vmem>>, %arg2: memref<2x1x8xf32, #tpu.memory_space<vmem>>, %arg3: memref<8x32xf32, #tpu.memory_space<vmem>>, %arg4: memref<4x32xf32, #tpu.memory_space<vmem>>, %arg5: memref<2x2x32xf32, #tpu.memory_space<vmem>>, %arg6: memref<2x2x32x16xbf16, #tpu.memory_space<vmem>>, %arg7: memref<2x2x32x16xbf16, #tpu.memory_space<vmem>>, %arg8: memref<2x2x32x16xbf16, #tpu.memory_space<vmem>>, %arg9: memref<2x2x1x16xf32, #tpu.memory_space<vmem>>, %arg10: memref<2x2x1x16xf32, #tpu.memory_space<vmem>>, %arg11: memref<2x2x1x16xf32, #tpu.memory_space<vmem>>, %arg12: memref<2x2x16x32xbf16, #tpu.memory_space<vmem>>, %arg13: memref<2x1x32xf32, #tpu.memory_space<vmem>>, %arg14: memref<2x2x32xf32, #tpu.memory_space<vmem>>, %arg15: memref<2x32x64xbf16, #tpu.memory_space<vmem>>, %arg16: memref<2x1x64xf32, #tpu.memory_space<vmem>>, %arg17: memref<2x64x32xbf16, #tpu.memory_space<vmem>>, %arg18: memref<2x1x32xf32, #tpu.memory_space<vmem>>, %arg19: memref<2x32xf32, #tpu.memory_space<vmem>>, %arg20: memref<1x2xf32, #tpu.memory_space<vmem>>, %arg21: memref<2x2x8x8xf32, #tpu.memory_space<vmem>>) attributes {dimension_semantics = [#tpu.dimension_semantics<parallel>], iteration_bounds = array<i64: 1>, scalar_prefetch = 0 : i64, scratch_operands = 0 : i64, tpu.core_type = #tpu.core_type<tc>, window_params = [{transform_indices = @transform_0, window_bounds = array<i64: 2, 8, 32>}, {transform_indices = @transform_1, window_bounds = array<i64: 2, 1, 8>}, {pipeline_mode = #tpu.pipeline_mode<synchronous>, transform_indices = @transform_2, window_bounds = array<i64: 8, 32>}, {pipeline_mode = #tpu.pipeline_mode<synchronous>, transform_indices = @transform_3, window_bounds = array<i64: 4, 32>}, {pipeline_mode = #tpu.pipeline_mode<synchronous>, transform_indices = @transform_4, window_bounds = array<i64: 2, 2, 32>}, {pipeline_mode = #tpu.pipeline_mode<synchronous>, transform_indices = @transform_5, window_bounds = array<i64: 2, 2, 32, 16>}, {pipeline_mode = #tpu.pipeline_mode<synchronous>, transform_indices = @transform_6, window_bounds = array<i64: 2, 2, 32, 16>}, {pipeline_mode = #tpu.pipeline_mode<synchronous>, transform_indices = @transform_7, window_bounds = array<i64: 2, 2, 32, 16>}, {pipeline_mode = #tpu.pipeline_mode<synchronous>, transform_indices = @transform_8, window_bounds = array<i64: 2, 2, 1, 16>}, {pipeline_mode = #tpu.pipeline_mode<synchronous>, transform_indices = @transform_9, window_bounds = array<i64: 2, 2, 1, 16>}, {pipeline_mode = #tpu.pipeline_mode<synchronous>, transform_indices = @transform_10, window_bounds = array<i64: 2, 2, 1, 16>}, {pipeline_mode = #tpu.pipeline_mode<synchronous>, transform_indices = @transform_11, window_bounds = array<i64: 2, 2, 16, 32>}, {pipeline_mode = #tpu.pipeline_mode<synchronous>, transform_indices = @transform_12, window_bounds = array<i64: 2, 1, 32>}, {pipeline_mode = #tpu.pipeline_mode<synchronous>, transform_indices = @transform_13, window_bounds = array<i64: 2, 2, 32>}, {pipeline_mode = #tpu.pipeline_mode<synchronous>, transform_indices = @transform_14, window_bounds = array<i64: 2, 32, 64>}, {pipeline_mode = #tpu.pipeline_mode<synchronous>, transform_indices = @transform_15, window_bounds = array<i64: 2, 1, 64>}, {pipeline_mode = #tpu.pipeline_mode<synchronous>, transform_indices = @transform_16, window_bounds = array<i64: 2, 64, 32>}, {pipeline_mode = #tpu.pipeline_mode<synchronous>, transform_indices = @transform_17, window_bounds = array<i64: 2, 1, 32>}, {pipeline_mode = #tpu.pipeline_mode<synchronous>, transform_indices = @transform_18, window_bounds = array<i64: 2, 32>}, {pipeline_mode = #tpu.pipeline_mode<synchronous>, transform_indices = @transform_19, window_bounds = array<i64: 1, 2>}, {transform_indices = @transform_20, window_bounds = array<i64: 2, 2, 8, 8>}]} {
    %c0 = arith.constant 0 : index
    %c0_0 = arith.constant 0 : index
    %0 = vector.load %arg4[%c0, %c0_0] : memref<4x32xf32, #tpu.memory_space<vmem>>, vector<4x32xf32>
    %c0_1 = arith.constant 0 : index
    %c0_2 = arith.constant 0 : index
    %c0_3 = arith.constant 0 : index
    %1 = vector.load %arg2[%c0_1, %c0_2, %c0_3] : memref<2x1x8xf32, #tpu.memory_space<vmem>>, vector<2x1x8xf32>
    %c0_4 = arith.constant 0 : index
    %c0_5 = arith.constant 0 : index
    %c0_6 = arith.constant 0 : index
    %2 = vector.load %arg1[%c0_4, %c0_5, %c0_6] : memref<2x8x32xf32, #tpu.memory_space<vmem>>, vector<2x8x32xf32>
    %c0_7 = arith.constant 0 : index
    %c0_8 = arith.constant 0 : index
    %3 = vector.load %arg3[%c0_7, %c0_8] : memref<8x32xf32, #tpu.memory_space<vmem>>, vector<8x32xf32>
    %4 = vector.shape_cast %3 : vector<8x32xf32> to vector<1x8x32xf32>
    %5 = vector.broadcast %4 : vector<1x8x32xf32> to vector<2x8x32xf32>
    %6 = arith.addf %2, %5 : vector<2x8x32xf32>
    %7 = vector.shape_cast %6 : vector<2x8x32xf32> to vector<16x32xf32>
    %8 = vector.extract_strided_slice %0 {offsets = [0, 0], sizes = [1, 32], strides = [1, 1]} : vector<4x32xf32> to vector<1x32xf32>
    %9 = vector.extract_strided_slice %0 {offsets = [1, 0], sizes = [1, 32], strides = [1, 1]} : vector<4x32xf32> to vector<1x32xf32>
    %cst = arith.constant dense<0.000000e+00> : vector<16xf32>
    %10 = vector.multi_reduction <add>, %7, %cst [1] : vector<16x32xf32> to vector<16xf32>
    %11 = vector.shape_cast %10 : vector<16xf32> to vector<16x1xf32>
    %cst_9 = arith.constant 3.200000e+01 : f32
    %12 = vector.broadcast %cst_9 : f32 to vector<16x1xf32>
    %13 = arith.divf %11, %12 : vector<16x1xf32>
    %14 = vector.broadcast %13 : vector<16x1xf32> to vector<16x32xf32>
    %15 = arith.subf %7, %14 : vector<16x32xf32>
    %16 = arith.mulf %15, %15 : vector<16x32xf32>
    %cst_10 = arith.constant dense<0.000000e+00> : vector<16xf32>
    %17 = vector.multi_reduction <add>, %16, %cst_10 [1] : vector<16x32xf32> to vector<16xf32>
    %18 = vector.shape_cast %17 : vector<16xf32> to vector<16x1xf32>
    %cst_11 = arith.constant 3.200000e+01 : f32
    %19 = vector.broadcast %cst_11 : f32 to vector<16x1xf32>
    %20 = arith.divf %18, %19 : vector<16x1xf32>
    %cst_12 = arith.constant 9.99999974E-6 : f32
    %21 = vector.broadcast %cst_12 : f32 to vector<16x1xf32>
    %22 = arith.addf %20, %21 : vector<16x1xf32>
    %23 = math.rsqrt %22 : vector<16x1xf32>
    %24 = vector.broadcast %23 : vector<16x1xf32> to vector<16x32xf32>
    %25 = arith.mulf %15, %24 : vector<16x32xf32>
    %26 = vector.broadcast %8 : vector<1x32xf32> to vector<16x32xf32>
    %27 = arith.mulf %25, %26 : vector<16x32xf32>
    %28 = vector.broadcast %9 : vector<1x32xf32> to vector<16x32xf32>
    %29 = arith.addf %27, %28 : vector<16x32xf32>
    %c0_13 = arith.constant 0 : index
    %c0_14 = arith.constant 0 : index
    %c0_15 = arith.constant 0 : index
    %30 = vector.load %arg5[%c0_13, %c0_14, %c0_15] : memref<2x2x32xf32, #tpu.memory_space<vmem>>, vector<1x1x32xf32>
    %31 = vector.shape_cast %30 : vector<1x1x32xf32> to vector<1x32xf32>
    %c0_16 = arith.constant 0 : index
    %c1 = arith.constant 1 : index
    %c0_17 = arith.constant 0 : index
    %32 = vector.load %arg5[%c0_16, %c1, %c0_17] : memref<2x2x32xf32, #tpu.memory_space<vmem>>, vector<1x1x32xf32>
    %33 = vector.shape_cast %32 : vector<1x1x32xf32> to vector<1x32xf32>
    %cst_18 = arith.constant dense<0.000000e+00> : vector<16xf32>
    %34 = vector.multi_reduction <add>, %29, %cst_18 [1] : vector<16x32xf32> to vector<16xf32>
    %35 = vector.shape_cast %34 : vector<16xf32> to vector<16x1xf32>
    %cst_19 = arith.constant 3.200000e+01 : f32
    %36 = vector.broadcast %cst_19 : f32 to vector<16x1xf32>
    %37 = arith.divf %35, %36 : vector<16x1xf32>
    %38 = vector.broadcast %37 : vector<16x1xf32> to vector<16x32xf32>
    %39 = arith.subf %29, %38 : vector<16x32xf32>
    %40 = arith.mulf %39, %39 : vector<16x32xf32>
    %cst_20 = arith.constant dense<0.000000e+00> : vector<16xf32>
    %41 = vector.multi_reduction <add>, %40, %cst_20 [1] : vector<16x32xf32> to vector<16xf32>
    %42 = vector.shape_cast %41 : vector<16xf32> to vector<16x1xf32>
    %cst_21 = arith.constant 3.200000e+01 : f32
    %43 = vector.broadcast %cst_21 : f32 to vector<16x1xf32>
    %44 = arith.divf %42, %43 : vector<16x1xf32>
    %cst_22 = arith.constant 9.99999974E-6 : f32
    %45 = vector.broadcast %cst_22 : f32 to vector<16x1xf32>
    %46 = arith.addf %44, %45 : vector<16x1xf32>
    %47 = math.rsqrt %46 : vector<16x1xf32>
    %48 = vector.broadcast %47 : vector<16x1xf32> to vector<16x32xf32>
    %49 = arith.mulf %39, %48 : vector<16x32xf32>
    %50 = vector.broadcast %31 : vector<1x32xf32> to vector<16x32xf32>
    %51 = arith.mulf %49, %50 : vector<16x32xf32>
    %52 = vector.broadcast %33 : vector<1x32xf32> to vector<16x32xf32>
    %53 = arith.addf %51, %52 : vector<16x32xf32>
    %54 = arith.truncf %53 : vector<16x32xf32> to vector<16x32xbf16>
    %cst_23 = arith.constant 0.000000e+00 : f32
    %55 = vector.broadcast %cst_23 : f32 to vector<16x32xf32>
    %c0_24 = arith.constant 0 : index
    %c0_25 = arith.constant 0 : index
    %c0_26 = arith.constant 0 : index
    %c0_27 = arith.constant 0 : index
    %56 = vector.load %arg6[%c0_24, %c0_25, %c0_26, %c0_27] : memref<2x2x32x16xbf16, #tpu.memory_space<vmem>>, vector<1x1x32x16xbf16>
    %57 = vector.shape_cast %56 : vector<1x1x32x16xbf16> to vector<32x16xbf16>
    %cst_28 = arith.constant dense<0.000000e+00> : vector<16x16xf32>
    %58 = tpu.matmul %54, %57, %cst_28 {dimension_numbers = #tpu.dot_dimension_numbers<[1], [0], [0], [1], [0, 0, 1, 1], [], []>} : vector<16x32xbf16>, vector<32x16xbf16>, vector<16x16xf32> -> vector<16x16xf32>
    %c0_29 = arith.constant 0 : index
    %c0_30 = arith.constant 0 : index
    %c0_31 = arith.constant 0 : index
    %c0_32 = arith.constant 0 : index
    %59 = vector.load %arg9[%c0_29, %c0_30, %c0_31, %c0_32] : memref<2x2x1x16xf32, #tpu.memory_space<vmem>>, vector<1x1x1x16xf32>
    %60 = vector.shape_cast %59 : vector<1x1x1x16xf32> to vector<1x16xf32>
    %61 = vector.broadcast %60 : vector<1x16xf32> to vector<16x16xf32>
    %62 = arith.addf %58, %61 : vector<16x16xf32>
    %c0_33 = arith.constant 0 : index
    %c0_34 = arith.constant 0 : index
    %c0_35 = arith.constant 0 : index
    %c0_36 = arith.constant 0 : index
    %63 = vector.load %arg7[%c0_33, %c0_34, %c0_35, %c0_36] : memref<2x2x32x16xbf16, #tpu.memory_space<vmem>>, vector<1x1x32x16xbf16>
    %64 = vector.shape_cast %63 : vector<1x1x32x16xbf16> to vector<32x16xbf16>
    %cst_37 = arith.constant dense<0.000000e+00> : vector<16x16xf32>
    %65 = tpu.matmul %54, %64, %cst_37 {dimension_numbers = #tpu.dot_dimension_numbers<[1], [0], [0], [1], [0, 0, 1, 1], [], []>} : vector<16x32xbf16>, vector<32x16xbf16>, vector<16x16xf32> -> vector<16x16xf32>
    %c0_38 = arith.constant 0 : index
    %c0_39 = arith.constant 0 : index
    %c0_40 = arith.constant 0 : index
    %c0_41 = arith.constant 0 : index
    %66 = vector.load %arg10[%c0_38, %c0_39, %c0_40, %c0_41] : memref<2x2x1x16xf32, #tpu.memory_space<vmem>>, vector<1x1x1x16xf32>
    %67 = vector.shape_cast %66 : vector<1x1x1x16xf32> to vector<1x16xf32>
    %68 = vector.broadcast %67 : vector<1x16xf32> to vector<16x16xf32>
    %69 = arith.addf %65, %68 : vector<16x16xf32>
    %c0_42 = arith.constant 0 : index
    %c0_43 = arith.constant 0 : index
    %c0_44 = arith.constant 0 : index
    %c0_45 = arith.constant 0 : index
    %70 = vector.load %arg8[%c0_42, %c0_43, %c0_44, %c0_45] : memref<2x2x32x16xbf16, #tpu.memory_space<vmem>>, vector<1x1x32x16xbf16>
    %71 = vector.shape_cast %70 : vector<1x1x32x16xbf16> to vector<32x16xbf16>
    %cst_46 = arith.constant dense<0.000000e+00> : vector<16x16xf32>
    %72 = tpu.matmul %54, %71, %cst_46 {dimension_numbers = #tpu.dot_dimension_numbers<[1], [0], [0], [1], [0, 0, 1, 1], [], []>} : vector<16x32xbf16>, vector<32x16xbf16>, vector<16x16xf32> -> vector<16x16xf32>
    %c0_47 = arith.constant 0 : index
    %c0_48 = arith.constant 0 : index
    %c0_49 = arith.constant 0 : index
    %c0_50 = arith.constant 0 : index
    %73 = vector.load %arg11[%c0_47, %c0_48, %c0_49, %c0_50] : memref<2x2x1x16xf32, #tpu.memory_space<vmem>>, vector<1x1x1x16xf32>
    %74 = vector.shape_cast %73 : vector<1x1x1x16xf32> to vector<1x16xf32>
    %75 = vector.broadcast %74 : vector<1x16xf32> to vector<16x16xf32>
    %76 = arith.addf %72, %75 : vector<16x16xf32>
    %cst_51 = arith.constant 2.500000e-01 : f32
    %77 = vector.broadcast %cst_51 : f32 to vector<16x16xf32>
    %78 = arith.mulf %62, %77 : vector<16x16xf32>
    %79 = vector.shape_cast %78 : vector<16x16xf32> to vector<2x8x16xf32>
    %80 = vector.shape_cast %69 : vector<16x16xf32> to vector<2x8x16xf32>
    %81 = vector.shape_cast %76 : vector<16x16xf32> to vector<2x8x16xf32>
    "tpu.trace_start"() <{level = 10 : i32, message = "bqd,bkd->bqk"}> : () -> ()
    %cst_52 = arith.constant dense<0.000000e+00> : vector<2x8x8xf32>
    %82 = tpu.matmul %79, %80, %cst_52 {dimension_numbers = #tpu.dot_dimension_numbers<[2], [2], [1], [1], [0, 0, 0, 1, 1, 1], [0], [0]>} : vector<2x8x16xf32>, vector<2x8x16xf32>, vector<2x8x8xf32> -> vector<2x8x8xf32>
    "tpu.trace_stop"() : () -> ()
    %83 = vector.broadcast %1 : vector<2x1x8xf32> to vector<2x8x8xf32>
    %84 = arith.addf %82, %83 : vector<2x8x8xf32>
    %cst_53 = arith.constant dense<0xFF800000> : vector<2x8xf32>
    %85 = vector.multi_reduction <maximumf>, %84, %cst_53 [2] : vector<2x8x8xf32> to vector<2x8xf32>
    %86 = vector.shape_cast %85 : vector<2x8xf32> to vector<2x8x1xf32>
    %87 = vector.broadcast %86 : vector<2x8x1xf32> to vector<2x8x8xf32>
    %88 = arith.subf %84, %87 : vector<2x8x8xf32>
    %89 = math.exp %88 : vector<2x8x8xf32>
    %cst_54 = arith.constant dense<0.000000e+00> : vector<2x8xf32>
    %90 = vector.multi_reduction <add>, %89, %cst_54 [2] : vector<2x8x8xf32> to vector<2x8xf32>
    %91 = vector.shape_cast %90 : vector<2x8xf32> to vector<2x8x1xf32>
    %92 = tpu.reciprocal %91 {approx = true} : vector<2x8x1xf32> -> vector<2x8x1xf32>
    %93 = vector.broadcast %92 : vector<2x8x1xf32> to vector<2x8x8xf32>
    %94 = arith.mulf %89, %93 : vector<2x8x8xf32>
    "tpu.trace_start"() <{level = 10 : i32, message = "bqk,bkd->bqd"}> : () -> ()
    %cst_55 = arith.constant dense<0.000000e+00> : vector<2x8x16xf32>
    %95 = tpu.matmul %94, %81, %cst_55 {dimension_numbers = #tpu.dot_dimension_numbers<[2], [1], [1], [2], [0, 0, 0, 1, 1, 2], [0], [0]>} : vector<2x8x8xf32>, vector<2x8x16xf32>, vector<2x8x16xf32> -> vector<2x8x16xf32>
    "tpu.trace_stop"() : () -> ()
    %96 = vector.shape_cast %95 : vector<2x8x16xf32> to vector<16x16xf32>
    %97 = arith.truncf %96 : vector<16x16xf32> to vector<16x16xbf16>
    %c0_56 = arith.constant 0 : index
    %c0_57 = arith.constant 0 : index
    %c0_58 = arith.constant 0 : index
    %c0_59 = arith.constant 0 : index
    %98 = vector.load %arg12[%c0_56, %c0_57, %c0_58, %c0_59] : memref<2x2x16x32xbf16, #tpu.memory_space<vmem>>, vector<1x1x16x32xbf16>
    %99 = vector.shape_cast %98 : vector<1x1x16x32xbf16> to vector<16x32xbf16>
    %cst_60 = arith.constant dense<0.000000e+00> : vector<16x32xf32>
    %100 = tpu.matmul %97, %99, %cst_60 {dimension_numbers = #tpu.dot_dimension_numbers<[1], [0], [0], [1], [0, 0, 1, 1], [], []>} : vector<16x16xbf16>, vector<16x32xbf16>, vector<16x32xf32> -> vector<16x32xf32>
    %101 = arith.addf %55, %100 : vector<16x32xf32>
    %c0_61 = arith.constant 0 : index
    %c1_62 = arith.constant 1 : index
    %c0_63 = arith.constant 0 : index
    %c0_64 = arith.constant 0 : index
    %102 = vector.load %arg6[%c0_61, %c1_62, %c0_63, %c0_64] : memref<2x2x32x16xbf16, #tpu.memory_space<vmem>>, vector<1x1x32x16xbf16>
    %103 = vector.shape_cast %102 : vector<1x1x32x16xbf16> to vector<32x16xbf16>
    %cst_65 = arith.constant dense<0.000000e+00> : vector<16x16xf32>
    %104 = tpu.matmul %54, %103, %cst_65 {dimension_numbers = #tpu.dot_dimension_numbers<[1], [0], [0], [1], [0, 0, 1, 1], [], []>} : vector<16x32xbf16>, vector<32x16xbf16>, vector<16x16xf32> -> vector<16x16xf32>
    %c0_66 = arith.constant 0 : index
    %c1_67 = arith.constant 1 : index
    %c0_68 = arith.constant 0 : index
    %c0_69 = arith.constant 0 : index
    %105 = vector.load %arg9[%c0_66, %c1_67, %c0_68, %c0_69] : memref<2x2x1x16xf32, #tpu.memory_space<vmem>>, vector<1x1x1x16xf32>
    %106 = vector.shape_cast %105 : vector<1x1x1x16xf32> to vector<1x16xf32>
    %107 = vector.broadcast %106 : vector<1x16xf32> to vector<16x16xf32>
    %108 = arith.addf %104, %107 : vector<16x16xf32>
    %c0_70 = arith.constant 0 : index
    %c1_71 = arith.constant 1 : index
    %c0_72 = arith.constant 0 : index
    %c0_73 = arith.constant 0 : index
    %109 = vector.load %arg7[%c0_70, %c1_71, %c0_72, %c0_73] : memref<2x2x32x16xbf16, #tpu.memory_space<vmem>>, vector<1x1x32x16xbf16>
    %110 = vector.shape_cast %109 : vector<1x1x32x16xbf16> to vector<32x16xbf16>
    %cst_74 = arith.constant dense<0.000000e+00> : vector<16x16xf32>
    %111 = tpu.matmul %54, %110, %cst_74 {dimension_numbers = #tpu.dot_dimension_numbers<[1], [0], [0], [1], [0, 0, 1, 1], [], []>} : vector<16x32xbf16>, vector<32x16xbf16>, vector<16x16xf32> -> vector<16x16xf32>
    %c0_75 = arith.constant 0 : index
    %c1_76 = arith.constant 1 : index
    %c0_77 = arith.constant 0 : index
    %c0_78 = arith.constant 0 : index
    %112 = vector.load %arg10[%c0_75, %c1_76, %c0_77, %c0_78] : memref<2x2x1x16xf32, #tpu.memory_space<vmem>>, vector<1x1x1x16xf32>
    %113 = vector.shape_cast %112 : vector<1x1x1x16xf32> to vector<1x16xf32>
    %114 = vector.broadcast %113 : vector<1x16xf32> to vector<16x16xf32>
    %115 = arith.addf %111, %114 : vector<16x16xf32>
    %c0_79 = arith.constant 0 : index
    %c1_80 = arith.constant 1 : index
    %c0_81 = arith.constant 0 : index
    %c0_82 = arith.constant 0 : index
    %116 = vector.load %arg8[%c0_79, %c1_80, %c0_81, %c0_82] : memref<2x2x32x16xbf16, #tpu.memory_space<vmem>>, vector<1x1x32x16xbf16>
    %117 = vector.shape_cast %116 : vector<1x1x32x16xbf16> to vector<32x16xbf16>
    %cst_83 = arith.constant dense<0.000000e+00> : vector<16x16xf32>
    %118 = tpu.matmul %54, %117, %cst_83 {dimension_numbers = #tpu.dot_dimension_numbers<[1], [0], [0], [1], [0, 0, 1, 1], [], []>} : vector<16x32xbf16>, vector<32x16xbf16>, vector<16x16xf32> -> vector<16x16xf32>
    %c0_84 = arith.constant 0 : index
    %c1_85 = arith.constant 1 : index
    %c0_86 = arith.constant 0 : index
    %c0_87 = arith.constant 0 : index
    %119 = vector.load %arg11[%c0_84, %c1_85, %c0_86, %c0_87] : memref<2x2x1x16xf32, #tpu.memory_space<vmem>>, vector<1x1x1x16xf32>
    %120 = vector.shape_cast %119 : vector<1x1x1x16xf32> to vector<1x16xf32>
    %121 = vector.broadcast %120 : vector<1x16xf32> to vector<16x16xf32>
    %122 = arith.addf %118, %121 : vector<16x16xf32>
    %cst_88 = arith.constant 2.500000e-01 : f32
    %123 = vector.broadcast %cst_88 : f32 to vector<16x16xf32>
    %124 = arith.mulf %108, %123 : vector<16x16xf32>
    %125 = vector.shape_cast %124 : vector<16x16xf32> to vector<2x8x16xf32>
    %126 = vector.shape_cast %115 : vector<16x16xf32> to vector<2x8x16xf32>
    %127 = vector.shape_cast %122 : vector<16x16xf32> to vector<2x8x16xf32>
    "tpu.trace_start"() <{level = 10 : i32, message = "bqd,bkd->bqk"}> : () -> ()
    %cst_89 = arith.constant dense<0.000000e+00> : vector<2x8x8xf32>
    %128 = tpu.matmul %125, %126, %cst_89 {dimension_numbers = #tpu.dot_dimension_numbers<[2], [2], [1], [1], [0, 0, 0, 1, 1, 1], [0], [0]>} : vector<2x8x16xf32>, vector<2x8x16xf32>, vector<2x8x8xf32> -> vector<2x8x8xf32>
    "tpu.trace_stop"() : () -> ()
    %129 = vector.broadcast %1 : vector<2x1x8xf32> to vector<2x8x8xf32>
    %130 = arith.addf %128, %129 : vector<2x8x8xf32>
    %cst_90 = arith.constant dense<0xFF800000> : vector<2x8xf32>
    %131 = vector.multi_reduction <maximumf>, %130, %cst_90 [2] : vector<2x8x8xf32> to vector<2x8xf32>
    %132 = vector.shape_cast %131 : vector<2x8xf32> to vector<2x8x1xf32>
    %133 = vector.broadcast %132 : vector<2x8x1xf32> to vector<2x8x8xf32>
    %134 = arith.subf %130, %133 : vector<2x8x8xf32>
    %135 = math.exp %134 : vector<2x8x8xf32>
    %cst_91 = arith.constant dense<0.000000e+00> : vector<2x8xf32>
    %136 = vector.multi_reduction <add>, %135, %cst_91 [2] : vector<2x8x8xf32> to vector<2x8xf32>
    %137 = vector.shape_cast %136 : vector<2x8xf32> to vector<2x8x1xf32>
    %138 = tpu.reciprocal %137 {approx = true} : vector<2x8x1xf32> -> vector<2x8x1xf32>
    %139 = vector.broadcast %138 : vector<2x8x1xf32> to vector<2x8x8xf32>
    %140 = arith.mulf %135, %139 : vector<2x8x8xf32>
    "tpu.trace_start"() <{level = 10 : i32, message = "bqk,bkd->bqd"}> : () -> ()
    %cst_92 = arith.constant dense<0.000000e+00> : vector<2x8x16xf32>
    %141 = tpu.matmul %140, %127, %cst_92 {dimension_numbers = #tpu.dot_dimension_numbers<[2], [1], [1], [2], [0, 0, 0, 1, 1, 2], [0], [0]>} : vector<2x8x8xf32>, vector<2x8x16xf32>, vector<2x8x16xf32> -> vector<2x8x16xf32>
    "tpu.trace_stop"() : () -> ()
    %142 = vector.shape_cast %141 : vector<2x8x16xf32> to vector<16x16xf32>
    %143 = arith.truncf %142 : vector<16x16xf32> to vector<16x16xbf16>
    %c0_93 = arith.constant 0 : index
    %c1_94 = arith.constant 1 : index
    %c0_95 = arith.constant 0 : index
    %c0_96 = arith.constant 0 : index
    %144 = vector.load %arg12[%c0_93, %c1_94, %c0_95, %c0_96] : memref<2x2x16x32xbf16, #tpu.memory_space<vmem>>, vector<1x1x16x32xbf16>
    %145 = vector.shape_cast %144 : vector<1x1x16x32xbf16> to vector<16x32xbf16>
    %cst_97 = arith.constant dense<0.000000e+00> : vector<16x32xf32>
    %146 = tpu.matmul %143, %145, %cst_97 {dimension_numbers = #tpu.dot_dimension_numbers<[1], [0], [0], [1], [0, 0, 1, 1], [], []>} : vector<16x16xbf16>, vector<16x32xbf16>, vector<16x32xf32> -> vector<16x32xf32>
    %147 = arith.addf %101, %146 : vector<16x32xf32>
    %148 = arith.addf %29, %147 : vector<16x32xf32>
    %c0_98 = arith.constant 0 : index
    %c0_99 = arith.constant 0 : index
    %c0_100 = arith.constant 0 : index
    %149 = vector.load %arg13[%c0_98, %c0_99, %c0_100] : memref<2x1x32xf32, #tpu.memory_space<vmem>>, vector<1x1x32xf32>
    %150 = vector.shape_cast %149 : vector<1x1x32xf32> to vector<1x32xf32>
    %151 = vector.broadcast %150 : vector<1x32xf32> to vector<16x32xf32>
    %152 = arith.addf %148, %151 : vector<16x32xf32>
    %c0_101 = arith.constant 0 : index
    %c0_102 = arith.constant 0 : index
    %c0_103 = arith.constant 0 : index
    %153 = vector.load %arg14[%c0_101, %c0_102, %c0_103] : memref<2x2x32xf32, #tpu.memory_space<vmem>>, vector<1x1x32xf32>
    %154 = vector.shape_cast %153 : vector<1x1x32xf32> to vector<1x32xf32>
    %c0_104 = arith.constant 0 : index
    %c1_105 = arith.constant 1 : index
    %c0_106 = arith.constant 0 : index
    %155 = vector.load %arg14[%c0_104, %c1_105, %c0_106] : memref<2x2x32xf32, #tpu.memory_space<vmem>>, vector<1x1x32xf32>
    %156 = vector.shape_cast %155 : vector<1x1x32xf32> to vector<1x32xf32>
    %cst_107 = arith.constant dense<0.000000e+00> : vector<16xf32>
    %157 = vector.multi_reduction <add>, %152, %cst_107 [1] : vector<16x32xf32> to vector<16xf32>
    %158 = vector.shape_cast %157 : vector<16xf32> to vector<16x1xf32>
    %cst_108 = arith.constant 3.200000e+01 : f32
    %159 = vector.broadcast %cst_108 : f32 to vector<16x1xf32>
    %160 = arith.divf %158, %159 : vector<16x1xf32>
    %161 = vector.broadcast %160 : vector<16x1xf32> to vector<16x32xf32>
    %162 = arith.subf %152, %161 : vector<16x32xf32>
    %163 = arith.mulf %162, %162 : vector<16x32xf32>
    %cst_109 = arith.constant dense<0.000000e+00> : vector<16xf32>
    %164 = vector.multi_reduction <add>, %163, %cst_109 [1] : vector<16x32xf32> to vector<16xf32>
    %165 = vector.shape_cast %164 : vector<16xf32> to vector<16x1xf32>
    %cst_110 = arith.constant 3.200000e+01 : f32
    %166 = vector.broadcast %cst_110 : f32 to vector<16x1xf32>
    %167 = arith.divf %165, %166 : vector<16x1xf32>
    %cst_111 = arith.constant 9.99999974E-6 : f32
    %168 = vector.broadcast %cst_111 : f32 to vector<16x1xf32>
    %169 = arith.addf %167, %168 : vector<16x1xf32>
    %170 = math.rsqrt %169 : vector<16x1xf32>
    %171 = vector.broadcast %170 : vector<16x1xf32> to vector<16x32xf32>
    %172 = arith.mulf %162, %171 : vector<16x32xf32>
    %173 = vector.broadcast %154 : vector<1x32xf32> to vector<16x32xf32>
    %174 = arith.mulf %172, %173 : vector<16x32xf32>
    %175 = vector.broadcast %156 : vector<1x32xf32> to vector<16x32xf32>
    %176 = arith.addf %174, %175 : vector<16x32xf32>
    %177 = arith.truncf %176 : vector<16x32xf32> to vector<16x32xbf16>
    %c0_112 = arith.constant 0 : index
    %c0_113 = arith.constant 0 : index
    %c0_114 = arith.constant 0 : index
    %178 = vector.load %arg15[%c0_112, %c0_113, %c0_114] : memref<2x32x64xbf16, #tpu.memory_space<vmem>>, vector<1x32x64xbf16>
    %179 = vector.shape_cast %178 : vector<1x32x64xbf16> to vector<32x64xbf16>
    %cst_115 = arith.constant dense<0.000000e+00> : vector<16x64xf32>
    %180 = tpu.matmul %177, %179, %cst_115 {dimension_numbers = #tpu.dot_dimension_numbers<[1], [0], [0], [1], [0, 0, 1, 1], [], []>} : vector<16x32xbf16>, vector<32x64xbf16>, vector<16x64xf32> -> vector<16x64xf32>
    %c0_116 = arith.constant 0 : index
    %c0_117 = arith.constant 0 : index
    %c0_118 = arith.constant 0 : index
    %181 = vector.load %arg16[%c0_116, %c0_117, %c0_118] : memref<2x1x64xf32, #tpu.memory_space<vmem>>, vector<1x1x64xf32>
    %182 = vector.shape_cast %181 : vector<1x1x64xf32> to vector<1x64xf32>
    %183 = vector.broadcast %182 : vector<1x64xf32> to vector<16x64xf32>
    %184 = arith.addf %180, %183 : vector<16x64xf32>
    %cst_119 = arith.constant 5.000000e-01 : f32
    %185 = vector.broadcast %cst_119 : f32 to vector<16x64xf32>
    %186 = arith.mulf %185, %184 : vector<16x64xf32>
    %cst_120 = arith.constant 4.471500e-02 : f32
    %187 = vector.broadcast %cst_120 : f32 to vector<16x64xf32>
    %188 = arith.mulf %187, %184 : vector<16x64xf32>
    %189 = arith.mulf %188, %184 : vector<16x64xf32>
    %190 = arith.mulf %189, %184 : vector<16x64xf32>
    %191 = arith.addf %184, %190 : vector<16x64xf32>
    %cst_121 = arith.constant 0.797884583 : f32
    %192 = vector.broadcast %cst_121 : f32 to vector<16x64xf32>
    %193 = arith.mulf %192, %191 : vector<16x64xf32>
    %194 = math.tanh %193 : vector<16x64xf32>
    %cst_122 = arith.constant 1.000000e+00 : f32
    %195 = vector.broadcast %cst_122 : f32 to vector<16x64xf32>
    %196 = arith.addf %195, %194 : vector<16x64xf32>
    %197 = arith.mulf %186, %196 : vector<16x64xf32>
    %198 = arith.truncf %197 : vector<16x64xf32> to vector<16x64xbf16>
    %c0_123 = arith.constant 0 : index
    %c0_124 = arith.constant 0 : index
    %c0_125 = arith.constant 0 : index
    %199 = vector.load %arg17[%c0_123, %c0_124, %c0_125] : memref<2x64x32xbf16, #tpu.memory_space<vmem>>, vector<1x64x32xbf16>
    %200 = vector.shape_cast %199 : vector<1x64x32xbf16> to vector<64x32xbf16>
    %cst_126 = arith.constant dense<0.000000e+00> : vector<16x32xf32>
    %201 = tpu.matmul %198, %200, %cst_126 {dimension_numbers = #tpu.dot_dimension_numbers<[1], [0], [0], [1], [0, 0, 1, 1], [], []>} : vector<16x64xbf16>, vector<64x32xbf16>, vector<16x32xf32> -> vector<16x32xf32>
    %202 = arith.addf %152, %201 : vector<16x32xf32>
    %c0_127 = arith.constant 0 : index
    %c0_128 = arith.constant 0 : index
    %c0_129 = arith.constant 0 : index
    %203 = vector.load %arg18[%c0_127, %c0_128, %c0_129] : memref<2x1x32xf32, #tpu.memory_space<vmem>>, vector<1x1x32xf32>
    %204 = vector.shape_cast %203 : vector<1x1x32xf32> to vector<1x32xf32>
    %205 = vector.broadcast %204 : vector<1x32xf32> to vector<16x32xf32>
    %206 = arith.addf %202, %205 : vector<16x32xf32>
    %c1_130 = arith.constant 1 : index
    %c0_131 = arith.constant 0 : index
    %c0_132 = arith.constant 0 : index
    %207 = vector.load %arg5[%c1_130, %c0_131, %c0_132] : memref<2x2x32xf32, #tpu.memory_space<vmem>>, vector<1x1x32xf32>
    %208 = vector.shape_cast %207 : vector<1x1x32xf32> to vector<1x32xf32>
    %c1_133 = arith.constant 1 : index
    %c1_134 = arith.constant 1 : index
    %c0_135 = arith.constant 0 : index
    %209 = vector.load %arg5[%c1_133, %c1_134, %c0_135] : memref<2x2x32xf32, #tpu.memory_space<vmem>>, vector<1x1x32xf32>
    %210 = vector.shape_cast %209 : vector<1x1x32xf32> to vector<1x32xf32>
    %cst_136 = arith.constant dense<0.000000e+00> : vector<16xf32>
    %211 = vector.multi_reduction <add>, %206, %cst_136 [1] : vector<16x32xf32> to vector<16xf32>
    %212 = vector.shape_cast %211 : vector<16xf32> to vector<16x1xf32>
    %cst_137 = arith.constant 3.200000e+01 : f32
    %213 = vector.broadcast %cst_137 : f32 to vector<16x1xf32>
    %214 = arith.divf %212, %213 : vector<16x1xf32>
    %215 = vector.broadcast %214 : vector<16x1xf32> to vector<16x32xf32>
    %216 = arith.subf %206, %215 : vector<16x32xf32>
    %217 = arith.mulf %216, %216 : vector<16x32xf32>
    %cst_138 = arith.constant dense<0.000000e+00> : vector<16xf32>
    %218 = vector.multi_reduction <add>, %217, %cst_138 [1] : vector<16x32xf32> to vector<16xf32>
    %219 = vector.shape_cast %218 : vector<16xf32> to vector<16x1xf32>
    %cst_139 = arith.constant 3.200000e+01 : f32
    %220 = vector.broadcast %cst_139 : f32 to vector<16x1xf32>
    %221 = arith.divf %219, %220 : vector<16x1xf32>
    %cst_140 = arith.constant 9.99999974E-6 : f32
    %222 = vector.broadcast %cst_140 : f32 to vector<16x1xf32>
    %223 = arith.addf %221, %222 : vector<16x1xf32>
    %224 = math.rsqrt %223 : vector<16x1xf32>
    %225 = vector.broadcast %224 : vector<16x1xf32> to vector<16x32xf32>
    %226 = arith.mulf %216, %225 : vector<16x32xf32>
    %227 = vector.broadcast %208 : vector<1x32xf32> to vector<16x32xf32>
    %228 = arith.mulf %226, %227 : vector<16x32xf32>
    %229 = vector.broadcast %210 : vector<1x32xf32> to vector<16x32xf32>
    %230 = arith.addf %228, %229 : vector<16x32xf32>
    %231 = arith.truncf %230 : vector<16x32xf32> to vector<16x32xbf16>
    %cst_141 = arith.constant 0.000000e+00 : f32
    %232 = vector.broadcast %cst_141 : f32 to vector<16x32xf32>
    %c1_142 = arith.constant 1 : index
    %c0_143 = arith.constant 0 : index
    %c0_144 = arith.constant 0 : index
    %c0_145 = arith.constant 0 : index
    %233 = vector.load %arg6[%c1_142, %c0_143, %c0_144, %c0_145] : memref<2x2x32x16xbf16, #tpu.memory_space<vmem>>, vector<1x1x32x16xbf16>
    %234 = vector.shape_cast %233 : vector<1x1x32x16xbf16> to vector<32x16xbf16>
    %cst_146 = arith.constant dense<0.000000e+00> : vector<16x16xf32>
    %235 = tpu.matmul %231, %234, %cst_146 {dimension_numbers = #tpu.dot_dimension_numbers<[1], [0], [0], [1], [0, 0, 1, 1], [], []>} : vector<16x32xbf16>, vector<32x16xbf16>, vector<16x16xf32> -> vector<16x16xf32>
    %c1_147 = arith.constant 1 : index
    %c0_148 = arith.constant 0 : index
    %c0_149 = arith.constant 0 : index
    %c0_150 = arith.constant 0 : index
    %236 = vector.load %arg9[%c1_147, %c0_148, %c0_149, %c0_150] : memref<2x2x1x16xf32, #tpu.memory_space<vmem>>, vector<1x1x1x16xf32>
    %237 = vector.shape_cast %236 : vector<1x1x1x16xf32> to vector<1x16xf32>
    %238 = vector.broadcast %237 : vector<1x16xf32> to vector<16x16xf32>
    %239 = arith.addf %235, %238 : vector<16x16xf32>
    %c1_151 = arith.constant 1 : index
    %c0_152 = arith.constant 0 : index
    %c0_153 = arith.constant 0 : index
    %c0_154 = arith.constant 0 : index
    %240 = vector.load %arg7[%c1_151, %c0_152, %c0_153, %c0_154] : memref<2x2x32x16xbf16, #tpu.memory_space<vmem>>, vector<1x1x32x16xbf16>
    %241 = vector.shape_cast %240 : vector<1x1x32x16xbf16> to vector<32x16xbf16>
    %cst_155 = arith.constant dense<0.000000e+00> : vector<16x16xf32>
    %242 = tpu.matmul %231, %241, %cst_155 {dimension_numbers = #tpu.dot_dimension_numbers<[1], [0], [0], [1], [0, 0, 1, 1], [], []>} : vector<16x32xbf16>, vector<32x16xbf16>, vector<16x16xf32> -> vector<16x16xf32>
    %c1_156 = arith.constant 1 : index
    %c0_157 = arith.constant 0 : index
    %c0_158 = arith.constant 0 : index
    %c0_159 = arith.constant 0 : index
    %243 = vector.load %arg10[%c1_156, %c0_157, %c0_158, %c0_159] : memref<2x2x1x16xf32, #tpu.memory_space<vmem>>, vector<1x1x1x16xf32>
    %244 = vector.shape_cast %243 : vector<1x1x1x16xf32> to vector<1x16xf32>
    %245 = vector.broadcast %244 : vector<1x16xf32> to vector<16x16xf32>
    %246 = arith.addf %242, %245 : vector<16x16xf32>
    %c1_160 = arith.constant 1 : index
    %c0_161 = arith.constant 0 : index
    %c0_162 = arith.constant 0 : index
    %c0_163 = arith.constant 0 : index
    %247 = vector.load %arg8[%c1_160, %c0_161, %c0_162, %c0_163] : memref<2x2x32x16xbf16, #tpu.memory_space<vmem>>, vector<1x1x32x16xbf16>
    %248 = vector.shape_cast %247 : vector<1x1x32x16xbf16> to vector<32x16xbf16>
    %cst_164 = arith.constant dense<0.000000e+00> : vector<16x16xf32>
    %249 = tpu.matmul %231, %248, %cst_164 {dimension_numbers = #tpu.dot_dimension_numbers<[1], [0], [0], [1], [0, 0, 1, 1], [], []>} : vector<16x32xbf16>, vector<32x16xbf16>, vector<16x16xf32> -> vector<16x16xf32>
    %c1_165 = arith.constant 1 : index
    %c0_166 = arith.constant 0 : index
    %c0_167 = arith.constant 0 : index
    %c0_168 = arith.constant 0 : index
    %250 = vector.load %arg11[%c1_165, %c0_166, %c0_167, %c0_168] : memref<2x2x1x16xf32, #tpu.memory_space<vmem>>, vector<1x1x1x16xf32>
    %251 = vector.shape_cast %250 : vector<1x1x1x16xf32> to vector<1x16xf32>
    %252 = vector.broadcast %251 : vector<1x16xf32> to vector<16x16xf32>
    %253 = arith.addf %249, %252 : vector<16x16xf32>
    %cst_169 = arith.constant 2.500000e-01 : f32
    %254 = vector.broadcast %cst_169 : f32 to vector<16x16xf32>
    %255 = arith.mulf %239, %254 : vector<16x16xf32>
    %256 = vector.shape_cast %255 : vector<16x16xf32> to vector<2x8x16xf32>
    %257 = vector.shape_cast %246 : vector<16x16xf32> to vector<2x8x16xf32>
    %258 = vector.shape_cast %253 : vector<16x16xf32> to vector<2x8x16xf32>
    "tpu.trace_start"() <{level = 10 : i32, message = "bqd,bkd->bqk"}> : () -> ()
    %cst_170 = arith.constant dense<0.000000e+00> : vector<2x8x8xf32>
    %259 = tpu.matmul %256, %257, %cst_170 {dimension_numbers = #tpu.dot_dimension_numbers<[2], [2], [1], [1], [0, 0, 0, 1, 1, 1], [0], [0]>} : vector<2x8x16xf32>, vector<2x8x16xf32>, vector<2x8x8xf32> -> vector<2x8x8xf32>
    "tpu.trace_stop"() : () -> ()
    %260 = vector.broadcast %1 : vector<2x1x8xf32> to vector<2x8x8xf32>
    %261 = arith.addf %259, %260 : vector<2x8x8xf32>
    %cst_171 = arith.constant dense<0xFF800000> : vector<2x8xf32>
    %262 = vector.multi_reduction <maximumf>, %261, %cst_171 [2] : vector<2x8x8xf32> to vector<2x8xf32>
    %263 = vector.shape_cast %262 : vector<2x8xf32> to vector<2x8x1xf32>
    %264 = vector.broadcast %263 : vector<2x8x1xf32> to vector<2x8x8xf32>
    %265 = arith.subf %261, %264 : vector<2x8x8xf32>
    %266 = math.exp %265 : vector<2x8x8xf32>
    %cst_172 = arith.constant dense<0.000000e+00> : vector<2x8xf32>
    %267 = vector.multi_reduction <add>, %266, %cst_172 [2] : vector<2x8x8xf32> to vector<2x8xf32>
    %268 = vector.shape_cast %267 : vector<2x8xf32> to vector<2x8x1xf32>
    %269 = tpu.reciprocal %268 {approx = true} : vector<2x8x1xf32> -> vector<2x8x1xf32>
    %270 = vector.broadcast %269 : vector<2x8x1xf32> to vector<2x8x8xf32>
    %271 = arith.mulf %266, %270 : vector<2x8x8xf32>
    "tpu.trace_start"() <{level = 10 : i32, message = "bqk,bkd->bqd"}> : () -> ()
    %cst_173 = arith.constant dense<0.000000e+00> : vector<2x8x16xf32>
    %272 = tpu.matmul %271, %258, %cst_173 {dimension_numbers = #tpu.dot_dimension_numbers<[2], [1], [1], [2], [0, 0, 0, 1, 1, 2], [0], [0]>} : vector<2x8x8xf32>, vector<2x8x16xf32>, vector<2x8x16xf32> -> vector<2x8x16xf32>
    "tpu.trace_stop"() : () -> ()
    %273 = vector.shape_cast %272 : vector<2x8x16xf32> to vector<16x16xf32>
    %274 = arith.truncf %273 : vector<16x16xf32> to vector<16x16xbf16>
    %c1_174 = arith.constant 1 : index
    %c0_175 = arith.constant 0 : index
    %c0_176 = arith.constant 0 : index
    %c0_177 = arith.constant 0 : index
    %275 = vector.load %arg12[%c1_174, %c0_175, %c0_176, %c0_177] : memref<2x2x16x32xbf16, #tpu.memory_space<vmem>>, vector<1x1x16x32xbf16>
    %276 = vector.shape_cast %275 : vector<1x1x16x32xbf16> to vector<16x32xbf16>
    %cst_178 = arith.constant dense<0.000000e+00> : vector<16x32xf32>
    %277 = tpu.matmul %274, %276, %cst_178 {dimension_numbers = #tpu.dot_dimension_numbers<[1], [0], [0], [1], [0, 0, 1, 1], [], []>} : vector<16x16xbf16>, vector<16x32xbf16>, vector<16x32xf32> -> vector<16x32xf32>
    %278 = arith.addf %232, %277 : vector<16x32xf32>
    %c1_179 = arith.constant 1 : index
    %c1_180 = arith.constant 1 : index
    %c0_181 = arith.constant 0 : index
    %c0_182 = arith.constant 0 : index
    %279 = vector.load %arg6[%c1_179, %c1_180, %c0_181, %c0_182] : memref<2x2x32x16xbf16, #tpu.memory_space<vmem>>, vector<1x1x32x16xbf16>
    %280 = vector.shape_cast %279 : vector<1x1x32x16xbf16> to vector<32x16xbf16>
    %cst_183 = arith.constant dense<0.000000e+00> : vector<16x16xf32>
    %281 = tpu.matmul %231, %280, %cst_183 {dimension_numbers = #tpu.dot_dimension_numbers<[1], [0], [0], [1], [0, 0, 1, 1], [], []>} : vector<16x32xbf16>, vector<32x16xbf16>, vector<16x16xf32> -> vector<16x16xf32>
    %c1_184 = arith.constant 1 : index
    %c1_185 = arith.constant 1 : index
    %c0_186 = arith.constant 0 : index
    %c0_187 = arith.constant 0 : index
    %282 = vector.load %arg9[%c1_184, %c1_185, %c0_186, %c0_187] : memref<2x2x1x16xf32, #tpu.memory_space<vmem>>, vector<1x1x1x16xf32>
    %283 = vector.shape_cast %282 : vector<1x1x1x16xf32> to vector<1x16xf32>
    %284 = vector.broadcast %283 : vector<1x16xf32> to vector<16x16xf32>
    %285 = arith.addf %281, %284 : vector<16x16xf32>
    %c1_188 = arith.constant 1 : index
    %c1_189 = arith.constant 1 : index
    %c0_190 = arith.constant 0 : index
    %c0_191 = arith.constant 0 : index
    %286 = vector.load %arg7[%c1_188, %c1_189, %c0_190, %c0_191] : memref<2x2x32x16xbf16, #tpu.memory_space<vmem>>, vector<1x1x32x16xbf16>
    %287 = vector.shape_cast %286 : vector<1x1x32x16xbf16> to vector<32x16xbf16>
    %cst_192 = arith.constant dense<0.000000e+00> : vector<16x16xf32>
    %288 = tpu.matmul %231, %287, %cst_192 {dimension_numbers = #tpu.dot_dimension_numbers<[1], [0], [0], [1], [0, 0, 1, 1], [], []>} : vector<16x32xbf16>, vector<32x16xbf16>, vector<16x16xf32> -> vector<16x16xf32>
    %c1_193 = arith.constant 1 : index
    %c1_194 = arith.constant 1 : index
    %c0_195 = arith.constant 0 : index
    %c0_196 = arith.constant 0 : index
    %289 = vector.load %arg10[%c1_193, %c1_194, %c0_195, %c0_196] : memref<2x2x1x16xf32, #tpu.memory_space<vmem>>, vector<1x1x1x16xf32>
    %290 = vector.shape_cast %289 : vector<1x1x1x16xf32> to vector<1x16xf32>
    %291 = vector.broadcast %290 : vector<1x16xf32> to vector<16x16xf32>
    %292 = arith.addf %288, %291 : vector<16x16xf32>
    %c1_197 = arith.constant 1 : index
    %c1_198 = arith.constant 1 : index
    %c0_199 = arith.constant 0 : index
    %c0_200 = arith.constant 0 : index
    %293 = vector.load %arg8[%c1_197, %c1_198, %c0_199, %c0_200] : memref<2x2x32x16xbf16, #tpu.memory_space<vmem>>, vector<1x1x32x16xbf16>
    %294 = vector.shape_cast %293 : vector<1x1x32x16xbf16> to vector<32x16xbf16>
    %cst_201 = arith.constant dense<0.000000e+00> : vector<16x16xf32>
    %295 = tpu.matmul %231, %294, %cst_201 {dimension_numbers = #tpu.dot_dimension_numbers<[1], [0], [0], [1], [0, 0, 1, 1], [], []>} : vector<16x32xbf16>, vector<32x16xbf16>, vector<16x16xf32> -> vector<16x16xf32>
    %c1_202 = arith.constant 1 : index
    %c1_203 = arith.constant 1 : index
    %c0_204 = arith.constant 0 : index
    %c0_205 = arith.constant 0 : index
    %296 = vector.load %arg11[%c1_202, %c1_203, %c0_204, %c0_205] : memref<2x2x1x16xf32, #tpu.memory_space<vmem>>, vector<1x1x1x16xf32>
    %297 = vector.shape_cast %296 : vector<1x1x1x16xf32> to vector<1x16xf32>
    %298 = vector.broadcast %297 : vector<1x16xf32> to vector<16x16xf32>
    %299 = arith.addf %295, %298 : vector<16x16xf32>
    %cst_206 = arith.constant 2.500000e-01 : f32
    %300 = vector.broadcast %cst_206 : f32 to vector<16x16xf32>
    %301 = arith.mulf %285, %300 : vector<16x16xf32>
    %302 = vector.shape_cast %301 : vector<16x16xf32> to vector<2x8x16xf32>
    %303 = vector.shape_cast %292 : vector<16x16xf32> to vector<2x8x16xf32>
    %304 = vector.shape_cast %299 : vector<16x16xf32> to vector<2x8x16xf32>
    "tpu.trace_start"() <{level = 10 : i32, message = "bqd,bkd->bqk"}> : () -> ()
    %cst_207 = arith.constant dense<0.000000e+00> : vector<2x8x8xf32>
    %305 = tpu.matmul %302, %303, %cst_207 {dimension_numbers = #tpu.dot_dimension_numbers<[2], [2], [1], [1], [0, 0, 0, 1, 1, 1], [0], [0]>} : vector<2x8x16xf32>, vector<2x8x16xf32>, vector<2x8x8xf32> -> vector<2x8x8xf32>
    "tpu.trace_stop"() : () -> ()
    %306 = vector.broadcast %1 : vector<2x1x8xf32> to vector<2x8x8xf32>
    %307 = arith.addf %305, %306 : vector<2x8x8xf32>
    %cst_208 = arith.constant dense<0xFF800000> : vector<2x8xf32>
    %308 = vector.multi_reduction <maximumf>, %307, %cst_208 [2] : vector<2x8x8xf32> to vector<2x8xf32>
    %309 = vector.shape_cast %308 : vector<2x8xf32> to vector<2x8x1xf32>
    %310 = vector.broadcast %309 : vector<2x8x1xf32> to vector<2x8x8xf32>
    %311 = arith.subf %307, %310 : vector<2x8x8xf32>
    %312 = math.exp %311 : vector<2x8x8xf32>
    %cst_209 = arith.constant dense<0.000000e+00> : vector<2x8xf32>
    %313 = vector.multi_reduction <add>, %312, %cst_209 [2] : vector<2x8x8xf32> to vector<2x8xf32>
    %314 = vector.shape_cast %313 : vector<2x8xf32> to vector<2x8x1xf32>
    %315 = tpu.reciprocal %314 {approx = true} : vector<2x8x1xf32> -> vector<2x8x1xf32>
    %316 = vector.broadcast %315 : vector<2x8x1xf32> to vector<2x8x8xf32>
    %317 = arith.mulf %312, %316 : vector<2x8x8xf32>
    "tpu.trace_start"() <{level = 10 : i32, message = "bqk,bkd->bqd"}> : () -> ()
    %cst_210 = arith.constant dense<0.000000e+00> : vector<2x8x16xf32>
    %318 = tpu.matmul %317, %304, %cst_210 {dimension_numbers = #tpu.dot_dimension_numbers<[2], [1], [1], [2], [0, 0, 0, 1, 1, 2], [0], [0]>} : vector<2x8x8xf32>, vector<2x8x16xf32>, vector<2x8x16xf32> -> vector<2x8x16xf32>
    "tpu.trace_stop"() : () -> ()
    %319 = vector.shape_cast %318 : vector<2x8x16xf32> to vector<16x16xf32>
    %320 = arith.truncf %319 : vector<16x16xf32> to vector<16x16xbf16>
    %c1_211 = arith.constant 1 : index
    %c1_212 = arith.constant 1 : index
    %c0_213 = arith.constant 0 : index
    %c0_214 = arith.constant 0 : index
    %321 = vector.load %arg12[%c1_211, %c1_212, %c0_213, %c0_214] : memref<2x2x16x32xbf16, #tpu.memory_space<vmem>>, vector<1x1x16x32xbf16>
    %322 = vector.shape_cast %321 : vector<1x1x16x32xbf16> to vector<16x32xbf16>
    %cst_215 = arith.constant dense<0.000000e+00> : vector<16x32xf32>
    %323 = tpu.matmul %320, %322, %cst_215 {dimension_numbers = #tpu.dot_dimension_numbers<[1], [0], [0], [1], [0, 0, 1, 1], [], []>} : vector<16x16xbf16>, vector<16x32xbf16>, vector<16x32xf32> -> vector<16x32xf32>
    %324 = arith.addf %278, %323 : vector<16x32xf32>
    %325 = arith.addf %206, %324 : vector<16x32xf32>
    %c1_216 = arith.constant 1 : index
    %c0_217 = arith.constant 0 : index
    %c0_218 = arith.constant 0 : index
    %326 = vector.load %arg13[%c1_216, %c0_217, %c0_218] : memref<2x1x32xf32, #tpu.memory_space<vmem>>, vector<1x1x32xf32>
    %327 = vector.shape_cast %326 : vector<1x1x32xf32> to vector<1x32xf32>
    %328 = vector.broadcast %327 : vector<1x32xf32> to vector<16x32xf32>
    %329 = arith.addf %325, %328 : vector<16x32xf32>
    %c1_219 = arith.constant 1 : index
    %c0_220 = arith.constant 0 : index
    %c0_221 = arith.constant 0 : index
    %330 = vector.load %arg14[%c1_219, %c0_220, %c0_221] : memref<2x2x32xf32, #tpu.memory_space<vmem>>, vector<1x1x32xf32>
    %331 = vector.shape_cast %330 : vector<1x1x32xf32> to vector<1x32xf32>
    %c1_222 = arith.constant 1 : index
    %c1_223 = arith.constant 1 : index
    %c0_224 = arith.constant 0 : index
    %332 = vector.load %arg14[%c1_222, %c1_223, %c0_224] : memref<2x2x32xf32, #tpu.memory_space<vmem>>, vector<1x1x32xf32>
    %333 = vector.shape_cast %332 : vector<1x1x32xf32> to vector<1x32xf32>
    %cst_225 = arith.constant dense<0.000000e+00> : vector<16xf32>
    %334 = vector.multi_reduction <add>, %329, %cst_225 [1] : vector<16x32xf32> to vector<16xf32>
    %335 = vector.shape_cast %334 : vector<16xf32> to vector<16x1xf32>
    %cst_226 = arith.constant 3.200000e+01 : f32
    %336 = vector.broadcast %cst_226 : f32 to vector<16x1xf32>
    %337 = arith.divf %335, %336 : vector<16x1xf32>
    %338 = vector.broadcast %337 : vector<16x1xf32> to vector<16x32xf32>
    %339 = arith.subf %329, %338 : vector<16x32xf32>
    %340 = arith.mulf %339, %339 : vector<16x32xf32>
    %cst_227 = arith.constant dense<0.000000e+00> : vector<16xf32>
    %341 = vector.multi_reduction <add>, %340, %cst_227 [1] : vector<16x32xf32> to vector<16xf32>
    %342 = vector.shape_cast %341 : vector<16xf32> to vector<16x1xf32>
    %cst_228 = arith.constant 3.200000e+01 : f32
    %343 = vector.broadcast %cst_228 : f32 to vector<16x1xf32>
    %344 = arith.divf %342, %343 : vector<16x1xf32>
    %cst_229 = arith.constant 9.99999974E-6 : f32
    %345 = vector.broadcast %cst_229 : f32 to vector<16x1xf32>
    %346 = arith.addf %344, %345 : vector<16x1xf32>
    %347 = math.rsqrt %346 : vector<16x1xf32>
    %348 = vector.broadcast %347 : vector<16x1xf32> to vector<16x32xf32>
    %349 = arith.mulf %339, %348 : vector<16x32xf32>
    %350 = vector.broadcast %331 : vector<1x32xf32> to vector<16x32xf32>
    %351 = arith.mulf %349, %350 : vector<16x32xf32>
    %352 = vector.broadcast %333 : vector<1x32xf32> to vector<16x32xf32>
    %353 = arith.addf %351, %352 : vector<16x32xf32>
    %354 = arith.truncf %353 : vector<16x32xf32> to vector<16x32xbf16>
    %c1_230 = arith.constant 1 : index
    %c0_231 = arith.constant 0 : index
    %c0_232 = arith.constant 0 : index
    %355 = vector.load %arg15[%c1_230, %c0_231, %c0_232] : memref<2x32x64xbf16, #tpu.memory_space<vmem>>, vector<1x32x64xbf16>
    %356 = vector.shape_cast %355 : vector<1x32x64xbf16> to vector<32x64xbf16>
    %cst_233 = arith.constant dense<0.000000e+00> : vector<16x64xf32>
    %357 = tpu.matmul %354, %356, %cst_233 {dimension_numbers = #tpu.dot_dimension_numbers<[1], [0], [0], [1], [0, 0, 1, 1], [], []>} : vector<16x32xbf16>, vector<32x64xbf16>, vector<16x64xf32> -> vector<16x64xf32>
    %c1_234 = arith.constant 1 : index
    %c0_235 = arith.constant 0 : index
    %c0_236 = arith.constant 0 : index
    %358 = vector.load %arg16[%c1_234, %c0_235, %c0_236] : memref<2x1x64xf32, #tpu.memory_space<vmem>>, vector<1x1x64xf32>
    %359 = vector.shape_cast %358 : vector<1x1x64xf32> to vector<1x64xf32>
    %360 = vector.broadcast %359 : vector<1x64xf32> to vector<16x64xf32>
    %361 = arith.addf %357, %360 : vector<16x64xf32>
    %cst_237 = arith.constant 5.000000e-01 : f32
    %362 = vector.broadcast %cst_237 : f32 to vector<16x64xf32>
    %363 = arith.mulf %362, %361 : vector<16x64xf32>
    %cst_238 = arith.constant 4.471500e-02 : f32
    %364 = vector.broadcast %cst_238 : f32 to vector<16x64xf32>
    %365 = arith.mulf %364, %361 : vector<16x64xf32>
    %366 = arith.mulf %365, %361 : vector<16x64xf32>
    %367 = arith.mulf %366, %361 : vector<16x64xf32>
    %368 = arith.addf %361, %367 : vector<16x64xf32>
    %cst_239 = arith.constant 0.797884583 : f32
    %369 = vector.broadcast %cst_239 : f32 to vector<16x64xf32>
    %370 = arith.mulf %369, %368 : vector<16x64xf32>
    %371 = math.tanh %370 : vector<16x64xf32>
    %cst_240 = arith.constant 1.000000e+00 : f32
    %372 = vector.broadcast %cst_240 : f32 to vector<16x64xf32>
    %373 = arith.addf %372, %371 : vector<16x64xf32>
    %374 = arith.mulf %363, %373 : vector<16x64xf32>
    %375 = arith.truncf %374 : vector<16x64xf32> to vector<16x64xbf16>
    %c1_241 = arith.constant 1 : index
    %c0_242 = arith.constant 0 : index
    %c0_243 = arith.constant 0 : index
    %376 = vector.load %arg17[%c1_241, %c0_242, %c0_243] : memref<2x64x32xbf16, #tpu.memory_space<vmem>>, vector<1x64x32xbf16>
    %377 = vector.shape_cast %376 : vector<1x64x32xbf16> to vector<64x32xbf16>
    %cst_244 = arith.constant dense<0.000000e+00> : vector<16x32xf32>
    %378 = tpu.matmul %375, %377, %cst_244 {dimension_numbers = #tpu.dot_dimension_numbers<[1], [0], [0], [1], [0, 0, 1, 1], [], []>} : vector<16x64xbf16>, vector<64x32xbf16>, vector<16x32xf32> -> vector<16x32xf32>
    %379 = arith.addf %329, %378 : vector<16x32xf32>
    %c1_245 = arith.constant 1 : index
    %c0_246 = arith.constant 0 : index
    %c0_247 = arith.constant 0 : index
    %380 = vector.load %arg18[%c1_245, %c0_246, %c0_247] : memref<2x1x32xf32, #tpu.memory_space<vmem>>, vector<1x1x32xf32>
    %381 = vector.shape_cast %380 : vector<1x1x32xf32> to vector<1x32xf32>
    %382 = vector.broadcast %381 : vector<1x32xf32> to vector<16x32xf32>
    %383 = arith.addf %379, %382 : vector<16x32xf32>
    %384 = vector.extract_strided_slice %0 {offsets = [2, 0], sizes = [1, 32], strides = [1, 1]} : vector<4x32xf32> to vector<1x32xf32>
    %385 = vector.extract_strided_slice %0 {offsets = [3, 0], sizes = [1, 32], strides = [1, 1]} : vector<4x32xf32> to vector<1x32xf32>
    %cst_248 = arith.constant dense<0.000000e+00> : vector<16xf32>
    %386 = vector.multi_reduction <add>, %383, %cst_248 [1] : vector<16x32xf32> to vector<16xf32>
    %387 = vector.shape_cast %386 : vector<16xf32> to vector<16x1xf32>
    %cst_249 = arith.constant 3.200000e+01 : f32
    %388 = vector.broadcast %cst_249 : f32 to vector<16x1xf32>
    %389 = arith.divf %387, %388 : vector<16x1xf32>
    %390 = vector.broadcast %389 : vector<16x1xf32> to vector<16x32xf32>
    %391 = arith.subf %383, %390 : vector<16x32xf32>
    %392 = arith.mulf %391, %391 : vector<16x32xf32>
    %cst_250 = arith.constant dense<0.000000e+00> : vector<16xf32>
    %393 = vector.multi_reduction <add>, %392, %cst_250 [1] : vector<16x32xf32> to vector<16xf32>
    %394 = vector.shape_cast %393 : vector<16xf32> to vector<16x1xf32>
    %cst_251 = arith.constant 3.200000e+01 : f32
    %395 = vector.broadcast %cst_251 : f32 to vector<16x1xf32>
    %396 = arith.divf %394, %395 : vector<16x1xf32>
    %cst_252 = arith.constant 9.99999974E-6 : f32
    %397 = vector.broadcast %cst_252 : f32 to vector<16x1xf32>
    %398 = arith.addf %396, %397 : vector<16x1xf32>
    %399 = math.rsqrt %398 : vector<16x1xf32>
    %400 = vector.broadcast %399 : vector<16x1xf32> to vector<16x32xf32>
    %401 = arith.mulf %391, %400 : vector<16x32xf32>
    %402 = vector.broadcast %384 : vector<1x32xf32> to vector<16x32xf32>
    %403 = arith.mulf %401, %402 : vector<16x32xf32>
    %404 = vector.broadcast %385 : vector<1x32xf32> to vector<16x32xf32>
    %405 = arith.addf %403, %404 : vector<16x32xf32>
    %406 = vector.shape_cast %405 : vector<16x32xf32> to vector<2x8x32xf32>
    %c0_253 = arith.constant 0 : index
    %c0_254 = arith.constant 0 : index
    %407 = vector.load %arg19[%c0_253, %c0_254] : memref<2x32xf32, #tpu.memory_space<vmem>>, vector<2x32xf32>
    %c0_255 = arith.constant 0 : index
    %c0_256 = arith.constant 0 : index
    %408 = vector.load %arg20[%c0_255, %c0_256] : memref<1x2xf32, #tpu.memory_space<vmem>>, vector<1x2xf32>
    %409 = vector.extract_strided_slice %407 {offsets = [0, 0], sizes = [1, 32], strides = [1, 1]} : vector<2x32xf32> to vector<1x32xf32>
    %410 = vector.shape_cast %409 : vector<1x32xf32> to vector<1x1x32xf32>
    %411 = vector.broadcast %410 : vector<1x1x32xf32> to vector<2x8x32xf32>
    %412 = arith.mulf %406, %411 : vector<2x8x32xf32>
    "tpu.trace_start"() <{level = 10 : i32, message = "bqd,bkd->bqk"}> : () -> ()
    %cst_257 = arith.constant dense<0.000000e+00> : vector<2x8x8xf32>
    %413 = tpu.matmul %412, %406, %cst_257 {dimension_numbers = #tpu.dot_dimension_numbers<[2], [2], [1], [1], [0, 0, 0, 1, 1, 1], [0], [0]>} : vector<2x8x32xf32>, vector<2x8x32xf32>, vector<2x8x8xf32> -> vector<2x8x8xf32>
    "tpu.trace_stop"() : () -> ()
    %414 = vector.extract_strided_slice %408 {offsets = [0, 0], sizes = [1, 1], strides = [1, 1]} : vector<1x2xf32> to vector<1x1xf32>
    %415 = vector.shape_cast %414 : vector<1x1xf32> to vector<1x1x1xf32>
    %416 = vector.broadcast %415 : vector<1x1x1xf32> to vector<2x8x8xf32>
    %417 = arith.addf %413, %416 : vector<2x8x8xf32>
    %c0_258 = arith.constant 0 : index
    %c0_259 = arith.constant 0 : index
    %c0_260 = arith.constant 0 : index
    %c0_261 = arith.constant 0 : index
    %418 = vector.load %arg21[%c0_258, %c0_259, %c0_260, %c0_261] : memref<2x2x8x8xf32, #tpu.memory_space<vmem>>, vector<2x1x8x8xf32>
    %419 = vector.shape_cast %418 : vector<2x1x8x8xf32> to vector<2x8x8xf32>
    %420 = vector.shape_cast %417 : vector<2x8x8xf32> to vector<2x1x8x8xf32>
    tpu.vector_store %arg21[%c0_258, %c0_259, %c0_260, %c0_261], %420 {strides = array<i32>} : memref<2x2x8x8xf32, #tpu.memory_space<vmem>>, vector<2x1x8x8xf32>,
    %421 = vector.extract_strided_slice %407 {offsets = [1, 0], sizes = [1, 32], strides = [1, 1]} : vector<2x32xf32> to vector<1x32xf32>
    %422 = vector.shape_cast %421 : vector<1x32xf32> to vector<1x1x32xf32>
    %423 = vector.broadcast %422 : vector<1x1x32xf32> to vector<2x8x32xf32>
    %424 = arith.mulf %406, %423 : vector<2x8x32xf32>
    "tpu.trace_start"() <{level = 10 : i32, message = "bqd,bkd->bqk"}> : () -> ()
    %cst_262 = arith.constant dense<0.000000e+00> : vector<2x8x8xf32>
    %425 = tpu.matmul %424, %406, %cst_262 {dimension_numbers = #tpu.dot_dimension_numbers<[2], [2], [1], [1], [0, 0, 0, 1, 1, 1], [0], [0]>} : vector<2x8x32xf32>, vector<2x8x32xf32>, vector<2x8x8xf32> -> vector<2x8x8xf32>
    "tpu.trace_stop"() : () -> ()
    %426 = vector.extract_strided_slice %408 {offsets = [0, 1], sizes = [1, 1], strides = [1, 1]} : vector<1x2xf32> to vector<1x1xf32>
    %427 = vector.shape_cast %426 : vector<1x1xf32> to vector<1x1x1xf32>
    %428 = vector.broadcast %427 : vector<1x1x1xf32> to vector<2x8x8xf32>
    %429 = arith.addf %425, %428 : vector<2x8x8xf32>
    %c0_263 = arith.constant 0 : index
    %c1_264 = arith.constant 1 : index
    %c0_265 = arith.constant 0 : index
    %c0_266 = arith.constant 0 : index
    %430 = vector.load %arg21[%c0_263, %c1_264, %c0_265, %c0_266] : memref<2x2x8x8xf32, #tpu.memory_space<vmem>>, vector<2x1x8x8xf32>
    %431 = vector.shape_cast %430 : vector<2x1x8x8xf32> to vector<2x8x8xf32>
    %432 = vector.shape_cast %429 : vector<2x8x8xf32> to vector<2x1x8x8xf32>
    tpu.vector_store %arg21[%c0_263, %c1_264, %c0_265, %c0_266], %432 {strides = array<i32>} : memref<2x2x8x8xf32, #tpu.memory_space<vmem>>, vector<2x1x8x8xf32>,
    return
  }
  func.func @transform_0(%arg0: i32) -> (i32, i32, i32) {
    %c0_i32 = arith.constant 0 : i32
    %c0_i32_0 = arith.constant 0 : i32
    %c0_i32_1 = arith.constant 0 : i32
    return %arg0, %c0_i32, %c0_i32_0 : i32, i32, i32
  }
  func.func @transform_1(%arg0: i32) -> (i32, i32, i32) {
    %c0_i32 = arith.constant 0 : i32
    %c0_i32_0 = arith.constant 0 : i32
    %c0_i32_1 = arith.constant 0 : i32
    return %arg0, %c0_i32, %c0_i32_0 : i32, i32, i32
  }
  func.func @transform_2(%arg0: i32) -> (i32, i32) {
    %c0_i32 = arith.constant 0 : i32
    %c0_i32_0 = arith.constant 0 : i32
    %c0_i32_1 = arith.constant 0 : i32
    return %c0_i32, %c0_i32_0 : i32, i32
  }
  func.func @transform_3(%arg0: i32) -> (i32, i32) {
    %c0_i32 = arith.constant 0 : i32
    %c0_i32_0 = arith.constant 0 : i32
    %c0_i32_1 = arith.constant 0 : i32
    return %c0_i32, %c0_i32_0 : i32, i32
  }
  func.func @transform_4(%arg0: i32) -> (i32, i32, i32) {
    %c0_i32 = arith.constant 0 : i32
    %c0_i32_0 = arith.constant 0 : i32
    %c0_i32_1 = arith.constant 0 : i32
    %c0_i32_2 = arith.constant 0 : i32
    return %c0_i32, %c0_i32_0, %c0_i32_1 : i32, i32, i32
  }
  func.func @transform_5(%arg0: i32) -> (i32, i32, i32, i32) {
    %c0_i32 = arith.constant 0 : i32
    %c0_i32_0 = arith.constant 0 : i32
    %c0_i32_1 = arith.constant 0 : i32
    %c0_i32_2 = arith.constant 0 : i32
    %c0_i32_3 = arith.constant 0 : i32
    return %c0_i32, %c0_i32_0, %c0_i32_1, %c0_i32_2 : i32, i32, i32, i32
  }
  func.func @transform_6(%arg0: i32) -> (i32, i32, i32, i32) {
    %c0_i32 = arith.constant 0 : i32
    %c0_i32_0 = arith.constant 0 : i32
    %c0_i32_1 = arith.constant 0 : i32
    %c0_i32_2 = arith.constant 0 : i32
    %c0_i32_3 = arith.constant 0 : i32
    return %c0_i32, %c0_i32_0, %c0_i32_1, %c0_i32_2 : i32, i32, i32, i32
  }
  func.func @transform_7(%arg0: i32) -> (i32, i32, i32, i32) {
    %c0_i32 = arith.constant 0 : i32
    %c0_i32_0 = arith.constant 0 : i32
    %c0_i32_1 = arith.constant 0 : i32
    %c0_i32_2 = arith.constant 0 : i32
    %c0_i32_3 = arith.constant 0 : i32
    return %c0_i32, %c0_i32_0, %c0_i32_1, %c0_i32_2 : i32, i32, i32, i32
  }
  func.func @transform_8(%arg0: i32) -> (i32, i32, i32, i32) {
    %c0_i32 = arith.constant 0 : i32
    %c0_i32_0 = arith.constant 0 : i32
    %c0_i32_1 = arith.constant 0 : i32
    %c0_i32_2 = arith.constant 0 : i32
    %c0_i32_3 = arith.constant 0 : i32
    return %c0_i32, %c0_i32_0, %c0_i32_1, %c0_i32_2 : i32, i32, i32, i32
  }
  func.func @transform_9(%arg0: i32) -> (i32, i32, i32, i32) {
    %c0_i32 = arith.constant 0 : i32
    %c0_i32_0 = arith.constant 0 : i32
    %c0_i32_1 = arith.constant 0 : i32
    %c0_i32_2 = arith.constant 0 : i32
    %c0_i32_3 = arith.constant 0 : i32
    return %c0_i32, %c0_i32_0, %c0_i32_1, %c0_i32_2 : i32, i32, i32, i32
  }
  func.func @transform_10(%arg0: i32) -> (i32, i32, i32, i32) {
    %c0_i32 = arith.constant 0 : i32
    %c0_i32_0 = arith.constant 0 : i32
    %c0_i32_1 = arith.constant 0 : i32
    %c0_i32_2 = arith.constant 0 : i32
    %c0_i32_3 = arith.constant 0 : i32
    return %c0_i32, %c0_i32_0, %c0_i32_1, %c0_i32_2 : i32, i32, i32, i32
  }
  func.func @transform_11(%arg0: i32) -> (i32, i32, i32, i32) {
    %c0_i32 = arith.constant 0 : i32
    %c0_i32_0 = arith.constant 0 : i32
    %c0_i32_1 = arith.constant 0 : i32
    %c0_i32_2 = arith.constant 0 : i32
    %c0_i32_3 = arith.constant 0 : i32
    return %c0_i32, %c0_i32_0, %c0_i32_1, %c0_i32_2 : i32, i32, i32, i32
  }
  func.func @transform_12(%arg0: i32) -> (i32, i32, i32) {
    %c0_i32 = arith.constant 0 : i32
    %c0_i32_0 = arith.constant 0 : i32
    %c0_i32_1 = arith.constant 0 : i32
    %c0_i32_2 = arith.constant 0 : i32
    return %c0_i32, %c0_i32_0, %c0_i32_1 : i32, i32, i32
  }
  func.func @transform_13(%arg0: i32) -> (i32, i32, i32) {
    %c0_i32 = arith.constant 0 : i32
    %c0_i32_0 = arith.constant 0 : i32
    %c0_i32_1 = arith.constant 0 : i32
    %c0_i32_2 = arith.constant 0 : i32
    return %c0_i32, %c0_i32_0, %c0_i32_1 : i32, i32, i32
  }
  func.func @transform_14(%arg0: i32) -> (i32, i32, i32) {
    %c0_i32 = arith.constant 0 : i32
    %c0_i32_0 = arith.constant 0 : i32
    %c0_i32_1 = arith.constant 0 : i32
    %c0_i32_2 = arith.constant 0 : i32
    return %c0_i32, %c0_i32_0, %c0_i32_1 : i32, i32, i32
  }
  func.func @transform_15(%arg0: i32) -> (i32, i32, i32) {
    %c0_i32 = arith.constant 0 : i32
    %c0_i32_0 = arith.constant 0 : i32
    %c0_i32_1 = arith.constant 0 : i32
    %c0_i32_2 = arith.constant 0 : i32
    return %c0_i32, %c0_i32_0, %c0_i32_1 : i32, i32, i32
  }
  func.func @transform_16(%arg0: i32) -> (i32, i32, i32) {
    %c0_i32 = arith.constant 0 : i32
    %c0_i32_0 = arith.constant 0 : i32
    %c0_i32_1 = arith.constant 0 : i32
    %c0_i32_2 = arith.constant 0 : i32
    return %c0_i32, %c0_i32_0, %c0_i32_1 : i32, i32, i32
  }
  func.func @transform_17(%arg0: i32) -> (i32, i32, i32) {
    %c0_i32 = arith.constant 0 : i32
    %c0_i32_0 = arith.constant 0 : i32
    %c0_i32_1 = arith.constant 0 : i32
    %c0_i32_2 = arith.constant 0 : i32
    return %c0_i32, %c0_i32_0, %c0_i32_1 : i32, i32, i32
  }
  func.func @transform_18(%arg0: i32) -> (i32, i32) {
    %c0_i32 = arith.constant 0 : i32
    %c0_i32_0 = arith.constant 0 : i32
    %c0_i32_1 = arith.constant 0 : i32
    return %c0_i32, %c0_i32_0 : i32, i32
  }
  func.func @transform_19(%arg0: i32) -> (i32, i32) {
    %c0_i32 = arith.constant 0 : i32
    %c0_i32_0 = arith.constant 0 : i32
    %c0_i32_1 = arith.constant 0 : i32
    return %c0_i32, %c0_i32_0 : i32, i32
  }
  func.func @transform_20(%arg0: i32) -> (i32, i32, i32, i32) {
    %c0_i32 = arith.constant 0 : i32
    %c0_i32_0 = arith.constant 0 : i32
    %c0_i32_1 = arith.constant 0 : i32
    %c0_i32_2 = arith.constant 0 : i32
    return %arg0, %c0_i32, %c0_i32_0, %c0_i32_1 : i32, i32, i32, i32
  }
}

</mosaic_0001>

<llo_original>
// kernel: protein_bert_for_contact_prediction.1
$region0: #{protein_bert_for_contact_prediction.1}
  #allocation0 [shape = 'u32[]', space=smem, size = 0x4, offset = 0x4, fixed_abs, tag = 'smem constant byte address 0x4 - core index']
  #allocation1 [shape = 'u32[144,128]{1,0:T(1,128)}', space=vmem, size = 0x12000, scoped, tag = 'internal scratch']
  %s0 = inlined_call_operand.vmem [shape: f32[2,8,32], index: 0, kind: input, shape index: {}]
  %s1 = inlined_call_operand.vmem [shape: f32[2,1,8], index: 1, kind: input, shape index: {}]
  %s2 = inlined_call_operand.vmem [shape: f32[8,32], index: 2, kind: input, shape index: {}]
  %s3 = inlined_call_operand.vmem [shape: f32[4,32], index: 3, kind: input, shape index: {}]
  %s4 = inlined_call_operand.vmem [shape: f32[2,2,32], index: 4, kind: input, shape index: {}]
  %s5 = inlined_call_operand.vmem [shape: bf16[2,2,32,16], index: 5, kind: input, shape index: {}]
  %s6 = inlined_call_operand.vmem [shape: bf16[2,2,32,16], index: 6, kind: input, shape index: {}]
  %s7 = inlined_call_operand.vmem [shape: bf16[2,2,32,16], index: 7, kind: input, shape index: {}]
  %s8 = inlined_call_operand.vmem [shape: f32[2,2,1,16], index: 8, kind: input, shape index: {}]
  %s9 = inlined_call_operand.vmem [shape: f32[2,2,1,16], index: 9, kind: input, shape index: {}]
  %s10 = inlined_call_operand.vmem [shape: f32[2,2,1,16], index: 10, kind: input, shape index: {}]
  %s11 = inlined_call_operand.vmem [shape: bf16[2,2,16,32], index: 11, kind: input, shape index: {}]
  %s12 = inlined_call_operand.vmem [shape: f32[2,1,32], index: 12, kind: input, shape index: {}]
  %s13 = inlined_call_operand.vmem [shape: f32[2,2,32], index: 13, kind: input, shape index: {}]
  %s14 = inlined_call_operand.vmem [shape: bf16[2,32,64], index: 14, kind: input, shape index: {}]
  %s15 = inlined_call_operand.vmem [shape: f32[2,1,64], index: 15, kind: input, shape index: {}]
  %s16 = inlined_call_operand.vmem [shape: bf16[2,64,32], index: 16, kind: input, shape index: {}]
  %s17 = inlined_call_operand.vmem [shape: f32[2,1,32], index: 17, kind: input, shape index: {}]
  %s18 = inlined_call_operand.vmem [shape: f32[2,32], index: 18, kind: input, shape index: {}]
  %s19 = inlined_call_operand.vmem [shape: f32[1,2], index: 19, kind: input, shape index: {}]
  %s20 = inlined_call_operand.vmem [shape: f32[2,2,8,8], index: 20, kind: output, shape index: {}]
  %s21 = sld [smem:[#allocation0]]
  $region90: #{protein_bert_for_contact_prediction.1} parent=0
    _
  %s23 = ssub.s32 1, %s21
  %s24 = scalar_select 0, %s23, %s21
  // Predicated region
  $region2: #{protein_bert_for_contact_prediction.1} parent=0 // pred_check
    _
  $region3: #{protein_bert_for_contact_prediction.1} parent=0 // pred_check_branch
    %26 = sbr.rel (0) target = $region5
  $region4: #{protein_bert_for_contact_prediction.1} parent=0 // pred_region
    _
  $region5: #{protein_bert_for_contact_prediction.1} parent=0 // pred_fallthru
    _
  // Predicated region
  $region6: #{protein_bert_for_contact_prediction.1} parent=0 // pred_check
    _
  $region7: #{protein_bert_for_contact_prediction.1} parent=0 // pred_check_branch
    %28 = sbr.rel (0) target = $region9
  $region8: #{protein_bert_for_contact_prediction.1} parent=0 // pred_region
    _
  $region9: #{protein_bert_for_contact_prediction.1} parent=0 // pred_fallthru
    _
  // Predicated region
  $region10: #{protein_bert_for_contact_prediction.1} parent=0 // pred_check
    _
  $region11: #{protein_bert_for_contact_prediction.1} parent=0 // pred_check_branch
    %30 = sbr.rel (0) target = $region13
  $region12: #{protein_bert_for_contact_prediction.1} parent=0 // pred_region
    _
  $region13: #{protein_bert_for_contact_prediction.1} parent=0 // pred_fallthru
    _
  // Predicated region
  $region14: #{protein_bert_for_contact_prediction.1} parent=0 // pred_check
    _
  $region15: #{protein_bert_for_contact_prediction.1} parent=0 // pred_check_branch
    %32 = sbr.rel (0) target = $region17
  $region16: #{protein_bert_for_contact_prediction.1} parent=0 // pred_region
    _
  $region17: #{protein_bert_for_contact_prediction.1} parent=0 // pred_fallthru
    _
  // Predicated region
  $region18: #{protein_bert_for_contact_prediction.1} parent=0 // pred_check
    _
  $region19: #{protein_bert_for_contact_prediction.1} parent=0 // pred_check_branch
    %34 = sbr.rel (0) target = $region21
  $region20: #{protein_bert_for_contact_prediction.1} parent=0 // pred_region
    _
  $region21: #{protein_bert_for_contact_prediction.1} parent=0 // pred_fallthru
    _
  // Predicated region
  $region22: #{protein_bert_for_contact_prediction.1} parent=0 // pred_check
    _
  $region23: #{protein_bert_for_contact_prediction.1} parent=0 // pred_check_branch
    %36 = sbr.rel (0) target = $region25
  $region24: #{protein_bert_for_contact_prediction.1} parent=0 // pred_region
    _
  $region25: #{protein_bert_for_contact_prediction.1} parent=0 // pred_fallthru
    _
  // Predicated region
  $region26: #{protein_bert_for_contact_prediction.1} parent=0 // pred_check
    _
  $region27: #{protein_bert_for_contact_prediction.1} parent=0 // pred_check_branch
    %38 = sbr.rel (0) target = $region29
  $region28: #{protein_bert_for_contact_prediction.1} parent=0 // pred_region
    _
  $region29: #{protein_bert_for_contact_prediction.1} parent=0 // pred_fallthru
    _
  // Predicated region
  $region30: #{protein_bert_for_contact_prediction.1} parent=0 // pred_check
    _
  $region31: #{protein_bert_for_contact_prediction.1} parent=0 // pred_check_branch
    %40 = sbr.rel (0) target = $region33
  $region32: #{protein_bert_for_contact_prediction.1} parent=0 // pred_region
    _
  $region33: #{protein_bert_for_contact_prediction.1} parent=0 // pred_fallthru
    _
  // Predicated region
  $region34: #{protein_bert_for_contact_prediction.1} parent=0 // pred_check
    _
  $region35: #{protein_bert_for_contact_prediction.1} parent=0 // pred_check_branch
    %42 = sbr.rel (0) target = $region37
  $region36: #{protein_bert_for_contact_prediction.1} parent=0 // pred_region
    _
  $region37: #{protein_bert_for_contact_prediction.1} parent=0 // pred_fallthru
    _
  // Predicated region
  $region38: #{protein_bert_for_contact_prediction.1} parent=0 // pred_check
    _
  $region39: #{protein_bert_for_contact_prediction.1} parent=0 // pred_check_branch
    %44 = sbr.rel (0) target = $region41
  $region40: #{protein_bert_for_contact_prediction.1} parent=0 // pred_region
    _
  $region41: #{protein_bert_for_contact_prediction.1} parent=0 // pred_fallthru
    _
  // Predicated region
  $region42: #{protein_bert_for_contact_prediction.1} parent=0 // pred_check
    _
  $region43: #{protein_bert_for_contact_prediction.1} parent=0 // pred_check_branch
    %46 = sbr.rel (0) target = $region45
  $region44: #{protein_bert_for_contact_prediction.1} parent=0 // pred_region
    _
  $region45: #{protein_bert_for_contact_prediction.1} parent=0 // pred_fallthru
    _
  // Predicated region
  $region46: #{protein_bert_for_contact_prediction.1} parent=0 // pred_check
    _
  $region47: #{protein_bert_for_contact_prediction.1} parent=0 // pred_check_branch
    %48 = sbr.rel (0) target = $region49
  $region48: #{protein_bert_for_contact_prediction.1} parent=0 // pred_region
    _
  $region49: #{protein_bert_for_contact_prediction.1} parent=0 // pred_fallthru
    _
  // Predicated region
  $region50: #{protein_bert_for_contact_prediction.1} parent=0 // pred_check
    _
  $region51: #{protein_bert_for_contact_prediction.1} parent=0 // pred_check_branch
    %50 = sbr.rel (0) target = $region53
  $region52: #{protein_bert_for_contact_prediction.1} parent=0 // pred_region
    _
  $region53: #{protein_bert_for_contact_prediction.1} parent=0 // pred_fallthru
    _
  // Predicated region
  $region54: #{protein_bert_for_contact_prediction.1} parent=0 // pred_check
    _
  $region55: #{protein_bert_for_contact_prediction.1} parent=0 // pred_check_branch
    %52 = sbr.rel (0) target = $region57
  $region56: #{protein_bert_for_contact_prediction.1} parent=0 // pred_region
    _
  $region57: #{protein_bert_for_contact_prediction.1} parent=0 // pred_fallthru
    _
  // Predicated region
  $region58: #{protein_bert_for_contact_prediction.1} parent=0 // pred_check
    _
  $region59: #{protein_bert_for_contact_prediction.1} parent=0 // pred_check_branch
    %54 = sbr.rel (0) target = $region61
  $region60: #{protein_bert_for_contact_prediction.1} parent=0 // pred_region
    _
  $region61: #{protein_bert_for_contact_prediction.1} parent=0 // pred_fallthru
    _
  // Predicated region
  $region62: #{protein_bert_for_contact_prediction.1} parent=0 // pred_check
    _
  $region63: #{protein_bert_for_contact_prediction.1} parent=0 // pred_check_branch
    %56 = sbr.rel (0) target = $region65
  $region64: #{protein_bert_for_contact_prediction.1} parent=0 // pred_region
    _
  $region65: #{protein_bert_for_contact_prediction.1} parent=0 // pred_fallthru
    _
  // Predicated region
  $region66: #{protein_bert_for_contact_prediction.1} parent=0 // pred_check
    _
  $region67: #{protein_bert_for_contact_prediction.1} parent=0 // pred_check_branch
    %58 = sbr.rel (0) target = $region69
  $region68: #{protein_bert_for_contact_prediction.1} parent=0 // pred_region
    _
  $region69: #{protein_bert_for_contact_prediction.1} parent=0 // pred_fallthru
    _
  // Predicated region
  $region70: #{protein_bert_for_contact_prediction.1} parent=0 // pred_check
    _
  $region71: #{protein_bert_for_contact_prediction.1} parent=0 // pred_check_branch
    %60 = sbr.rel (0) target = $region73
  $region72: #{protein_bert_for_contact_prediction.1} parent=0 // pred_region
    _
  $region73: #{protein_bert_for_contact_prediction.1} parent=0 // pred_fallthru
    _
  // Predicated region
  $region74: #{protein_bert_for_contact_prediction.1} parent=0 // pred_check
    _
  $region75: #{protein_bert_for_contact_prediction.1} parent=0 // pred_check_branch
    %62 = sbr.rel (0) target = $region77
  $region76: #{protein_bert_for_contact_prediction.1} parent=0 // pred_region
    _
  $region77: #{protein_bert_for_contact_prediction.1} parent=0 // pred_fallthru
    _
  // Predicated region
  $region78: #{protein_bert_for_contact_prediction.1} parent=0 // pred_check
    _
  $region79: #{protein_bert_for_contact_prediction.1} parent=0 // pred_check_branch
    %64 = sbr.rel (0) target = $region81
  $region80: #{protein_bert_for_contact_prediction.1} parent=0 // pred_region
    _
  $region81: #{protein_bert_for_contact_prediction.1} parent=0 // pred_fallthru
    _
  %v66 = vld [vmem:[%s3] sm:$0xf]
  %v67 = vld [vmem:[%s1] sm:$0x1]
  %v68 = vld [vmem:[%s1 + $0x1] sm:$0x1]
  %v69 = vld [vmem:[%s0] sm:$0xff]
  %v70 = vld [vmem:[%s0 + $0x8] sm:$0xff]
  %v71 = vld [vmem:[%s2] sm:$0xff]
  %v72 = vadd.f32 %v69, %v71
  %v73 = vadd.f32 %v70, %v71
  %vm74 = vcmask 261120
  %v75 = vsel %vm74, %v72, 0.0
  %76 = vadd.xlane.f32.xlu0 %v75
  %v77 = vpop.xlane.xlu0 %76
  %v78 = vsel %vm74, %v73, 0.0
  %79 = vadd.xlane.f32.xlu0 %v78
  %v80 = vpop.xlane.xlu0 %79
  %v81 = vrcp.pop 32.0
  %v82 = vmul.f32 %v77, %v81
  %v83 = vmul.f32 %v80, %v81
  %v84 = vsub.f32 %v72, %v82
  %v85 = vsub.f32 %v73, %v83
  %v86 = vmul.f32 %v84, %v84
  %v87 = vmul.f32 %v85, %v85
  %v88 = vsel %vm74, %v86, 0.0
  %89 = vadd.xlane.f32.xlu0 %v88
  %v90 = vpop.xlane.xlu0 %89
  %v91 = vsel %vm74, %v87, 0.0
  %92 = vadd.xlane.f32.xlu0 %v91
  %v93 = vpop.xlane.xlu0 %92
  %v94 = vmul.f32 %v90, %v81
  %v95 = vmul.f32 %v93, %v81
  %v96 = vadd.f32 %v94, 1e-05
  %v97 = vadd.f32 %v95, 1e-05
  %v98 = vrsqrt.pop %v96
  %v99 = vrsqrt.pop %v97
  %v100 = vmul.f32 %v84, %v98
  %v101 = vmul.f32 %v85, %v99
  %v102 = vlaneseq
  %v103 = vshrl.u32 %v102, 7
  %v104 = vsub.s32 0, %v103
  %v105 = vrot.slane %v66, %v104
  %v106 = vmul.f32 %v100, %v105
  %v107 = vmul.f32 %v101, %v105
  %v108 = vlaneseq
  %v109 = vshrl.u32 %v108, 7
  %v110 = vsub.s32 1, %v109
  %v111 = vrot.slane %v66, %v110
  %v112 = vadd.f32 %v106, %v111
  %v113 = vadd.f32 %v107, %v111
  %v114 = vld [vmem:[%s4] sm:$0x1]
  %v115 = vld [vmem:[%s4 + $0x1] sm:$0x1]
  %v116 = vsel %vm74, %v112, 0.0
  %117 = vadd.xlane.f32.xlu0 %v116
  %v118 = vpop.xlane.xlu0 %117
  %v119 = vsel %vm74, %v113, 0.0
  %120 = vadd.xlane.f32.xlu0 %v119
  %v121 = vpop.xlane.xlu0 %120
  %v122 = vmul.f32 %v118, %v81
  %v123 = vmul.f32 %v121, %v81
  %v124 = vsub.f32 %v112, %v122
  %v125 = vsub.f32 %v113, %v123
  %v126 = vmul.f32 %v124, %v124
  %v127 = vmul.f32 %v125, %v125
  %v128 = vsel %vm74, %v126, 0.0
  %129 = vadd.xlane.f32.xlu0 %v128
  %v130 = vpop.xlane.xlu0 %129
  %v131 = vsel %vm74, %v127, 0.0
  %132 = vadd.xlane.f32.xlu0 %v131
  %v133 = vpop.xlane.xlu0 %132
  %v134 = vmul.f32 %v130, %v81
  %v135 = vmul.f32 %v133, %v81
  %v136 = vadd.f32 %v134, 1e-05
  %v137 = vadd.f32 %v135, 1e-05
  %v138 = vrsqrt.pop %v136
  %v139 = vrsqrt.pop %v137
  %v140 = vmul.f32 %v124, %v138
  %v141 = vmul.f32 %v125, %v139
  %v142 = vlaneseq
  %v143 = vshrl.u32 %v142, 7
  %v144 = vsub.s32 0, %v143
  %v145 = vrot.slane %v114, %v144
  %v146 = vmul.f32 %v140, %v145
  %v147 = vmul.f32 %v141, %v145
  %v148 = vlaneseq
  %v149 = vshrl.u32 %v148, 7
  %v150 = vsub.s32 0, %v149
  %v151 = vrot.slane %v115, %v150
  %v152 = vadd.f32 %v146, %v151
  %v153 = vadd.f32 %v147, %v151
  %v154 = vpack.c.bf16 %v153, %v152
  %v155 = vld [vmem:[%s5] sm:$0xf]
  %v156 = vld [vmem:[%s5 + $0x4] sm:$0xf]
  %v157 = vld [vmem:[%s5 + $0x8] sm:$0xf]
  %v158 = vld [vmem:[%s5 + $0xc] sm:$0xf]
  %v159 = vld [vmem:[%s8] sm:$0x1]
  %v161 = vlaneseq
  %v162 = vshrl.u32 %v161, 7
  %v163 = vsub.s32 0, %v162
  %v164 = vrot.slane %v159, %v163
  %v170 = vunpack.c.l.b16 %v155
  %v171 = vunpack.c.l.b16 %v156
  %v172 = vunpack.c.l.b16 %v157
  %v173 = vunpack.c.l.b16 %v158
  %v174 = vpack.c.b16 %v171, %v170
  %v175 = vpack.c.b16 %v173, %v172
  %v179 = vsel %vm74, %v154, 0
  %181 = vmatprep.subr.bf16.mxu0 0
  %182 = vmatpush1.bf16.msra.mxu0 0
  %183 = vmatprep.subr.bf16.mxu0 0
  %184 = vmatpush1.bf16.msra.mxu0 0
  %185 = vmatprep.subr.bf16.mxu0 0
  %186 = vmatpush1.bf16.msra.mxu0 0
  %187 = vmatprep.subr.bf16.mxu0 0
  %188 = vmatpush1.bf16.msra.mxu0 0
  %189 = vmatprep.subr.bf16.mxu0 0
  %190 = vmatpush1.bf16.msra.mxu0 0
  %191 = vmatprep.subr.bf16.mxu0 0
  %192 = vmatpush1.bf16.msra.mxu0 0
  %193 = vmatprep.subr.bf16.mxu0 0
  %194 = vmatpush1.bf16.msra.mxu0 %v175
  %195 = vmatprep.subr.bf16.mxu0 0
  %196 = vmatpush1.bf16.msra.mxu0 %v174
  %197 = vmatprep.subr.bf16.mxu0 0
  %198 = vmatpush2.bf16.msra.mxu0 0
  %199 = vmatprep.subr.bf16.mxu0 0
  %200 = vmatpush2.bf16.msra.mxu0 0
  %201 = vmatprep.subr.bf16.mxu0 0
  %202 = vmatpush2.bf16.msra.mxu0 0
  %203 = vmatprep.subr.bf16.mxu0 0
  %204 = vmatpush2.bf16.msra.mxu0 0
  %205 = vmatprep.subr.bf16.mxu0 0
  %206 = vmatpush2.bf16.msra.mxu0 0
  %207 = vmatprep.subr.bf16.mxu0 0
  %208 = vmatpush2.bf16.msra.mxu0 0
  %209 = vmatprep.subr.bf16.mxu0 0
  %210 = vmatpush2.bf16.msra.mxu0 0
  %211 = vmatprep.subr.bf16.mxu0 0
  %212 = vmatpush2.bf16.msra.mxu0 0
  %213 = vmatprep.mubr.bf16.mxu0 0
  %214 = vmatmul.mubr.bf16.gmra.mxu0 %v179
  %v215 = vpop.f32.mrf.mxu0
  %v216 = vadd.f32 %v164, %v215
  %v217 = vpop.f32.mrf.mxu0
  %v218 = vpop.f32.mrf.mxu0
  %v219 = vadd.f32 %v164, %v218
  %v220 = vpop.f32.mrf.mxu0
  %221 = vdwg.mxu0
  %v222 = vld [vmem:[%s6] sm:$0xf]
  %v223 = vld [vmem:[%s6 + $0x4] sm:$0xf]
  %v224 = vld [vmem:[%s6 + $0x8] sm:$0xf]
  %v225 = vld [vmem:[%s6 + $0xc] sm:$0xf]
  %v226 = vld [vmem:[%s9] sm:$0x1]
  %v228 = vlaneseq
  %v229 = vshrl.u32 %v228, 7
  %v230 = vsub.s32 0, %v229
  %v231 = vrot.slane %v226, %v230
  %v237 = vunpack.c.l.b16 %v222
  %v238 = vunpack.c.l.b16 %v223
  %v239 = vunpack.c.l.b16 %v224
  %v240 = vunpack.c.l.b16 %v225
  %v241 = vpack.c.b16 %v238, %v237
  %v242 = vpack.c.b16 %v240, %v239
  %245 = vmatprep.subr.bf16.mxu0 0
  %246 = vmatpush1.bf16.msra.mxu0 0
  %247 = vmatprep.subr.bf16.mxu0 0
  %248 = vmatpush1.bf16.msra.mxu0 0
  %249 = vmatprep.subr.bf16.mxu0 0
  %250 = vmatpush1.bf16.msra.mxu0 0
  %251 = vmatprep.subr.bf16.mxu0 0
  %252 = vmatpush1.bf16.msra.mxu0 0
  %253 = vmatprep.subr.bf16.mxu0 0
  %254 = vmatpush1.bf16.msra.mxu0 0
  %255 = vmatprep.subr.bf16.mxu0 0
  %256 = vmatpush1.bf16.msra.mxu0 0
  %257 = vmatprep.subr.bf16.mxu0 0
  %258 = vmatpush1.bf16.msra.mxu0 %v242
  %259 = vmatprep.subr.bf16.mxu0 0
  %260 = vmatpush1.bf16.msra.mxu0 %v241
  %261 = vmatprep.subr.bf16.mxu0 0
  %262 = vmatpush2.bf16.msra.mxu0 0
  %263 = vmatprep.subr.bf16.mxu0 0
  %264 = vmatpush2.bf16.msra.mxu0 0
  %265 = vmatprep.subr.bf16.mxu0 0
  %266 = vmatpush2.bf16.msra.mxu0 0
  %267 = vmatprep.subr.bf16.mxu0 0
  %268 = vmatpush2.bf16.msra.mxu0 0
  %269 = vmatprep.subr.bf16.mxu0 0
  %270 = vmatpush2.bf16.msra.mxu0 0
  %271 = vmatprep.subr.bf16.mxu0 0
  %272 = vmatpush2.bf16.msra.mxu0 0
  %273 = vmatprep.subr.bf16.mxu0 0
  %274 = vmatpush2.bf16.msra.mxu0 0
  %275 = vmatprep.subr.bf16.mxu0 0
  %276 = vmatpush2.bf16.msra.mxu0 0
  %277 = vmatprep.mubr.bf16.mxu0 0
  %278 = vmatmul.mubr.bf16.gmra.mxu0 %v179
  %v279 = vpop.f32.mrf.mxu0
  %v280 = vadd.f32 %v231, %v279
  %v281 = vpop.f32.mrf.mxu0
  %v282 = vpop.f32.mrf.mxu0
  %v283 = vadd.f32 %v231, %v282
  %v284 = vpop.f32.mrf.mxu0
  %285 = vdwg.mxu0
  %v286 = vld [vmem:[%s7] sm:$0xf]
  %v287 = vld [vmem:[%s7 + $0x4] sm:$0xf]
  %v288 = vld [vmem:[%s7 + $0x8] sm:$0xf]
  %v289 = vld [vmem:[%s7 + $0xc] sm:$0xf]
  %v290 = vld [vmem:[%s10] sm:$0x1]
  %v292 = vlaneseq
  %v293 = vshrl.u32 %v292, 7
  %v294 = vsub.s32 0, %v293
  %v295 = vrot.slane %v290, %v294
  %v301 = vunpack.c.l.b16 %v286
  %v302 = vunpack.c.l.b16 %v287
  %v303 = vunpack.c.l.b16 %v288
  %v304 = vunpack.c.l.b16 %v289
  %v305 = vpack.c.b16 %v302, %v301
  %v306 = vpack.c.b16 %v304, %v303
  %309 = vmatprep.subr.bf16.mxu0 0
  %310 = vmatpush1.bf16.msra.mxu0 0
  %311 = vmatprep.subr.bf16.mxu0 0
  %312 = vmatpush1.bf16.msra.mxu0 0
  %313 = vmatprep.subr.bf16.mxu0 0
  %314 = vmatpush1.bf16.msra.mxu0 0
  %315 = vmatprep.subr.bf16.mxu0 0
  %316 = vmatpush1.bf16.msra.mxu0 0
  %317 = vmatprep.subr.bf16.mxu0 0
  %318 = vmatpush1.bf16.msra.mxu0 0
  %319 = vmatprep.subr.bf16.mxu0 0
  %320 = vmatpush1.bf16.msra.mxu0 0
  %321 = vmatprep.subr.bf16.mxu0 0
  %322 = vmatpush1.bf16.msra.mxu0 %v306
  %323 = vmatprep.subr.bf16.mxu0 0
  %324 = vmatpush1.bf16.msra.mxu0 %v305
  %325 = vmatprep.subr.bf16.mxu0 0
  %326 = vmatpush2.bf16.msra.mxu0 0
  %327 = vmatprep.subr.bf16.mxu0 0
  %328 = vmatpush2.bf16.msra.mxu0 0
  %329 = vmatprep.subr.bf16.mxu0 0
  %330 = vmatpush2.bf16.msra.mxu0 0
  %331 = vmatprep.subr.bf16.mxu0 0
  %332 = vmatpush2.bf16.msra.mxu0 0
  %333 = vmatprep.subr.bf16.mxu0 0
  %334 = vmatpush2.bf16.msra.mxu0 0
  %335 = vmatprep.subr.bf16.mxu0 0
  %336 = vmatpush2.bf16.msra.mxu0 0
  %337 = vmatprep.subr.bf16.mxu0 0
  %338 = vmatpush2.bf16.msra.mxu0 0
  %339 = vmatprep.subr.bf16.mxu0 0
  %340 = vmatpush2.bf16.msra.mxu0 0
  %341 = vmatprep.mubr.bf16.mxu0 0
  %342 = vmatmul.mubr.bf16.gmra.mxu0 %v179
  %v343 = vpop.f32.mrf.mxu0
  %v344 = vadd.f32 %v295, %v343
  %v345 = vpop.f32.mrf.mxu0
  %v346 = vpop.f32.mrf.mxu0
  %v347 = vadd.f32 %v295, %v346
  %v348 = vpop.f32.mrf.mxu0
  %349 = vdwg.mxu0
  %v350 = vmul.f32 %v216, 0.25
  %v351 = vmul.f32 %v219, 0.25
  %v354 = vlaneseq
  %v355 = vshrl.u32 %v354, 7
  %v356 = vsub.s32 0, %v355
  %v357 = vrot.slane %v67, %v356
  %v358 = vlaneseq
  %v359 = vshrl.u32 %v358, 7
  %v360 = vsub.s32 0, %v359
  %v361 = vrot.slane %v68, %v360
  %vm364 = vcmask 130048
  %v366 = vsel %vm364, %v350, 0
  %v369 = vsel %vm364, %v280, 0
  %371 = vmatprep.subr.mxu0 0.0
  %372 = vmatpush1.xpose.msra.mxu0 0.0
  %373 = vmatprep.subr.mxu0 0.0
  %374 = vmatpush1.xpose.msra.mxu0 0.0
  %375 = vmatprep.subr.mxu0 0.0
  %376 = vmatpush1.xpose.msra.mxu0 0.0
  %377 = vmatprep.subr.mxu0 0.0
  %378 = vmatpush1.xpose.msra.mxu0 0.0
  %379 = vmatprep.subr.mxu0 0.0
  %380 = vmatpush1.xpose.msra.mxu0 0.0
  %381 = vmatprep.subr.mxu0 0.0
  %382 = vmatpush1.xpose.msra.mxu0 0.0
  %383 = vmatprep.subr.mxu0 0.0
  %384 = vmatpush1.xpose.msra.mxu0 0.0
  %385 = vmatprep.subr.mxu0 0.0
  %386 = vmatpush1.xpose.msra.mxu0 0.0
  %387 = vmatprep.subr.mxu0 0.0
  %388 = vmatpush1.xpose.msra.mxu0 0.0
  %389 = vmatprep.subr.mxu0 0.0
  %390 = vmatpush1.xpose.msra.mxu0 0.0
  %391 = vmatprep.subr.mxu0 0.0
  %392 = vmatpush1.xpose.msra.mxu0 0.0
  %393 = vmatprep.subr.mxu0 0.0
  %394 = vmatpush1.xpose.msra.mxu0 0.0
  %395 = vmatprep.subr.mxu0 0.0
  %396 = vmatpush1.xpose.msra.mxu0 0.0
  %397 = vmatprep.subr.mxu0 0.0
  %398 = vmatpush1.xpose.msra.mxu0 0.0
  %399 = vmatprep.subr.mxu0 0.0
  %400 = vmatpush1.xpose.msra.mxu0 0.0
  %401 = vmatprep.subr.mxu0 0.0
  %402 = vmatpush1.xpose.msra.mxu0 %v369
  %403 = vmatprep.subr.mxu0 0.0
  %404 = vmatpush2.xpose.msra.mxu0 0.0
  %405 = vmatprep.subr.mxu0 0.0
  %406 = vmatpush2.xpose.msra.mxu0 0.0
  %407 = vmatprep.subr.mxu0 0.0
  %408 = vmatpush2.xpose.msra.mxu0 0.0
  %409 = vmatprep.subr.mxu0 0.0
  %410 = vmatpush2.xpose.msra.mxu0 0.0
  %411 = vmatprep.subr.mxu0 0.0
  %412 = vmatpush2.xpose.msra.mxu0 0.0
  %413 = vmatprep.subr.mxu0 0.0
  %414 = vmatpush2.xpose.msra.mxu0 0.0
  %415 = vmatprep.subr.mxu0 0.0
  %416 = vmatpush2.xpose.msra.mxu0 0.0
  %417 = vmatprep.subr.mxu0 0.0
  %418 = vmatpush2.xpose.msra.mxu0 0.0
  %419 = vmatprep.subr.mxu0 0.0
  %420 = vmatpush2.xpose.msra.mxu0 0.0
  %421 = vmatprep.subr.mxu0 0.0
  %422 = vmatpush2.xpose.msra.mxu0 0.0
  %423 = vmatprep.subr.mxu0 0.0
  %424 = vmatpush2.xpose.msra.mxu0 0.0
  %425 = vmatprep.subr.mxu0 0.0
  %426 = vmatpush2.xpose.msra.mxu0 0.0
  %427 = vmatprep.subr.mxu0 0.0
  %428 = vmatpush2.xpose.msra.mxu0 0.0
  %429 = vmatprep.subr.mxu0 0.0
  %430 = vmatpush2.xpose.msra.mxu0 0.0
  %431 = vmatprep.subr.mxu0 0.0
  %432 = vmatpush2.xpose.msra.mxu0 0.0
  %433 = vmatprep.subr.mxu0 0.0
  %434 = vmatpush2.xpose.msra.mxu0 0.0
  %435 = vmatprep.mubr.f32.mxu0 0.0
  %436 = vmatmul.mubr.f32.gmra.mxu0 %v366
  %v437 = vpop.f32.mrf.mxu0
  %v438 = vadd.f32 %v357, %v437
  %v439 = vpop.f32.mrf.mxu0
  %440 = vdwg.mxu0
  %v442 = vsel %vm364, %v351, 0
  %v445 = vsel %vm364, %v283, 0
  %447 = vmatprep.subr.mxu0 0.0
  %448 = vmatpush1.xpose.msra.mxu0 0.0
  %449 = vmatprep.subr.mxu0 0.0
  %450 = vmatpush1.xpose.msra.mxu0 0.0
  %451 = vmatprep.subr.mxu0 0.0
  %452 = vmatpush1.xpose.msra.mxu0 0.0
  %453 = vmatprep.subr.mxu0 0.0
  %454 = vmatpush1.xpose.msra.mxu0 0.0
  %455 = vmatprep.subr.mxu0 0.0
  %456 = vmatpush1.xpose.msra.mxu0 0.0
  %457 = vmatprep.subr.mxu0 0.0
  %458 = vmatpush1.xpose.msra.mxu0 0.0
  %459 = vmatprep.subr.mxu0 0.0
  %460 = vmatpush1.xpose.msra.mxu0 0.0
  %461 = vmatprep.subr.mxu0 0.0
  %462 = vmatpush1.xpose.msra.mxu0 0.0
  %463 = vmatprep.subr.mxu0 0.0
  %464 = vmatpush1.xpose.msra.mxu0 0.0
  %465 = vmatprep.subr.mxu0 0.0
  %466 = vmatpush1.xpose.msra.mxu0 0.0
  %467 = vmatprep.subr.mxu0 0.0
  %468 = vmatpush1.xpose.msra.mxu0 0.0
  %469 = vmatprep.subr.mxu0 0.0
  %470 = vmatpush1.xpose.msra.mxu0 0.0
  %471 = vmatprep.subr.mxu0 0.0
  %472 = vmatpush1.xpose.msra.mxu0 0.0
  %473 = vmatprep.subr.mxu0 0.0
  %474 = vmatpush1.xpose.msra.mxu0 0.0
  %475 = vmatprep.subr.mxu0 0.0
  %476 = vmatpush1.xpose.msra.mxu0 0.0
  %477 = vmatprep.subr.mxu0 0.0
  %478 = vmatpush1.xpose.msra.mxu0 %v445
  %479 = vmatprep.subr.mxu0 0.0
  %480 = vmatpush2.xpose.msra.mxu0 0.0
  %481 = vmatprep.subr.mxu0 0.0
  %482 = vmatpush2.xpose.msra.mxu0 0.0
  %483 = vmatprep.subr.mxu0 0.0
  %484 = vmatpush2.xpose.msra.mxu0 0.0
  %485 = vmatprep.subr.mxu0 0.0
  %486 = vmatpush2.xpose.msra.mxu0 0.0
  %487 = vmatprep.subr.mxu0 0.0
  %488 = vmatpush2.xpose.msra.mxu0 0.0
  %489 = vmatprep.subr.mxu0 0.0
  %490 = vmatpush2.xpose.msra.mxu0 0.0
  %491 = vmatprep.subr.mxu0 0.0
  %492 = vmatpush2.xpose.msra.mxu0 0.0
  %493 = vmatprep.subr.mxu0 0.0
  %494 = vmatpush2.xpose.msra.mxu0 0.0
  %495 = vmatprep.subr.mxu0 0.0
  %496 = vmatpush2.xpose.msra.mxu0 0.0
  %497 = vmatprep.subr.mxu0 0.0
  %498 = vmatpush2.xpose.msra.mxu0 0.0
  %499 = vmatprep.subr.mxu0 0.0
  %500 = vmatpush2.xpose.msra.mxu0 0.0
  %501 = vmatprep.subr.mxu0 0.0
  %502 = vmatpush2.xpose.msra.mxu0 0.0
  %503 = vmatprep.subr.mxu0 0.0
  %504 = vmatpush2.xpose.msra.mxu0 0.0
  %505 = vmatprep.subr.mxu0 0.0
  %506 = vmatpush2.xpose.msra.mxu0 0.0
  %507 = vmatprep.subr.mxu0 0.0
  %508 = vmatpush2.xpose.msra.mxu0 0.0
  %509 = vmatprep.subr.mxu0 0.0
  %510 = vmatpush2.xpose.msra.mxu0 0.0
  %511 = vmatprep.mubr.f32.mxu0 0.0
  %512 = vmatmul.mubr.f32.gmra.mxu0 %v442
  %v513 = vpop.f32.mrf.mxu0
  %v514 = vadd.f32 %v361, %v513
  %v515 = vpop.f32.mrf.mxu0
  %516 = vdwg.mxu0
  %vm517 = vcmask 64512
  %v518 = vsel %vm517, %v438, -inf
  %519 = vmax.xlane.f32.xlu0 %v518
  %v520 = vpop.xlane.xlu0 %519
  %v521 = vsel %vm517, %v514, -inf
  %522 = vmax.xlane.f32.xlu0 %v521
  %v523 = vpop.xlane.xlu0 %522
  %v524 = vsub.f32 %v438, %v520
  %v525 = vsub.f32 %v514, %v523
  %v526 = vmul.f32 %v524, 1.442695
  %v527 = vpow.pop %v526
  %v528 = vmul.f32 %v525, 1.442695
  %v529 = vpow.pop %v528
  %v530 = vsel %vm517, %v527, 0.0
  %531 = vadd.xlane.f32.xlu0 %v530
  %v532 = vpop.xlane.xlu0 %531
  %v533 = vsel %vm517, %v529, 0.0
  %534 = vadd.xlane.f32.xlu0 %v533
  %v535 = vpop.xlane.xlu0 %534
  %v536 = vrcp.pop %v532
  %v537 = vrcp.pop %v535
  %v538 = vmul.f32 %v527, %v536
  %v539 = vmul.f32 %v529, %v537
  %v541 = vsel %vm517, %v538, 0
  %543 = vmatprep.subr.mxu0 0.0
  %544 = vmatpush1.msra.mxu0 0.0
  %545 = vmatprep.subr.mxu0 0.0
  %546 = vmatpush1.msra.mxu0 0.0
  %547 = vmatprep.subr.mxu0 0.0
  %548 = vmatpush1.msra.mxu0 0.0
  %549 = vmatprep.subr.mxu0 0.0
  %550 = vmatpush1.msra.mxu0 0.0
  %551 = vmatprep.subr.mxu0 0.0
  %552 = vmatpush1.msra.mxu0 0.0
  %553 = vmatprep.subr.mxu0 0.0
  %554 = vmatpush1.msra.mxu0 0.0
  %555 = vmatprep.subr.mxu0 0.0
  %556 = vmatpush1.msra.mxu0 0.0
  %557 = vmatprep.subr.mxu0 0.0
  %558 = vmatpush1.msra.mxu0 0.0
  %559 = vmatprep.subr.mxu0 0.0
  %560 = vmatpush1.msra.mxu0 0.0
  %561 = vmatprep.subr.mxu0 0.0
  %562 = vmatpush1.msra.mxu0 0.0
  %563 = vmatprep.subr.mxu0 0.0
  %564 = vmatpush1.msra.mxu0 0.0
  %565 = vmatprep.subr.mxu0 0.0
  %566 = vmatpush1.msra.mxu0 0.0
  %567 = vmatprep.subr.mxu0 0.0
  %568 = vmatpush1.msra.mxu0 0.0
  %569 = vmatprep.subr.mxu0 0.0
  %570 = vmatpush1.msra.mxu0 0.0
  %571 = vmatprep.subr.mxu0 0.0
  %572 = vmatpush1.msra.mxu0 0.0
  %573 = vmatprep.subr.mxu0 0.0
  %574 = vmatpush1.msra.mxu0 %v344
  %575 = vmatprep.subr.mxu0 0.0
  %576 = vmatpush2.msra.mxu0 0.0
  %577 = vmatprep.subr.mxu0 0.0
  %578 = vmatpush2.msra.mxu0 0.0
  %579 = vmatprep.subr.mxu0 0.0
  %580 = vmatpush2.msra.mxu0 0.0
  %581 = vmatprep.subr.mxu0 0.0
  %582 = vmatpush2.msra.mxu0 0.0
  %583 = vmatprep.subr.mxu0 0.0
  %584 = vmatpush2.msra.mxu0 0.0
  %585 = vmatprep.subr.mxu0 0.0
  %586 = vmatpush2.msra.mxu0 0.0
  %587 = vmatprep.subr.mxu0 0.0
  %588 = vmatpush2.msra.mxu0 0.0
  %589 = vmatprep.subr.mxu0 0.0
  %590 = vmatpush2.msra.mxu0 0.0
  %591 = vmatprep.subr.mxu0 0.0
  %592 = vmatpush2.msra.mxu0 0.0
  %593 = vmatprep.subr.mxu0 0.0
  %594 = vmatpush2.msra.mxu0 0.0
  %595 = vmatprep.subr.mxu0 0.0
  %596 = vmatpush2.msra.mxu0 0.0
  %597 = vmatprep.subr.mxu0 0.0
  %598 = vmatpush2.msra.mxu0 0.0
  %599 = vmatprep.subr.mxu0 0.0
  %600 = vmatpush2.msra.mxu0 0.0
  %601 = vmatprep.subr.mxu0 0.0
  %602 = vmatpush2.msra.mxu0 0.0
  %603 = vmatprep.subr.mxu0 0.0
  %604 = vmatpush2.msra.mxu0 0.0
  %605 = vmatprep.subr.mxu0 0.0
  %606 = vmatpush2.msra.mxu0 0.0
  %607 = vmatprep.mubr.f32.mxu0 0.0
  %608 = vmatmul.mubr.f32.gmra.mxu0 %v541
  %v609 = vpop.f32.mrf.mxu0
  %v610 = vadd.f32 0.0, %v609
  %v611 = vpop.f32.mrf.mxu0
  %612 = vdwg.mxu0
  %v614 = vsel %vm517, %v539, 0
  %616 = vmatprep.subr.mxu0 0.0
  %617 = vmatpush1.msra.mxu0 0.0
  %618 = vmatprep.subr.mxu0 0.0
  %619 = vmatpush1.msra.mxu0 0.0
  %620 = vmatprep.subr.mxu0 0.0
  %621 = vmatpush1.msra.mxu0 0.0
  %622 = vmatprep.subr.mxu0 0.0
  %623 = vmatpush1.msra.mxu0 0.0
  %624 = vmatprep.subr.mxu0 0.0
  %625 = vmatpush1.msra.mxu0 0.0
  %626 = vmatprep.subr.mxu0 0.0
  %627 = vmatpush1.msra.mxu0 0.0
  %628 = vmatprep.subr.mxu0 0.0
  %629 = vmatpush1.msra.mxu0 0.0
  %630 = vmatprep.subr.mxu0 0.0
  %631 = vmatpush1.msra.mxu0 0.0
  %632 = vmatprep.subr.mxu0 0.0
  %633 = vmatpush1.msra.mxu0 0.0
  %634 = vmatprep.subr.mxu0 0.0
  %635 = vmatpush1.msra.mxu0 0.0
  %636 = vmatprep.subr.mxu0 0.0
  %637 = vmatpush1.msra.mxu0 0.0
  %638 = vmatprep.subr.mxu0 0.0
  %639 = vmatpush1.msra.mxu0 0.0
  %640 = vmatprep.subr.mxu0 0.0
  %641 = vmatpush1.msra.mxu0 0.0
  %642 = vmatprep.subr.mxu0 0.0
  %643 = vmatpush1.msra.mxu0 0.0
  %644 = vmatprep.subr.mxu0 0.0
  %645 = vmatpush1.msra.mxu0 0.0
  %646 = vmatprep.subr.mxu0 0.0
  %647 = vmatpush1.msra.mxu0 %v347
  %648 = vmatprep.subr.mxu0 0.0
  %649 = vmatpush2.msra.mxu0 0.0
  %650 = vmatprep.subr.mxu0 0.0
  %651 = vmatpush2.msra.mxu0 0.0
  %652 = vmatprep.subr.mxu0 0.0
  %653 = vmatpush2.msra.mxu0 0.0
  %654 = vmatprep.subr.mxu0 0.0
  %655 = vmatpush2.msra.mxu0 0.0
  %656 = vmatprep.subr.mxu0 0.0
  %657 = vmatpush2.msra.mxu0 0.0
  %658 = vmatprep.subr.mxu0 0.0
  %659 = vmatpush2.msra.mxu0 0.0
  %660 = vmatprep.subr.mxu0 0.0
  %661 = vmatpush2.msra.mxu0 0.0
  %662 = vmatprep.subr.mxu0 0.0
  %663 = vmatpush2.msra.mxu0 0.0
  %664 = vmatprep.subr.mxu0 0.0
  %665 = vmatpush2.msra.mxu0 0.0
  %666 = vmatprep.subr.mxu0 0.0
  %667 = vmatpush2.msra.mxu0 0.0
  %668 = vmatprep.subr.mxu0 0.0
  %669 = vmatpush2.msra.mxu0 0.0
  %670 = vmatprep.subr.mxu0 0.0
  %671 = vmatpush2.msra.mxu0 0.0
  %672 = vmatprep.subr.mxu0 0.0
  %673 = vmatpush2.msra.mxu0 0.0
  %674 = vmatprep.subr.mxu0 0.0
  %675 = vmatpush2.msra.mxu0 0.0
  %676 = vmatprep.subr.mxu0 0.0
  %677 = vmatpush2.msra.mxu0 0.0
  %678 = vmatprep.subr.mxu0 0.0
  %679 = vmatpush2.msra.mxu0 0.0
  %680 = vmatprep.mubr.f32.mxu0 0.0
  %681 = vmatmul.mubr.f32.gmra.mxu0 %v614
  %v682 = vpop.f32.mrf.mxu0
  %v683 = vadd.f32 0.0, %v682
  %v684 = vpop.f32.mrf.mxu0
  %685 = vdwg.mxu0
  %v686 = vpack.c.bf16 %v683, %v610
  %v687 = vld [vmem:[%s11] sm:$0xf]
  %v688 = vld [vmem:[%s11 + $0x4] sm:$0xf]
  %s689 = scalar_lea.vmem %s5, 16
  %v690 = vld [vmem:[%s689] sm:$0xf]
  %v691 = vld [vmem:[%s689 + $0x4] sm:$0xf]
  %v692 = vld [vmem:[%s689 + $0x8] sm:$0xf]
  %v693 = vld [vmem:[%s689 + $0xc] sm:$0xf]
  %s694 = scalar_lea.vmem %s8, 1
  %v695 = vld [vmem:[%s694] sm:$0x1]
  %v697 = vlaneseq
  %v698 = vshrl.u32 %v697, 7
  %v699 = vsub.s32 0, %v698
  %v700 = vrot.slane %v695, %v699
  %v706 = vunpack.c.l.b16 %v690
  %v707 = vunpack.c.l.b16 %v691
  %v708 = vunpack.c.l.b16 %v692
  %v709 = vunpack.c.l.b16 %v693
  %v710 = vpack.c.b16 %v707, %v706
  %v711 = vpack.c.b16 %v709, %v708
  %714 = vmatprep.subr.bf16.mxu0 0
  %715 = vmatpush1.bf16.msra.mxu0 0
  %716 = vmatprep.subr.bf16.mxu0 0
  %717 = vmatpush1.bf16.msra.mxu0 0
  %718 = vmatprep.subr.bf16.mxu0 0
  %719 = vmatpush1.bf16.msra.mxu0 0
  %720 = vmatprep.subr.bf16.mxu0 0
  %721 = vmatpush1.bf16.msra.mxu0 0
  %722 = vmatprep.subr.bf16.mxu0 0
  %723 = vmatpush1.bf16.msra.mxu0 0
  %724 = vmatprep.subr.bf16.mxu0 0
  %725 = vmatpush1.bf16.msra.mxu0 0
  %726 = vmatprep.subr.bf16.mxu0 0
  %727 = vmatpush1.bf16.msra.mxu0 %v711
  %728 = vmatprep.subr.bf16.mxu0 0
  %729 = vmatpush1.bf16.msra.mxu0 %v710
  %730 = vmatprep.subr.bf16.mxu0 0
  %731 = vmatpush2.bf16.msra.mxu0 0
  %732 = vmatprep.subr.bf16.mxu0 0
  %733 = vmatpush2.bf16.msra.mxu0 0
  %734 = vmatprep.subr.bf16.mxu0 0
  %735 = vmatpush2.bf16.msra.mxu0 0
  %736 = vmatprep.subr.bf16.mxu0 0
  %737 = vmatpush2.bf16.msra.mxu0 0
  %738 = vmatprep.subr.bf16.mxu0 0
  %739 = vmatpush2.bf16.msra.mxu0 0
  %740 = vmatprep.subr.bf16.mxu0 0
  %741 = vmatpush2.bf16.msra.mxu0 0
  %742 = vmatprep.subr.bf16.mxu0 0
  %743 = vmatpush2.bf16.msra.mxu0 0
  %744 = vmatprep.subr.bf16.mxu0 0
  %745 = vmatpush2.bf16.msra.mxu0 0
  %746 = vmatprep.mubr.bf16.mxu0 0
  %747 = vmatmul.mubr.bf16.gmra.mxu0 %v179
  %v748 = vpop.f32.mrf.mxu0
  %v749 = vadd.f32 %v700, %v748
  %v750 = vpop.f32.mrf.mxu0
  %v751 = vpop.f32.mrf.mxu0
  %v752 = vadd.f32 %v700, %v751
  %v753 = vpop.f32.mrf.mxu0
  %754 = vdwg.mxu0
  %s755 = scalar_lea.vmem %s6, 16
  %v756 = vld [vmem:[%s755] sm:$0xf]
  %v757 = vld [vmem:[%s755 + $0x4] sm:$0xf]
  %v758 = vld [vmem:[%s755 + $0x8] sm:$0xf]
  %v759 = vld [vmem:[%s755 + $0xc] sm:$0xf]
  %s760 = scalar_lea.vmem %s9, 1
  %v761 = vld [vmem:[%s760] sm:$0x1]
  %v763 = vlaneseq
  %v764 = vshrl.u32 %v763, 7
  %v765 = vsub.s32 0, %v764
  %v766 = vrot.slane %v761, %v765
  %v772 = vunpack.c.l.b16 %v756
  %v773 = vunpack.c.l.b16 %v757
  %v774 = vunpack.c.l.b16 %v758
  %v775 = vunpack.c.l.b16 %v759
  %v776 = vpack.c.b16 %v773, %v772
  %v777 = vpack.c.b16 %v775, %v774
  %780 = vmatprep.subr.bf16.mxu0 0
  %781 = vmatpush1.bf16.msra.mxu0 0
  %782 = vmatprep.subr.bf16.mxu0 0
  %783 = vmatpush1.bf16.msra.mxu0 0
  %784 = vmatprep.subr.bf16.mxu0 0
  %785 = vmatpush1.bf16.msra.mxu0 0
  %786 = vmatprep.subr.bf16.mxu0 0
  %787 = vmatpush1.bf16.msra.mxu0 0
  %788 = vmatprep.subr.bf16.mxu0 0
  %789 = vmatpush1.bf16.msra.mxu0 0
  %790 = vmatprep.subr.bf16.mxu0 0
  %791 = vmatpush1.bf16.msra.mxu0 0
  %792 = vmatprep.subr.bf16.mxu0 0
  %793 = vmatpush1.bf16.msra.mxu0 %v777
  %794 = vmatprep.subr.bf16.mxu0 0
  %795 = vmatpush1.bf16.msra.mxu0 %v776
  %796 = vmatprep.subr.bf16.mxu0 0
  %797 = vmatpush2.bf16.msra.mxu0 0
  %798 = vmatprep.subr.bf16.mxu0 0
  %799 = vmatpush2.bf16.msra.mxu0 0
  %800 = vmatprep.subr.bf16.mxu0 0
  %801 = vmatpush2.bf16.msra.mxu0 0
  %802 = vmatprep.subr.bf16.mxu0 0
  %803 = vmatpush2.bf16.msra.mxu0 0
  %804 = vmatprep.subr.bf16.mxu0 0
  %805 = vmatpush2.bf16.msra.mxu0 0
  %806 = vmatprep.subr.bf16.mxu0 0
  %807 = vmatpush2.bf16.msra.mxu0 0
  %808 = vmatprep.subr.bf16.mxu0 0
  %809 = vmatpush2.bf16.msra.mxu0 0
  %810 = vmatprep.subr.bf16.mxu0 0
  %811 = vmatpush2.bf16.msra.mxu0 0
  %812 = vmatprep.mubr.bf16.mxu0 0
  %813 = vmatmul.mubr.bf16.gmra.mxu0 %v179
  %v814 = vpop.f32.mrf.mxu0
  %v815 = vadd.f32 %v766, %v814
  %v816 = vpop.f32.mrf.mxu0
  %v817 = vpop.f32.mrf.mxu0
  %v818 = vadd.f32 %v766, %v817
  %v819 = vpop.f32.mrf.mxu0
  %820 = vdwg.mxu0
  %s821 = scalar_lea.vmem %s7, 16
  %v822 = vld [vmem:[%s821] sm:$0xf]
  %v823 = vld [vmem:[%s821 + $0x4] sm:$0xf]
  %v824 = vld [vmem:[%s821 + $0x8] sm:$0xf]
  %v825 = vld [vmem:[%s821 + $0xc] sm:$0xf]
  %s826 = scalar_lea.vmem %s10, 1
  %v827 = vld [vmem:[%s826] sm:$0x1]
  %v829 = vlaneseq
  %v830 = vshrl.u32 %v829, 7
  %v831 = vsub.s32 0, %v830
  %v832 = vrot.slane %v827, %v831
  %v838 = vunpack.c.l.b16 %v822
  %v839 = vunpack.c.l.b16 %v823
  %v840 = vunpack.c.l.b16 %v824
  %v841 = vunpack.c.l.b16 %v825
  %v842 = vpack.c.b16 %v839, %v838
  %v843 = vpack.c.b16 %v841, %v840
  %846 = vmatprep.subr.bf16.mxu0 0
  %847 = vmatpush1.bf16.msra.mxu0 0
  %848 = vmatprep.subr.bf16.mxu0 0
  %849 = vmatpush1.bf16.msra.mxu0 0
  %850 = vmatprep.subr.bf16.mxu0 0
  %851 = vmatpush1.bf16.msra.mxu0 0
  %852 = vmatprep.subr.bf16.mxu0 0
  %853 = vmatpush1.bf16.msra.mxu0 0
  %854 = vmatprep.subr.bf16.mxu0 0
  %855 = vmatpush1.bf16.msra.mxu0 0
  %856 = vmatprep.subr.bf16.mxu0 0
  %857 = vmatpush1.bf16.msra.mxu0 0
  %858 = vmatprep.subr.bf16.mxu0 0
  %859 = vmatpush1.bf16.msra.mxu0 %v843
  %860 = vmatprep.subr.bf16.mxu0 0
  %861 = vmatpush1.bf16.msra.mxu0 %v842
  %862 = vmatprep.subr.bf16.mxu0 0
  %863 = vmatpush2.bf16.msra.mxu0 0
  %864 = vmatprep.subr.bf16.mxu0 0
  %865 = vmatpush2.bf16.msra.mxu0 0
  %866 = vmatprep.subr.bf16.mxu0 0
  %867 = vmatpush2.bf16.msra.mxu0 0
  %868 = vmatprep.subr.bf16.mxu0 0
  %869 = vmatpush2.bf16.msra.mxu0 0
  %870 = vmatprep.subr.bf16.mxu0 0
  %871 = vmatpush2.bf16.msra.mxu0 0
  %872 = vmatprep.subr.bf16.mxu0 0
  %873 = vmatpush2.bf16.msra.mxu0 0
  %874 = vmatprep.subr.bf16.mxu0 0
  %875 = vmatpush2.bf16.msra.mxu0 0
  %876 = vmatprep.subr.bf16.mxu0 0
  %877 = vmatpush2.bf16.msra.mxu0 0
  %878 = vmatprep.mubr.bf16.mxu0 0
  %879 = vmatmul.mubr.bf16.gmra.mxu0 %v179
  %v880 = vpop.f32.mrf.mxu0
  %v881 = vadd.f32 %v832, %v880
  %v882 = vpop.f32.mrf.mxu0
  %v883 = vpop.f32.mrf.mxu0
  %v884 = vadd.f32 %v832, %v883
  %v885 = vpop.f32.mrf.mxu0
  %886 = vdwg.mxu0
  %v887 = vmul.f32 %v749, 0.25
  %v888 = vmul.f32 %v752, 0.25
  %v890 = vsel %vm364, %v887, 0
  %v893 = vsel %vm364, %v815, 0
  %895 = vmatprep.subr.mxu0 0.0
  %896 = vmatpush1.xpose.msra.mxu0 0.0
  %897 = vmatprep.subr.mxu0 0.0
  %898 = vmatpush1.xpose.msra.mxu0 0.0
  %899 = vmatprep.subr.mxu0 0.0
  %900 = vmatpush1.xpose.msra.mxu0 0.0
  %901 = vmatprep.subr.mxu0 0.0
  %902 = vmatpush1.xpose.msra.mxu0 0.0
  %903 = vmatprep.subr.mxu0 0.0
  %904 = vmatpush1.xpose.msra.mxu0 0.0
  %905 = vmatprep.subr.mxu0 0.0
  %906 = vmatpush1.xpose.msra.mxu0 0.0
  %907 = vmatprep.subr.mxu0 0.0
  %908 = vmatpush1.xpose.msra.mxu0 0.0
  %909 = vmatprep.subr.mxu0 0.0
  %910 = vmatpush1.xpose.msra.mxu0 0.0
  %911 = vmatprep.subr.mxu0 0.0
  %912 = vmatpush1.xpose.msra.mxu0 0.0
  %913 = vmatprep.subr.mxu0 0.0
  %914 = vmatpush1.xpose.msra.mxu0 0.0
  %915 = vmatprep.subr.mxu0 0.0
  %916 = vmatpush1.xpose.msra.mxu0 0.0
  %917 = vmatprep.subr.mxu0 0.0
  %918 = vmatpush1.xpose.msra.mxu0 0.0
  %919 = vmatprep.subr.mxu0 0.0
  %920 = vmatpush1.xpose.msra.mxu0 0.0
  %921 = vmatprep.subr.mxu0 0.0
  %922 = vmatpush1.xpose.msra.mxu0 0.0
  %923 = vmatprep.subr.mxu0 0.0
  %924 = vmatpush1.xpose.msra.mxu0 0.0
  %925 = vmatprep.subr.mxu0 0.0
  %926 = vmatpush1.xpose.msra.mxu0 %v893
  %927 = vmatprep.subr.mxu0 0.0
  %928 = vmatpush2.xpose.msra.mxu0 0.0
  %929 = vmatprep.subr.mxu0 0.0
  %930 = vmatpush2.xpose.msra.mxu0 0.0
  %931 = vmatprep.subr.mxu0 0.0
  %932 = vmatpush2.xpose.msra.mxu0 0.0
  %933 = vmatprep.subr.mxu0 0.0
  %934 = vmatpush2.xpose.msra.mxu0 0.0
  %935 = vmatprep.subr.mxu0 0.0
  %936 = vmatpush2.xpose.msra.mxu0 0.0
  %937 = vmatprep.subr.mxu0 0.0
  %938 = vmatpush2.xpose.msra.mxu0 0.0
  %939 = vmatprep.subr.mxu0 0.0
  %940 = vmatpush2.xpose.msra.mxu0 0.0
  %941 = vmatprep.subr.mxu0 0.0
  %942 = vmatpush2.xpose.msra.mxu0 0.0
  %943 = vmatprep.subr.mxu0 0.0
  %944 = vmatpush2.xpose.msra.mxu0 0.0
  %945 = vmatprep.subr.mxu0 0.0
  %946 = vmatpush2.xpose.msra.mxu0 0.0
  %947 = vmatprep.subr.mxu0 0.0
  %948 = vmatpush2.xpose.msra.mxu0 0.0
  %949 = vmatprep.subr.mxu0 0.0
  %950 = vmatpush2.xpose.msra.mxu0 0.0
  %951 = vmatprep.subr.mxu0 0.0
  %952 = vmatpush2.xpose.msra.mxu0 0.0
  %953 = vmatprep.subr.mxu0 0.0
  %954 = vmatpush2.xpose.msra.mxu0 0.0
  %955 = vmatprep.subr.mxu0 0.0
  %956 = vmatpush2.xpose.msra.mxu0 0.0
  %957 = vmatprep.subr.mxu0 0.0
  %958 = vmatpush2.xpose.msra.mxu0 0.0
  %959 = vmatprep.mubr.f32.mxu0 0.0
  %960 = vmatmul.mubr.f32.gmra.mxu0 %v890
  %v961 = vpop.f32.mrf.mxu0
  %v962 = vadd.f32 %v357, %v961
  %v963 = vpop.f32.mrf.mxu0
  %964 = vdwg.mxu0
  %v966 = vsel %vm364, %v888, 0
  %v969 = vsel %vm364, %v818, 0
  %971 = vmatprep.subr.mxu0 0.0
  %972 = vmatpush1.xpose.msra.mxu0 0.0
  %973 = vmatprep.subr.mxu0 0.0
  %974 = vmatpush1.xpose.msra.mxu0 0.0
  %975 = vmatprep.subr.mxu0 0.0
  %976 = vmatpush1.xpose.msra.mxu0 0.0
  %977 = vmatprep.subr.mxu0 0.0
  %978 = vmatpush1.xpose.msra.mxu0 0.0
  %979 = vmatprep.subr.mxu0 0.0
  %980 = vmatpush1.xpose.msra.mxu0 0.0
  %981 = vmatprep.subr.mxu0 0.0
  %982 = vmatpush1.xpose.msra.mxu0 0.0
  %983 = vmatprep.subr.mxu0 0.0
  %984 = vmatpush1.xpose.msra.mxu0 0.0
  %985 = vmatprep.subr.mxu0 0.0
  %986 = vmatpush1.xpose.msra.mxu0 0.0
  %987 = vmatprep.subr.mxu0 0.0
  %988 = vmatpush1.xpose.msra.mxu0 0.0
  %989 = vmatprep.subr.mxu0 0.0
  %990 = vmatpush1.xpose.msra.mxu0 0.0
  %991 = vmatprep.subr.mxu0 0.0
  %992 = vmatpush1.xpose.msra.mxu0 0.0
  %993 = vmatprep.subr.mxu0 0.0
  %994 = vmatpush1.xpose.msra.mxu0 0.0
  %995 = vmatprep.subr.mxu0 0.0
  %996 = vmatpush1.xpose.msra.mxu0 0.0
  %997 = vmatprep.subr.mxu0 0.0
  %998 = vmatpush1.xpose.msra.mxu0 0.0
  %999 = vmatprep.subr.mxu0 0.0
  %1000 = vmatpush1.xpose.msra.mxu0 0.0
  %1001 = vmatprep.subr.mxu0 0.0
  %1002 = vmatpush1.xpose.msra.mxu0 %v969
  %1003 = vmatprep.subr.mxu0 0.0
  %1004 = vmatpush2.xpose.msra.mxu0 0.0
  %1005 = vmatprep.subr.mxu0 0.0
  %1006 = vmatpush2.xpose.msra.mxu0 0.0
  %1007 = vmatprep.subr.mxu0 0.0
  %1008 = vmatpush2.xpose.msra.mxu0 0.0
  %1009 = vmatprep.subr.mxu0 0.0
  %1010 = vmatpush2.xpose.msra.mxu0 0.0
  %1011 = vmatprep.subr.mxu0 0.0
  %1012 = vmatpush2.xpose.msra.mxu0 0.0
  %1013 = vmatprep.subr.mxu0 0.0
  %1014 = vmatpush2.xpose.msra.mxu0 0.0
  %1015 = vmatprep.subr.mxu0 0.0
  %1016 = vmatpush2.xpose.msra.mxu0 0.0
  %1017 = vmatprep.subr.mxu0 0.0
  %1018 = vmatpush2.xpose.msra.mxu0 0.0
  %1019 = vmatprep.subr.mxu0 0.0
  %1020 = vmatpush2.xpose.msra.mxu0 0.0
  %1021 = vmatprep.subr.mxu0 0.0
  %1022 = vmatpush2.xpose.msra.mxu0 0.0
  %1023 = vmatprep.subr.mxu0 0.0
  %1024 = vmatpush2.xpose.msra.mxu0 0.0
  %1025 = vmatprep.subr.mxu0 0.0
  %1026 = vmatpush2.xpose.msra.mxu0 0.0
  %1027 = vmatprep.subr.mxu0 0.0
  %1028 = vmatpush2.xpose.msra.mxu0 0.0
  %1029 = vmatprep.subr.mxu0 0.0
  %1030 = vmatpush2.xpose.msra.mxu0 0.0
  %1031 = vmatprep.subr.mxu0 0.0
  %1032 = vmatpush2.xpose.msra.mxu0 0.0
  %1033 = vmatprep.subr.mxu0 0.0
  %1034 = vmatpush2.xpose.msra.mxu0 0.0
  %1035 = vmatprep.mubr.f32.mxu0 0.0
  %1036 = vmatmul.mubr.f32.gmra.mxu0 %v966
  %v1037 = vpop.f32.mrf.mxu0
  %v1038 = vadd.f32 %v361, %v1037
  %v1039 = vpop.f32.mrf.mxu0
  %1040 = vdwg.mxu0
  %v1041 = vsel %vm517, %v962, -inf
  %1042 = vmax.xlane.f32.xlu0 %v1041
  %v1043 = vpop.xlane.xlu0 %1042
  %v1044 = vsel %vm517, %v1038, -inf
  %1045 = vmax.xlane.f32.xlu0 %v1044
  %v1046 = vpop.xlane.xlu0 %1045
  %v1047 = vsub.f32 %v962, %v1043
  %v1048 = vsub.f32 %v1038, %v1046
  %v1049 = vmul.f32 %v1047, 1.442695
  %v1050 = vpow.pop %v1049
  %v1051 = vmul.f32 %v1048, 1.442695
  %v1052 = vpow.pop %v1051
  %v1053 = vsel %vm517, %v1050, 0.0
  %1054 = vadd.xlane.f32.xlu0 %v1053
  %v1055 = vpop.xlane.xlu0 %1054
  %v1056 = vsel %vm517, %v1052, 0.0
  %1057 = vadd.xlane.f32.xlu0 %v1056
  %v1058 = vpop.xlane.xlu0 %1057
  %v1059 = vrcp.pop %v1055
  %v1060 = vrcp.pop %v1058
  %v1061 = vmul.f32 %v1050, %v1059
  %v1062 = vmul.f32 %v1052, %v1060
  %v1064 = vsel %vm517, %v1061, 0
  %1066 = vmatprep.subr.mxu0 0.0
  %1067 = vmatpush1.msra.mxu0 0.0
  %1068 = vmatprep.subr.mxu0 0.0
  %1069 = vmatpush1.msra.mxu0 0.0
  %1070 = vmatprep.subr.mxu0 0.0
  %1071 = vmatpush1.msra.mxu0 0.0
  %1072 = vmatprep.subr.mxu0 0.0
  %1073 = vmatpush1.msra.mxu0 0.0
  %1074 = vmatprep.subr.mxu0 0.0
  %1075 = vmatpush1.msra.mxu0 0.0
  %1076 = vmatprep.subr.mxu0 0.0
  %1077 = vmatpush1.msra.mxu0 0.0
  %1078 = vmatprep.subr.mxu0 0.0
  %1079 = vmatpush1.msra.mxu0 0.0
  %1080 = vmatprep.subr.mxu0 0.0
  %1081 = vmatpush1.msra.mxu0 0.0
  %1082 = vmatprep.subr.mxu0 0.0
  %1083 = vmatpush1.msra.mxu0 0.0
  %1084 = vmatprep.subr.mxu0 0.0
  %1085 = vmatpush1.msra.mxu0 0.0
  %1086 = vmatprep.subr.mxu0 0.0
  %1087 = vmatpush1.msra.mxu0 0.0
  %1088 = vmatprep.subr.mxu0 0.0
  %1089 = vmatpush1.msra.mxu0 0.0
  %1090 = vmatprep.subr.mxu0 0.0
  %1091 = vmatpush1.msra.mxu0 0.0
  %1092 = vmatprep.subr.mxu0 0.0
  %1093 = vmatpush1.msra.mxu0 0.0
  %1094 = vmatprep.subr.mxu0 0.0
  %1095 = vmatpush1.msra.mxu0 0.0
  %1096 = vmatprep.subr.mxu0 0.0
  %1097 = vmatpush1.msra.mxu0 %v881
  %1098 = vmatprep.subr.mxu0 0.0
  %1099 = vmatpush2.msra.mxu0 0.0
  %1100 = vmatprep.subr.mxu0 0.0
  %1101 = vmatpush2.msra.mxu0 0.0
  %1102 = vmatprep.subr.mxu0 0.0
  %1103 = vmatpush2.msra.mxu0 0.0
  %1104 = vmatprep.subr.mxu0 0.0
  %1105 = vmatpush2.msra.mxu0 0.0
  %1106 = vmatprep.subr.mxu0 0.0
  %1107 = vmatpush2.msra.mxu0 0.0
  %1108 = vmatprep.subr.mxu0 0.0
  %1109 = vmatpush2.msra.mxu0 0.0
  %1110 = vmatprep.subr.mxu0 0.0
  %1111 = vmatpush2.msra.mxu0 0.0
  %1112 = vmatprep.subr.mxu0 0.0
  %1113 = vmatpush2.msra.mxu0 0.0
  %1114 = vmatprep.subr.mxu0 0.0
  %1115 = vmatpush2.msra.mxu0 0.0
  %1116 = vmatprep.subr.mxu0 0.0
  %1117 = vmatpush2.msra.mxu0 0.0
  %1118 = vmatprep.subr.mxu0 0.0
  %1119 = vmatpush2.msra.mxu0 0.0
  %1120 = vmatprep.subr.mxu0 0.0
  %1121 = vmatpush2.msra.mxu0 0.0
  %1122 = vmatprep.subr.mxu0 0.0
  %1123 = vmatpush2.msra.mxu0 0.0
  %1124 = vmatprep.subr.mxu0 0.0
  %1125 = vmatpush2.msra.mxu0 0.0
  %1126 = vmatprep.subr.mxu0 0.0
  %1127 = vmatpush2.msra.mxu0 0.0
  %1128 = vmatprep.subr.mxu0 0.0
  %1129 = vmatpush2.msra.mxu0 0.0
  %1130 = vmatprep.mubr.f32.mxu0 0.0
  %1131 = vmatmul.mubr.f32.gmra.mxu0 %v1064
  %v1132 = vpop.f32.mrf.mxu0
  %v1133 = vadd.f32 0.0, %v1132
  %v1134 = vpop.f32.mrf.mxu0
  %1135 = vdwg.mxu0
  %v1137 = vsel %vm517, %v1062, 0
  %1139 = vmatprep.subr.mxu0 0.0
  %1140 = vmatpush1.msra.mxu0 0.0
  %1141 = vmatprep.subr.mxu0 0.0
  %1142 = vmatpush1.msra.mxu0 0.0
  %1143 = vmatprep.subr.mxu0 0.0
  %1144 = vmatpush1.msra.mxu0 0.0
  %1145 = vmatprep.subr.mxu0 0.0
  %1146 = vmatpush1.msra.mxu0 0.0
  %1147 = vmatprep.subr.mxu0 0.0
  %1148 = vmatpush1.msra.mxu0 0.0
  %1149 = vmatprep.subr.mxu0 0.0
  %1150 = vmatpush1.msra.mxu0 0.0
  %1151 = vmatprep.subr.mxu0 0.0
  %1152 = vmatpush1.msra.mxu0 0.0
  %1153 = vmatprep.subr.mxu0 0.0
  %1154 = vmatpush1.msra.mxu0 0.0
  %1155 = vmatprep.subr.mxu0 0.0
  %1156 = vmatpush1.msra.mxu0 0.0
  %1157 = vmatprep.subr.mxu0 0.0
  %1158 = vmatpush1.msra.mxu0 0.0
  %1159 = vmatprep.subr.mxu0 0.0
  %1160 = vmatpush1.msra.mxu0 0.0
  %1161 = vmatprep.subr.mxu0 0.0
  %1162 = vmatpush1.msra.mxu0 0.0
  %1163 = vmatprep.subr.mxu0 0.0
  %1164 = vmatpush1.msra.mxu0 0.0
  %1165 = vmatprep.subr.mxu0 0.0
  %1166 = vmatpush1.msra.mxu0 0.0
  %1167 = vmatprep.subr.mxu0 0.0
  %1168 = vmatpush1.msra.mxu0 0.0
  %1169 = vmatprep.subr.mxu0 0.0
  %1170 = vmatpush1.msra.mxu0 %v884
  %1171 = vmatprep.subr.mxu0 0.0
  %1172 = vmatpush2.msra.mxu0 0.0
  %1173 = vmatprep.subr.mxu0 0.0
  %1174 = vmatpush2.msra.mxu0 0.0
  %1175 = vmatprep.subr.mxu0 0.0
  %1176 = vmatpush2.msra.mxu0 0.0
  %1177 = vmatprep.subr.mxu0 0.0
  %1178 = vmatpush2.msra.mxu0 0.0
  %1179 = vmatprep.subr.mxu0 0.0
  %1180 = vmatpush2.msra.mxu0 0.0
  %1181 = vmatprep.subr.mxu0 0.0
  %1182 = vmatpush2.msra.mxu0 0.0
  %1183 = vmatprep.subr.mxu0 0.0
  %1184 = vmatpush2.msra.mxu0 0.0
  %1185 = vmatprep.subr.mxu0 0.0
  %1186 = vmatpush2.msra.mxu0 0.0
  %1187 = vmatprep.subr.mxu0 0.0
  %1188 = vmatpush2.msra.mxu0 0.0
  %1189 = vmatprep.subr.mxu0 0.0
  %1190 = vmatpush2.msra.mxu0 0.0
  %1191 = vmatprep.subr.mxu0 0.0
  %1192 = vmatpush2.msra.mxu0 0.0
  %1193 = vmatprep.subr.mxu0 0.0
  %1194 = vmatpush2.msra.mxu0 0.0
  %1195 = vmatprep.subr.mxu0 0.0
  %1196 = vmatpush2.msra.mxu0 0.0
  %1197 = vmatprep.subr.mxu0 0.0
  %1198 = vmatpush2.msra.mxu0 0.0
  %1199 = vmatprep.subr.mxu0 0.0
  %1200 = vmatpush2.msra.mxu0 0.0
  %1201 = vmatprep.subr.mxu0 0.0
  %1202 = vmatpush2.msra.mxu0 0.0
  %1203 = vmatprep.mubr.f32.mxu0 0.0
  %1204 = vmatmul.mubr.f32.gmra.mxu0 %v1137
  %v1205 = vpop.f32.mrf.mxu0
  %v1206 = vadd.f32 0.0, %v1205
  %v1207 = vpop.f32.mrf.mxu0
  %1208 = vdwg.mxu0
  %v1209 = vpack.c.bf16 %v1206, %v1133
  %s1210 = scalar_lea.vmem %s11, 8
  %v1211 = vld [vmem:[%s1210] sm:$0xf]
  %v1212 = vld [vmem:[%s1210 + $0x4] sm:$0xf]
  %v1215 = vunpack.c.l.b16 %v1211
  %v1216 = vunpack.c.l.b16 %v1212
  %v1217 = vpack.c.b16 %v1216, %v1215
  %v1220 = vsel %vm364, %v1209, 0
  %1222 = vmatprep.subr.bf16.mxu0 0
  %1223 = vmatpush1.bf16.msra.mxu0 0
  %1224 = vmatprep.subr.bf16.mxu0 0
  %1225 = vmatpush1.bf16.msra.mxu0 0
  %1226 = vmatprep.subr.bf16.mxu0 0
  %1227 = vmatpush1.bf16.msra.mxu0 0
  %1228 = vmatprep.subr.bf16.mxu0 0
  %1229 = vmatpush1.bf16.msra.mxu0 0
  %1230 = vmatprep.subr.bf16.mxu0 0
  %1231 = vmatpush1.bf16.msra.mxu0 0
  %1232 = vmatprep.subr.bf16.mxu0 0
  %1233 = vmatpush1.bf16.msra.mxu0 0
  %1234 = vmatprep.subr.bf16.mxu0 0
  %1235 = vmatpush1.bf16.msra.mxu0 0
  %1236 = vmatprep.subr.bf16.mxu0 0
  %1237 = vmatpush1.bf16.msra.mxu0 %v1217
  %1238 = vmatprep.subr.bf16.mxu0 0
  %1239 = vmatpush2.bf16.msra.mxu0 0
  %1240 = vmatprep.subr.bf16.mxu0 0
  %1241 = vmatpush2.bf16.msra.mxu0 0
  %1242 = vmatprep.subr.bf16.mxu0 0
  %1243 = vmatpush2.bf16.msra.mxu0 0
  %1244 = vmatprep.subr.bf16.mxu0 0
  %1245 = vmatpush2.bf16.msra.mxu0 0
  %1246 = vmatprep.subr.bf16.mxu0 0
  %1247 = vmatpush2.bf16.msra.mxu0 0
  %1248 = vmatprep.subr.bf16.mxu0 0
  %1249 = vmatpush2.bf16.msra.mxu0 0
  %1250 = vmatprep.subr.bf16.mxu0 0
  %1251 = vmatpush2.bf16.msra.mxu0 0
  %1252 = vmatprep.subr.bf16.mxu0 0
  %1253 = vmatpush2.bf16.msra.mxu0 0
  %1254 = vmatprep.mubr.bf16.mxu0 0
  %1255 = vmatmul.mubr.bf16.gmra.mxu0 %v1220
  %v1256 = vpop.f32.mrf.mxu0
  %v1257 = vadd.f32 0.0, %v1256
  %v1258 = vpop.f32.mrf.mxu0
  %v1259 = vpop.f32.mrf.mxu0
  %v1260 = vadd.f32 0.0, %v1259
  %v1261 = vpop.f32.mrf.mxu0
  %1262 = vdwg.mxu0
  %v1265 = vunpack.c.l.b16 %v687
  %v1266 = vunpack.c.l.b16 %v688
  %v1267 = vpack.c.b16 %v1266, %v1265
  %v1270 = vsel %vm364, %v686, 0
  %1272 = vmatprep.subr.bf16.mxu0 0
  %1273 = vmatpush1.bf16.msra.mxu0 0
  %1274 = vmatprep.subr.bf16.mxu0 0
  %1275 = vmatpush1.bf16.msra.mxu0 0
  %1276 = vmatprep.subr.bf16.mxu0 0
  %1277 = vmatpush1.bf16.msra.mxu0 0
  %1278 = vmatprep.subr.bf16.mxu0 0
  %1279 = vmatpush1.bf16.msra.mxu0 0
  %1280 = vmatprep.subr.bf16.mxu0 0
  %1281 = vmatpush1.bf16.msra.mxu0 0
  %1282 = vmatprep.subr.bf16.mxu0 0
  %1283 = vmatpush1.bf16.msra.mxu0 0
  %1284 = vmatprep.subr.bf16.mxu0 0
  %1285 = vmatpush1.bf16.msra.mxu0 0
  %1286 = vmatprep.subr.bf16.mxu0 0
  %1287 = vmatpush1.bf16.msra.mxu0 %v1267
  %1288 = vmatprep.subr.bf16.mxu0 0
  %1289 = vmatpush2.bf16.msra.mxu0 0
  %1290 = vmatprep.subr.bf16.mxu0 0
  %1291 = vmatpush2.bf16.msra.mxu0 0
  %1292 = vmatprep.subr.bf16.mxu0 0
  %1293 = vmatpush2.bf16.msra.mxu0 0
  %1294 = vmatprep.subr.bf16.mxu0 0
  %1295 = vmatpush2.bf16.msra.mxu0 0
  %1296 = vmatprep.subr.bf16.mxu0 0
  %1297 = vmatpush2.bf16.msra.mxu0 0
  %1298 = vmatprep.subr.bf16.mxu0 0
  %1299 = vmatpush2.bf16.msra.mxu0 0
  %1300 = vmatprep.subr.bf16.mxu0 0
  %1301 = vmatpush2.bf16.msra.mxu0 0
  %1302 = vmatprep.subr.bf16.mxu0 0
  %1303 = vmatpush2.bf16.msra.mxu0 0
  %1304 = vmatprep.mubr.bf16.mxu0 0
  %1305 = vmatmul.mubr.bf16.gmra.mxu0 %v1270
  %v1306 = vpop.f32.mrf.mxu0
  %v1307 = vadd.f32 %v1257, %v1306
  %v1308 = vpop.f32.mrf.mxu0
  %v1309 = vpop.f32.mrf.mxu0
  %v1310 = vadd.f32 %v1260, %v1309
  %v1311 = vpop.f32.mrf.mxu0
  %1312 = vdwg.mxu0
  %v1313 = vadd.f32 %v112, %v1307
  %v1314 = vadd.f32 %v113, %v1310
  %v1315 = vld [vmem:[%s12] sm:$0x1]
  %v1317 = vlaneseq
  %v1318 = vshrl.u32 %v1317, 7
  %v1319 = vsub.s32 0, %v1318
  %v1320 = vrot.slane %v1315, %v1319
  %v1322 = vadd.f32 %v1313, %v1320
  %v1323 = vadd.f32 %v1314, %v1320
  %v1324 = vld [vmem:[%s13] sm:$0x1]
  %v1325 = vld [vmem:[%s13 + $0x1] sm:$0x1]
  %v1326 = vsel %vm74, %v1322, 0.0
  %1327 = vadd.xlane.f32.xlu0 %v1326
  %v1328 = vpop.xlane.xlu0 %1327
  %v1329 = vsel %vm74, %v1323, 0.0
  %1330 = vadd.xlane.f32.xlu0 %v1329
  %v1331 = vpop.xlane.xlu0 %1330
  %v1332 = vmul.f32 %v1328, %v81
  %v1333 = vmul.f32 %v1331, %v81
  %v1334 = vsub.f32 %v1322, %v1332
  %v1335 = vsub.f32 %v1323, %v1333
  %v1336 = vmul.f32 %v1334, %v1334
  %v1337 = vmul.f32 %v1335, %v1335
  %v1338 = vsel %vm74, %v1336, 0.0
  %1339 = vadd.xlane.f32.xlu0 %v1338
  %v1340 = vpop.xlane.xlu0 %1339
  %v1341 = vsel %vm74, %v1337, 0.0
  %1342 = vadd.xlane.f32.xlu0 %v1341
  %v1343 = vpop.xlane.xlu0 %1342
  %v1344 = vmul.f32 %v1340, %v81
  %v1345 = vmul.f32 %v1343, %v81
  %v1346 = vadd.f32 %v1344, 1e-05
  %v1347 = vadd.f32 %v1345, 1e-05
  %v1348 = vrsqrt.pop %v1346
  %v1349 = vrsqrt.pop %v1347
  %v1350 = vmul.f32 %v1334, %v1348
  %v1351 = vmul.f32 %v1335, %v1349
  %v1352 = vlaneseq
  %v1353 = vshrl.u32 %v1352, 7
  %v1354 = vsub.s32 0, %v1353
  %v1355 = vrot.slane %v1324, %v1354
  %v1356 = vmul.f32 %v1350, %v1355
  %v1357 = vmul.f32 %v1351, %v1355
  %v1358 = vlaneseq
  %v1359 = vshrl.u32 %v1358, 7
  %v1360 = vsub.s32 0, %v1359
  %v1361 = vrot.slane %v1325, %v1360
  %v1362 = vadd.f32 %v1356, %v1361
  %v1363 = vadd.f32 %v1357, %v1361
  %v1364 = vpack.c.bf16 %v1363, %v1362
  %v1365 = vld [vmem:[%s14] sm:$0xf]
  %v1366 = vld [vmem:[%s14 + $0x4] sm:$0xf]
  %v1367 = vld [vmem:[%s14 + $0x8] sm:$0xf]
  %v1368 = vld [vmem:[%s14 + $0xc] sm:$0xf]
  %v1369 = vld [vmem:[%s15] sm:$0x1]
  %v1371 = vlaneseq
  %v1372 = vshrl.u32 %v1371, 7
  %v1373 = vsub.s32 0, %v1372
  %v1374 = vrot.slane %v1369, %v1373
  %v1380 = vunpack.c.l.b16 %v1365
  %v1381 = vunpack.c.l.b16 %v1366
  %v1382 = vunpack.c.l.b16 %v1367
  %v1383 = vunpack.c.l.b16 %v1368
  %v1384 = vpack.c.b16 %v1381, %v1380
  %v1385 = vpack.c.b16 %v1383, %v1382
  %v1389 = vsel %vm74, %v1364, 0
  %1391 = vmatprep.subr.bf16.mxu0 0
  %1392 = vmatpush1.bf16.msra.mxu0 0
  %1393 = vmatprep.subr.bf16.mxu0 0
  %1394 = vmatpush1.bf16.msra.mxu0 0
  %1395 = vmatprep.subr.bf16.mxu0 0
  %1396 = vmatpush1.bf16.msra.mxu0 0
  %1397 = vmatprep.subr.bf16.mxu0 0
  %1398 = vmatpush1.bf16.msra.mxu0 0
  %1399 = vmatprep.subr.bf16.mxu0 0
  %1400 = vmatpush1.bf16.msra.mxu0 0
  %1401 = vmatprep.subr.bf16.mxu0 0
  %1402 = vmatpush1.bf16.msra.mxu0 0
  %1403 = vmatprep.subr.bf16.mxu0 0
  %1404 = vmatpush1.bf16.msra.mxu0 %v1385
  %1405 = vmatprep.subr.bf16.mxu0 0
  %1406 = vmatpush1.bf16.msra.mxu0 %v1384
  %1407 = vmatprep.subr.bf16.mxu0 0
  %1408 = vmatpush2.bf16.msra.mxu0 0
  %1409 = vmatprep.subr.bf16.mxu0 0
  %1410 = vmatpush2.bf16.msra.mxu0 0
  %1411 = vmatprep.subr.bf16.mxu0 0
  %1412 = vmatpush2.bf16.msra.mxu0 0
  %1413 = vmatprep.subr.bf16.mxu0 0
  %1414 = vmatpush2.bf16.msra.mxu0 0
  %1415 = vmatprep.subr.bf16.mxu0 0
  %1416 = vmatpush2.bf16.msra.mxu0 0
  %1417 = vmatprep.subr.bf16.mxu0 0
  %1418 = vmatpush2.bf16.msra.mxu0 0
  %1419 = vmatprep.subr.bf16.mxu0 0
  %1420 = vmatpush2.bf16.msra.mxu0 0
  %1421 = vmatprep.subr.bf16.mxu0 0
  %1422 = vmatpush2.bf16.msra.mxu0 0
  %1423 = vmatprep.mubr.bf16.mxu0 0
  %1424 = vmatmul.mubr.bf16.gmra.mxu0 %v1389
  %v1425 = vpop.f32.mrf.mxu0
  %v1426 = vadd.f32 %v1374, %v1425
  %v1427 = vpop.f32.mrf.mxu0
  %v1428 = vpop.f32.mrf.mxu0
  %v1429 = vadd.f32 %v1374, %v1428
  %v1430 = vpop.f32.mrf.mxu0
  %1431 = vdwg.mxu0
  %v1432 = vmul.f32 %v1426, 0.5
  %v1433 = vmul.f32 %v1429, 0.5
  %v1434 = vmul.f32 %v1426, 0.044715
  %v1435 = vmul.f32 %v1429, 0.044715
  %v1436 = vmul.f32 %v1434, %v1426
  %v1437 = vmul.f32 %v1435, %v1429
  %v1438 = vmul.f32 %v1436, %v1426
  %v1439 = vmul.f32 %v1437, %v1429
  %v1440 = vadd.f32 %v1426, %v1438
  %v1441 = vadd.f32 %v1429, %v1439
  %v1442 = vmul.f32 %v1440, 0.7978846
  %v1443 = vmul.f32 %v1441, 0.7978846
  %v1444 = vtanh.pop %v1442
  %v1445 = vtanh.pop %v1443
  %v1446 = vadd.f32 %v1444, 1.0
  %v1447 = vadd.f32 %v1445, 1.0
  %v1448 = vmul.f32 %v1432, %v1446
  %v1449 = vmul.f32 %v1433, %v1447
  %v1450 = vpack.c.bf16 %v1449, %v1448
  %v1451 = vld [vmem:[%s16] sm:$0xf]
  %v1452 = vld [vmem:[%s16 + $0x4] sm:$0xf]
  %v1453 = vld [vmem:[%s16 + $0x8] sm:$0xf]
  %v1454 = vld [vmem:[%s16 + $0xc] sm:$0xf]
  %v1455 = vld [vmem:[%s16 + $0x10] sm:$0xf]
  %v1456 = vld [vmem:[%s16 + $0x14] sm:$0xf]
  %v1457 = vld [vmem:[%s16 + $0x18] sm:$0xf]
  %v1458 = vld [vmem:[%s16 + $0x1c] sm:$0xf]
  %v1467 = vunpack.c.l.b16 %v1451
  %v1468 = vunpack.c.l.b16 %v1452
  %v1469 = vunpack.c.l.b16 %v1453
  %v1470 = vunpack.c.l.b16 %v1454
  %v1471 = vunpack.c.l.b16 %v1455
  %v1472 = vunpack.c.l.b16 %v1456
  %v1473 = vunpack.c.l.b16 %v1457
  %v1474 = vunpack.c.l.b16 %v1458
  %v1475 = vpack.c.b16 %v1468, %v1467
  %v1476 = vpack.c.b16 %v1470, %v1469
  %v1477 = vpack.c.b16 %v1472, %v1471
  %v1478 = vpack.c.b16 %v1474, %v1473
  %vm1483 = vcmask 523264
  %v1485 = vsel %vm1483, %v1450, 0
  %1487 = vmatprep.subr.bf16.mxu0 0
  %1488 = vmatpush1.bf16.msra.mxu0 0
  %1489 = vmatprep.subr.bf16.mxu0 0
  %1490 = vmatpush1.bf16.msra.mxu0 0
  %1491 = vmatprep.subr.bf16.mxu0 0
  %1492 = vmatpush1.bf16.msra.mxu0 0
  %1493 = vmatprep.subr.bf16.mxu0 0
  %1494 = vmatpush1.bf16.msra.mxu0 0
  %1495 = vmatprep.subr.bf16.mxu0 0
  %1496 = vmatpush1.bf16.msra.mxu0 %v1478
  %1497 = vmatprep.subr.bf16.mxu0 0
  %1498 = vmatpush1.bf16.msra.mxu0 %v1477
  %1499 = vmatprep.subr.bf16.mxu0 0
  %1500 = vmatpush1.bf16.msra.mxu0 %v1476
  %1501 = vmatprep.subr.bf16.mxu0 0
  %1502 = vmatpush1.bf16.msra.mxu0 %v1475
  %1503 = vmatprep.subr.bf16.mxu0 0
  %1504 = vmatpush2.bf16.msra.mxu0 0
  %1505 = vmatprep.subr.bf16.mxu0 0
  %1506 = vmatpush2.bf16.msra.mxu0 0
  %1507 = vmatprep.subr.bf16.mxu0 0
  %1508 = vmatpush2.bf16.msra.mxu0 0
  %1509 = vmatprep.subr.bf16.mxu0 0
  %1510 = vmatpush2.bf16.msra.mxu0 0
  %1511 = vmatprep.subr.bf16.mxu0 0
  %1512 = vmatpush2.bf16.msra.mxu0 0
  %1513 = vmatprep.subr.bf16.mxu0 0
  %1514 = vmatpush2.bf16.msra.mxu0 0
  %1515 = vmatprep.subr.bf16.mxu0 0
  %1516 = vmatpush2.bf16.msra.mxu0 0
  %1517 = vmatprep.subr.bf16.mxu0 0
  %1518 = vmatpush2.bf16.msra.mxu0 0
  %1519 = vmatprep.mubr.bf16.mxu0 0
  %1520 = vmatmul.mubr.bf16.gmra.mxu0 %v1485
  %v1521 = vpop.f32.mrf.mxu0
  %v1522 = vadd.f32 0.0, %v1521
  %v1523 = vpop.f32.mrf.mxu0
  %v1524 = vpop.f32.mrf.mxu0
  %v1525 = vadd.f32 0.0, %v1524
  %v1526 = vpop.f32.mrf.mxu0
  %1527 = vdwg.mxu0
  %v1528 = vadd.f32 %v1322, %v1522
  %v1529 = vadd.f32 %v1323, %v1525
  %v1530 = vld [vmem:[%s17] sm:$0x1]
  %v1532 = vlaneseq
  %v1533 = vshrl.u32 %v1532, 7
  %v1534 = vsub.s32 0, %v1533
  %v1535 = vrot.slane %v1530, %v1534
  %v1537 = vadd.f32 %v1528, %v1535
  %v1538 = vadd.f32 %v1529, %v1535
  %s1539 = scalar_lea.vmem %s4, 2
  %v1540 = vld [vmem:[%s1539] sm:$0x1]
  %v1541 = vld [vmem:[%s1539 + $0x1] sm:$0x1]
  %v1542 = vsel %vm74, %v1537, 0.0
  %1543 = vadd.xlane.f32.xlu0 %v1542
  %v1544 = vpop.xlane.xlu0 %1543
  %v1545 = vsel %vm74, %v1538, 0.0
  %1546 = vadd.xlane.f32.xlu0 %v1545
  %v1547 = vpop.xlane.xlu0 %1546
  %v1548 = vmul.f32 %v1544, %v81
  %v1549 = vmul.f32 %v1547, %v81
  %v1550 = vsub.f32 %v1537, %v1548
  %v1551 = vsub.f32 %v1538, %v1549
  %v1552 = vmul.f32 %v1550, %v1550
  %v1553 = vmul.f32 %v1551, %v1551
  %v1554 = vsel %vm74, %v1552, 0.0
  %1555 = vadd.xlane.f32.xlu0 %v1554
  %v1556 = vpop.xlane.xlu0 %1555
  %v1557 = vsel %vm74, %v1553, 0.0
  %1558 = vadd.xlane.f32.xlu0 %v1557
  %v1559 = vpop.xlane.xlu0 %1558
  %v1560 = vmul.f32 %v1556, %v81
  %v1561 = vmul.f32 %v1559, %v81
  %v1562 = vadd.f32 %v1560, 1e-05
  %v1563 = vadd.f32 %v1561, 1e-05
  %v1564 = vrsqrt.pop %v1562
  %v1565 = vrsqrt.pop %v1563
  %v1566 = vmul.f32 %v1550, %v1564
  %v1567 = vmul.f32 %v1551, %v1565
  %v1568 = vlaneseq
  %v1569 = vshrl.u32 %v1568, 7
  %v1570 = vsub.s32 0, %v1569
  %v1571 = vrot.slane %v1540, %v1570
  %v1572 = vmul.f32 %v1566, %v1571
  %v1573 = vmul.f32 %v1567, %v1571
  %v1574 = vlaneseq
  %v1575 = vshrl.u32 %v1574, 7
  %v1576 = vsub.s32 0, %v1575
  %v1577 = vrot.slane %v1541, %v1576
  %v1578 = vadd.f32 %v1572, %v1577
  %v1579 = vadd.f32 %v1573, %v1577
  %v1580 = vpack.c.bf16 %v1579, %v1578
  %s1581 = scalar_lea.vmem %s5, 32
  %v1582 = vld [vmem:[%s1581] sm:$0xf]
  %v1583 = vld [vmem:[%s1581 + $0x4] sm:$0xf]
  %v1584 = vld [vmem:[%s1581 + $0x8] sm:$0xf]
  %v1585 = vld [vmem:[%s1581 + $0xc] sm:$0xf]
  %s1586 = scalar_lea.vmem %s8, 2
  %v1587 = vld [vmem:[%s1586] sm:$0x1]
  %v1589 = vlaneseq
  %v1590 = vshrl.u32 %v1589, 7
  %v1591 = vsub.s32 0, %v1590
  %v1592 = vrot.slane %v1587, %v1591
  %v1598 = vunpack.c.l.b16 %v1582
  %v1599 = vunpack.c.l.b16 %v1583
  %v1600 = vunpack.c.l.b16 %v1584
  %v1601 = vunpack.c.l.b16 %v1585
  %v1602 = vpack.c.b16 %v1599, %v1598
  %v1603 = vpack.c.b16 %v1601, %v1600
  %v1607 = vsel %vm74, %v1580, 0
  %1609 = vmatprep.subr.bf16.mxu0 0
  %1610 = vmatpush1.bf16.msra.mxu0 0
  %1611 = vmatprep.subr.bf16.mxu0 0
  %1612 = vmatpush1.bf16.msra.mxu0 0
  %1613 = vmatprep.subr.bf16.mxu0 0
  %1614 = vmatpush1.bf16.msra.mxu0 0
  %1615 = vmatprep.subr.bf16.mxu0 0
  %1616 = vmatpush1.bf16.msra.mxu0 0
  %1617 = vmatprep.subr.bf16.mxu0 0
  %1618 = vmatpush1.bf16.msra.mxu0 0
  %1619 = vmatprep.subr.bf16.mxu0 0
  %1620 = vmatpush1.bf16.msra.mxu0 0
  %1621 = vmatprep.subr.bf16.mxu0 0
  %1622 = vmatpush1.bf16.msra.mxu0 %v1603
  %1623 = vmatprep.subr.bf16.mxu0 0
  %1624 = vmatpush1.bf16.msra.mxu0 %v1602
  %1625 = vmatprep.subr.bf16.mxu0 0
  %1626 = vmatpush2.bf16.msra.mxu0 0
  %1627 = vmatprep.subr.bf16.mxu0 0
  %1628 = vmatpush2.bf16.msra.mxu0 0
  %1629 = vmatprep.subr.bf16.mxu0 0
  %1630 = vmatpush2.bf16.msra.mxu0 0
  %1631 = vmatprep.subr.bf16.mxu0 0
  %1632 = vmatpush2.bf16.msra.mxu0 0
  %1633 = vmatprep.subr.bf16.mxu0 0
  %1634 = vmatpush2.bf16.msra.mxu0 0
  %1635 = vmatprep.subr.bf16.mxu0 0
  %1636 = vmatpush2.bf16.msra.mxu0 0
  %1637 = vmatprep.subr.bf16.mxu0 0
  %1638 = vmatpush2.bf16.msra.mxu0 0
  %1639 = vmatprep.subr.bf16.mxu0 0
  %1640 = vmatpush2.bf16.msra.mxu0 0
  %1641 = vmatprep.mubr.bf16.mxu0 0
  %1642 = vmatmul.mubr.bf16.gmra.mxu0 %v1607
  %v1643 = vpop.f32.mrf.mxu0
  %v1644 = vadd.f32 %v1592, %v1643
  %v1645 = vpop.f32.mrf.mxu0
  %v1646 = vpop.f32.mrf.mxu0
  %v1647 = vadd.f32 %v1592, %v1646
  %v1648 = vpop.f32.mrf.mxu0
  %1649 = vdwg.mxu0
  %s1650 = scalar_lea.vmem %s6, 32
  %v1651 = vld [vmem:[%s1650] sm:$0xf]
  %v1652 = vld [vmem:[%s1650 + $0x4] sm:$0xf]
  %v1653 = vld [vmem:[%s1650 + $0x8] sm:$0xf]
  %v1654 = vld [vmem:[%s1650 + $0xc] sm:$0xf]
  %s1655 = scalar_lea.vmem %s9, 2
  %v1656 = vld [vmem:[%s1655] sm:$0x1]
  %v1658 = vlaneseq
  %v1659 = vshrl.u32 %v1658, 7
  %v1660 = vsub.s32 0, %v1659
  %v1661 = vrot.slane %v1656, %v1660
  %v1667 = vunpack.c.l.b16 %v1651
  %v1668 = vunpack.c.l.b16 %v1652
  %v1669 = vunpack.c.l.b16 %v1653
  %v1670 = vunpack.c.l.b16 %v1654
  %v1671 = vpack.c.b16 %v1668, %v1667
  %v1672 = vpack.c.b16 %v1670, %v1669
  %1675 = vmatprep.subr.bf16.mxu0 0
  %1676 = vmatpush1.bf16.msra.mxu0 0
  %1677 = vmatprep.subr.bf16.mxu0 0
  %1678 = vmatpush1.bf16.msra.mxu0 0
  %1679 = vmatprep.subr.bf16.mxu0 0
  %1680 = vmatpush1.bf16.msra.mxu0 0
  %1681 = vmatprep.subr.bf16.mxu0 0
  %1682 = vmatpush1.bf16.msra.mxu0 0
  %1683 = vmatprep.subr.bf16.mxu0 0
  %1684 = vmatpush1.bf16.msra.mxu0 0
  %1685 = vmatprep.subr.bf16.mxu0 0
  %1686 = vmatpush1.bf16.msra.mxu0 0
  %1687 = vmatprep.subr.bf16.mxu0 0
  %1688 = vmatpush1.bf16.msra.mxu0 %v1672
  %1689 = vmatprep.subr.bf16.mxu0 0
  %1690 = vmatpush1.bf16.msra.mxu0 %v1671
  %1691 = vmatprep.subr.bf16.mxu0 0
  %1692 = vmatpush2.bf16.msra.mxu0 0
  %1693 = vmatprep.subr.bf16.mxu0 0
  %1694 = vmatpush2.bf16.msra.mxu0 0
  %1695 = vmatprep.subr.bf16.mxu0 0
  %1696 = vmatpush2.bf16.msra.mxu0 0
  %1697 = vmatprep.subr.bf16.mxu0 0
  %1698 = vmatpush2.bf16.msra.mxu0 0
  %1699 = vmatprep.subr.bf16.mxu0 0
  %1700 = vmatpush2.bf16.msra.mxu0 0
  %1701 = vmatprep.subr.bf16.mxu0 0
  %1702 = vmatpush2.bf16.msra.mxu0 0
  %1703 = vmatprep.subr.bf16.mxu0 0
  %1704 = vmatpush2.bf16.msra.mxu0 0
  %1705 = vmatprep.subr.bf16.mxu0 0
  %1706 = vmatpush2.bf16.msra.mxu0 0
  %1707 = vmatprep.mubr.bf16.mxu0 0
  %1708 = vmatmul.mubr.bf16.gmra.mxu0 %v1607
  %v1709 = vpop.f32.mrf.mxu0
  %v1710 = vadd.f32 %v1661, %v1709
  %v1711 = vpop.f32.mrf.mxu0
  %v1712 = vpop.f32.mrf.mxu0
  %v1713 = vadd.f32 %v1661, %v1712
  %v1714 = vpop.f32.mrf.mxu0
  %1715 = vdwg.mxu0
  %s1716 = scalar_lea.vmem %s7, 32
  %v1717 = vld [vmem:[%s1716] sm:$0xf]
  %v1718 = vld [vmem:[%s1716 + $0x4] sm:$0xf]
  %v1719 = vld [vmem:[%s1716 + $0x8] sm:$0xf]
  %v1720 = vld [vmem:[%s1716 + $0xc] sm:$0xf]
  %s1721 = scalar_lea.vmem %s10, 2
  %v1722 = vld [vmem:[%s1721] sm:$0x1]
  %v1724 = vlaneseq
  %v1725 = vshrl.u32 %v1724, 7
  %v1726 = vsub.s32 0, %v1725
  %v1727 = vrot.slane %v1722, %v1726
  %v1733 = vunpack.c.l.b16 %v1717
  %v1734 = vunpack.c.l.b16 %v1718
  %v1735 = vunpack.c.l.b16 %v1719
  %v1736 = vunpack.c.l.b16 %v1720
  %v1737 = vpack.c.b16 %v1734, %v1733
  %v1738 = vpack.c.b16 %v1736, %v1735
  %1741 = vmatprep.subr.bf16.mxu0 0
  %1742 = vmatpush1.bf16.msra.mxu0 0
  %1743 = vmatprep.subr.bf16.mxu0 0
  %1744 = vmatpush1.bf16.msra.mxu0 0
  %1745 = vmatprep.subr.bf16.mxu0 0
  %1746 = vmatpush1.bf16.msra.mxu0 0
  %1747 = vmatprep.subr.bf16.mxu0 0
  %1748 = vmatpush1.bf16.msra.mxu0 0
  %1749 = vmatprep.subr.bf16.mxu0 0
  %1750 = vmatpush1.bf16.msra.mxu0 0
  %1751 = vmatprep.subr.bf16.mxu0 0
  %1752 = vmatpush1.bf16.msra.mxu0 0
  %1753 = vmatprep.subr.bf16.mxu0 0
  %1754 = vmatpush1.bf16.msra.mxu0 %v1738
  %1755 = vmatprep.subr.bf16.mxu0 0
  %1756 = vmatpush1.bf16.msra.mxu0 %v1737
  %1757 = vmatprep.subr.bf16.mxu0 0
  %1758 = vmatpush2.bf16.msra.mxu0 0
  %1759 = vmatprep.subr.bf16.mxu0 0
  %1760 = vmatpush2.bf16.msra.mxu0 0
  %1761 = vmatprep.subr.bf16.mxu0 0
  %1762 = vmatpush2.bf16.msra.mxu0 0
  %1763 = vmatprep.subr.bf16.mxu0 0
  %1764 = vmatpush2.bf16.msra.mxu0 0
  %1765 = vmatprep.subr.bf16.mxu0 0
  %1766 = vmatpush2.bf16.msra.mxu0 0
  %1767 = vmatprep.subr.bf16.mxu0 0
  %1768 = vmatpush2.bf16.msra.mxu0 0
  %1769 = vmatprep.subr.bf16.mxu0 0
  %1770 = vmatpush2.bf16.msra.mxu0 0
  %1771 = vmatprep.subr.bf16.mxu0 0
  %1772 = vmatpush2.bf16.msra.mxu0 0
  %1773 = vmatprep.mubr.bf16.mxu0 0
  %1774 = vmatmul.mubr.bf16.gmra.mxu0 %v1607
  %v1775 = vpop.f32.mrf.mxu0
  %v1776 = vadd.f32 %v1727, %v1775
  %v1777 = vpop.f32.mrf.mxu0
  %v1778 = vpop.f32.mrf.mxu0
  %v1779 = vadd.f32 %v1727, %v1778
  %v1780 = vpop.f32.mrf.mxu0
  %1781 = vdwg.mxu0
  %v1782 = vmul.f32 %v1644, 0.25
  %v1783 = vmul.f32 %v1647, 0.25
  %v1785 = vsel %vm364, %v1782, 0
  %v1788 = vsel %vm364, %v1710, 0
  %1790 = vmatprep.subr.mxu0 0.0
  %1791 = vmatpush1.xpose.msra.mxu0 0.0
  %1792 = vmatprep.subr.mxu0 0.0
  %1793 = vmatpush1.xpose.msra.mxu0 0.0
  %1794 = vmatprep.subr.mxu0 0.0
  %1795 = vmatpush1.xpose.msra.mxu0 0.0
  %1796 = vmatprep.subr.mxu0 0.0
  %1797 = vmatpush1.xpose.msra.mxu0 0.0
  %1798 = vmatprep.subr.mxu0 0.0
  %1799 = vmatpush1.xpose.msra.mxu0 0.0
  %1800 = vmatprep.subr.mxu0 0.0
  %1801 = vmatpush1.xpose.msra.mxu0 0.0
  %1802 = vmatprep.subr.mxu0 0.0
  %1803 = vmatpush1.xpose.msra.mxu0 0.0
  %1804 = vmatprep.subr.mxu0 0.0
  %1805 = vmatpush1.xpose.msra.mxu0 0.0
  %1806 = vmatprep.subr.mxu0 0.0
  %1807 = vmatpush1.xpose.msra.mxu0 0.0
  %1808 = vmatprep.subr.mxu0 0.0
  %1809 = vmatpush1.xpose.msra.mxu0 0.0
  %1810 = vmatprep.subr.mxu0 0.0
  %1811 = vmatpush1.xpose.msra.mxu0 0.0
  %1812 = vmatprep.subr.mxu0 0.0
  %1813 = vmatpush1.xpose.msra.mxu0 0.0
  %1814 = vmatprep.subr.mxu0 0.0
  %1815 = vmatpush1.xpose.msra.mxu0 0.0
  %1816 = vmatprep.subr.mxu0 0.0
  %1817 = vmatpush1.xpose.msra.mxu0 0.0
  %1818 = vmatprep.subr.mxu0 0.0
  %1819 = vmatpush1.xpose.msra.mxu0 0.0
  %1820 = vmatprep.subr.mxu0 0.0
  %1821 = vmatpush1.xpose.msra.mxu0 %v1788
  %1822 = vmatprep.subr.mxu0 0.0
  %1823 = vmatpush2.xpose.msra.mxu0 0.0
  %1824 = vmatprep.subr.mxu0 0.0
  %1825 = vmatpush2.xpose.msra.mxu0 0.0
  %1826 = vmatprep.subr.mxu0 0.0
  %1827 = vmatpush2.xpose.msra.mxu0 0.0
  %1828 = vmatprep.subr.mxu0 0.0
  %1829 = vmatpush2.xpose.msra.mxu0 0.0
  %1830 = vmatprep.subr.mxu0 0.0
  %1831 = vmatpush2.xpose.msra.mxu0 0.0
  %1832 = vmatprep.subr.mxu0 0.0
  %1833 = vmatpush2.xpose.msra.mxu0 0.0
  %1834 = vmatprep.subr.mxu0 0.0
  %1835 = vmatpush2.xpose.msra.mxu0 0.0
  %1836 = vmatprep.subr.mxu0 0.0
  %1837 = vmatpush2.xpose.msra.mxu0 0.0
  %1838 = vmatprep.subr.mxu0 0.0
  %1839 = vmatpush2.xpose.msra.mxu0 0.0
  %1840 = vmatprep.subr.mxu0 0.0
  %1841 = vmatpush2.xpose.msra.mxu0 0.0
  %1842 = vmatprep.subr.mxu0 0.0
  %1843 = vmatpush2.xpose.msra.mxu0 0.0
  %1844 = vmatprep.subr.mxu0 0.0
  %1845 = vmatpush2.xpose.msra.mxu0 0.0
  %1846 = vmatprep.subr.mxu0 0.0
  %1847 = vmatpush2.xpose.msra.mxu0 0.0
  %1848 = vmatprep.subr.mxu0 0.0
  %1849 = vmatpush2.xpose.msra.mxu0 0.0
  %1850 = vmatprep.subr.mxu0 0.0
  %1851 = vmatpush2.xpose.msra.mxu0 0.0
  %1852 = vmatprep.subr.mxu0 0.0
  %1853 = vmatpush2.xpose.msra.mxu0 0.0
  %1854 = vmatprep.mubr.f32.mxu0 0.0
  %1855 = vmatmul.mubr.f32.gmra.mxu0 %v1785
  %v1856 = vpop.f32.mrf.mxu0
  %v1857 = vadd.f32 %v357, %v1856
  %v1858 = vpop.f32.mrf.mxu0
  %1859 = vdwg.mxu0
  %v1861 = vsel %vm364, %v1783, 0
  %v1864 = vsel %vm364, %v1713, 0
  %1866 = vmatprep.subr.mxu0 0.0
  %1867 = vmatpush1.xpose.msra.mxu0 0.0
  %1868 = vmatprep.subr.mxu0 0.0
  %1869 = vmatpush1.xpose.msra.mxu0 0.0
  %1870 = vmatprep.subr.mxu0 0.0
  %1871 = vmatpush1.xpose.msra.mxu0 0.0
  %1872 = vmatprep.subr.mxu0 0.0
  %1873 = vmatpush1.xpose.msra.mxu0 0.0
  %1874 = vmatprep.subr.mxu0 0.0
  %1875 = vmatpush1.xpose.msra.mxu0 0.0
  %1876 = vmatprep.subr.mxu0 0.0
  %1877 = vmatpush1.xpose.msra.mxu0 0.0
  %1878 = vmatprep.subr.mxu0 0.0
  %1879 = vmatpush1.xpose.msra.mxu0 0.0
  %1880 = vmatprep.subr.mxu0 0.0
  %1881 = vmatpush1.xpose.msra.mxu0 0.0
  %1882 = vmatprep.subr.mxu0 0.0
  %1883 = vmatpush1.xpose.msra.mxu0 0.0
  %1884 = vmatprep.subr.mxu0 0.0
  %1885 = vmatpush1.xpose.msra.mxu0 0.0
  %1886 = vmatprep.subr.mxu0 0.0
  %1887 = vmatpush1.xpose.msra.mxu0 0.0
  %1888 = vmatprep.subr.mxu0 0.0
  %1889 = vmatpush1.xpose.msra.mxu0 0.0
  %1890 = vmatprep.subr.mxu0 0.0
  %1891 = vmatpush1.xpose.msra.mxu0 0.0
  %1892 = vmatprep.subr.mxu0 0.0
  %1893 = vmatpush1.xpose.msra.mxu0 0.0
  %1894 = vmatprep.subr.mxu0 0.0
  %1895 = vmatpush1.xpose.msra.mxu0 0.0
  %1896 = vmatprep.subr.mxu0 0.0
  %1897 = vmatpush1.xpose.msra.mxu0 %v1864
  %1898 = vmatprep.subr.mxu0 0.0
  %1899 = vmatpush2.xpose.msra.mxu0 0.0
  %1900 = vmatprep.subr.mxu0 0.0
  %1901 = vmatpush2.xpose.msra.mxu0 0.0
  %1902 = vmatprep.subr.mxu0 0.0
  %1903 = vmatpush2.xpose.msra.mxu0 0.0
  %1904 = vmatprep.subr.mxu0 0.0
  %1905 = vmatpush2.xpose.msra.mxu0 0.0
  %1906 = vmatprep.subr.mxu0 0.0
  %1907 = vmatpush2.xpose.msra.mxu0 0.0
  %1908 = vmatprep.subr.mxu0 0.0
  %1909 = vmatpush2.xpose.msra.mxu0 0.0
  %1910 = vmatprep.subr.mxu0 0.0
  %1911 = vmatpush2.xpose.msra.mxu0 0.0
  %1912 = vmatprep.subr.mxu0 0.0
  %1913 = vmatpush2.xpose.msra.mxu0 0.0
  %1914 = vmatprep.subr.mxu0 0.0
  %1915 = vmatpush2.xpose.msra.mxu0 0.0
  %1916 = vmatprep.subr.mxu0 0.0
  %1917 = vmatpush2.xpose.msra.mxu0 0.0
  %1918 = vmatprep.subr.mxu0 0.0
  %1919 = vmatpush2.xpose.msra.mxu0 0.0
  %1920 = vmatprep.subr.mxu0 0.0
  %1921 = vmatpush2.xpose.msra.mxu0 0.0
  %1922 = vmatprep.subr.mxu0 0.0
  %1923 = vmatpush2.xpose.msra.mxu0 0.0
  %1924 = vmatprep.subr.mxu0 0.0
  %1925 = vmatpush2.xpose.msra.mxu0 0.0
  %1926 = vmatprep.subr.mxu0 0.0
  %1927 = vmatpush2.xpose.msra.mxu0 0.0
  %1928 = vmatprep.subr.mxu0 0.0
  %1929 = vmatpush2.xpose.msra.mxu0 0.0
  %1930 = vmatprep.mubr.f32.mxu0 0.0
  %1931 = vmatmul.mubr.f32.gmra.mxu0 %v1861
  %v1932 = vpop.f32.mrf.mxu0
  %v1933 = vadd.f32 %v361, %v1932
  %v1934 = vpop.f32.mrf.mxu0
  %1935 = vdwg.mxu0
  %v1936 = vsel %vm517, %v1857, -inf
  %1937 = vmax.xlane.f32.xlu0 %v1936
  %v1938 = vpop.xlane.xlu0 %1937
  %v1939 = vsel %vm517, %v1933, -inf
  %1940 = vmax.xlane.f32.xlu0 %v1939
  %v1941 = vpop.xlane.xlu0 %1940
  %v1942 = vsub.f32 %v1857, %v1938
  %v1943 = vsub.f32 %v1933, %v1941
  %v1944 = vmul.f32 %v1942, 1.442695
  %v1945 = vpow.pop %v1944
  %v1946 = vmul.f32 %v1943, 1.442695
  %v1947 = vpow.pop %v1946
  %v1948 = vsel %vm517, %v1945, 0.0
  %1949 = vadd.xlane.f32.xlu0 %v1948
  %v1950 = vpop.xlane.xlu0 %1949
  %v1951 = vsel %vm517, %v1947, 0.0
  %1952 = vadd.xlane.f32.xlu0 %v1951
  %v1953 = vpop.xlane.xlu0 %1952
  %v1954 = vrcp.pop %v1950
  %v1955 = vrcp.pop %v1953
  %v1956 = vmul.f32 %v1945, %v1954
  %v1957 = vmul.f32 %v1947, %v1955
  %v1959 = vsel %vm517, %v1956, 0
  %1961 = vmatprep.subr.mxu0 0.0
  %1962 = vmatpush1.msra.mxu0 0.0
  %1963 = vmatprep.subr.mxu0 0.0
  %1964 = vmatpush1.msra.mxu0 0.0
  %1965 = vmatprep.subr.mxu0 0.0
  %1966 = vmatpush1.msra.mxu0 0.0
  %1967 = vmatprep.subr.mxu0 0.0
  %1968 = vmatpush1.msra.mxu0 0.0
  %1969 = vmatprep.subr.mxu0 0.0
  %1970 = vmatpush1.msra.mxu0 0.0
  %1971 = vmatprep.subr.mxu0 0.0
  %1972 = vmatpush1.msra.mxu0 0.0
  %1973 = vmatprep.subr.mxu0 0.0
  %1974 = vmatpush1.msra.mxu0 0.0
  %1975 = vmatprep.subr.mxu0 0.0
  %1976 = vmatpush1.msra.mxu0 0.0
  %1977 = vmatprep.subr.mxu0 0.0
  %1978 = vmatpush1.msra.mxu0 0.0
  %1979 = vmatprep.subr.mxu0 0.0
  %1980 = vmatpush1.msra.mxu0 0.0
  %1981 = vmatprep.subr.mxu0 0.0
  %1982 = vmatpush1.msra.mxu0 0.0
  %1983 = vmatprep.subr.mxu0 0.0
  %1984 = vmatpush1.msra.mxu0 0.0
  %1985 = vmatprep.subr.mxu0 0.0
  %1986 = vmatpush1.msra.mxu0 0.0
  %1987 = vmatprep.subr.mxu0 0.0
  %1988 = vmatpush1.msra.mxu0 0.0
  %1989 = vmatprep.subr.mxu0 0.0
  %1990 = vmatpush1.msra.mxu0 0.0
  %1991 = vmatprep.subr.mxu0 0.0
  %1992 = vmatpush1.msra.mxu0 %v1776
  %1993 = vmatprep.subr.mxu0 0.0
  %1994 = vmatpush2.msra.mxu0 0.0
  %1995 = vmatprep.subr.mxu0 0.0
  %1996 = vmatpush2.msra.mxu0 0.0
  %1997 = vmatprep.subr.mxu0 0.0
  %1998 = vmatpush2.msra.mxu0 0.0
  %1999 = vmatprep.subr.mxu0 0.0
  %2000 = vmatpush2.msra.mxu0 0.0
  %2001 = vmatprep.subr.mxu0 0.0
  %2002 = vmatpush2.msra.mxu0 0.0
  %2003 = vmatprep.subr.mxu0 0.0
  %2004 = vmatpush2.msra.mxu0 0.0
  %2005 = vmatprep.subr.mxu0 0.0
  %2006 = vmatpush2.msra.mxu0 0.0
  %2007 = vmatprep.subr.mxu0 0.0
  %2008 = vmatpush2.msra.mxu0 0.0
  %2009 = vmatprep.subr.mxu0 0.0
  %2010 = vmatpush2.msra.mxu0 0.0
  %2011 = vmatprep.subr.mxu0 0.0
  %2012 = vmatpush2.msra.mxu0 0.0
  %2013 = vmatprep.subr.mxu0 0.0
  %2014 = vmatpush2.msra.mxu0 0.0
  %2015 = vmatprep.subr.mxu0 0.0
  %2016 = vmatpush2.msra.mxu0 0.0
  %2017 = vmatprep.subr.mxu0 0.0
  %2018 = vmatpush2.msra.mxu0 0.0
  %2019 = vmatprep.subr.mxu0 0.0
  %2020 = vmatpush2.msra.mxu0 0.0
  %2021 = vmatprep.subr.mxu0 0.0
  %2022 = vmatpush2.msra.mxu0 0.0
  %2023 = vmatprep.subr.mxu0 0.0
  %2024 = vmatpush2.msra.mxu0 0.0
  %2025 = vmatprep.mubr.f32.mxu0 0.0
  %2026 = vmatmul.mubr.f32.gmra.mxu0 %v1959
  %v2027 = vpop.f32.mrf.mxu0
  %v2028 = vadd.f32 0.0, %v2027
  %v2029 = vpop.f32.mrf.mxu0
  %2030 = vdwg.mxu0
  %v2032 = vsel %vm517, %v1957, 0
  %2034 = vmatprep.subr.mxu0 0.0
  %2035 = vmatpush1.msra.mxu0 0.0
  %2036 = vmatprep.subr.mxu0 0.0
  %2037 = vmatpush1.msra.mxu0 0.0
  %2038 = vmatprep.subr.mxu0 0.0
  %2039 = vmatpush1.msra.mxu0 0.0
  %2040 = vmatprep.subr.mxu0 0.0
  %2041 = vmatpush1.msra.mxu0 0.0
  %2042 = vmatprep.subr.mxu0 0.0
  %2043 = vmatpush1.msra.mxu0 0.0
  %2044 = vmatprep.subr.mxu0 0.0
  %2045 = vmatpush1.msra.mxu0 0.0
  %2046 = vmatprep.subr.mxu0 0.0
  %2047 = vmatpush1.msra.mxu0 0.0
  %2048 = vmatprep.subr.mxu0 0.0
  %2049 = vmatpush1.msra.mxu0 0.0
  %2050 = vmatprep.subr.mxu0 0.0
  %2051 = vmatpush1.msra.mxu0 0.0
  %2052 = vmatprep.subr.mxu0 0.0
  %2053 = vmatpush1.msra.mxu0 0.0
  %2054 = vmatprep.subr.mxu0 0.0
  %2055 = vmatpush1.msra.mxu0 0.0
  %2056 = vmatprep.subr.mxu0 0.0
  %2057 = vmatpush1.msra.mxu0 0.0
  %2058 = vmatprep.subr.mxu0 0.0
  %2059 = vmatpush1.msra.mxu0 0.0
  %2060 = vmatprep.subr.mxu0 0.0
  %2061 = vmatpush1.msra.mxu0 0.0
  %2062 = vmatprep.subr.mxu0 0.0
  %2063 = vmatpush1.msra.mxu0 0.0
  %2064 = vmatprep.subr.mxu0 0.0
  %2065 = vmatpush1.msra.mxu0 %v1779
  %2066 = vmatprep.subr.mxu0 0.0
  %2067 = vmatpush2.msra.mxu0 0.0
  %2068 = vmatprep.subr.mxu0 0.0
  %2069 = vmatpush2.msra.mxu0 0.0
  %2070 = vmatprep.subr.mxu0 0.0
  %2071 = vmatpush2.msra.mxu0 0.0
  %2072 = vmatprep.subr.mxu0 0.0
  %2073 = vmatpush2.msra.mxu0 0.0
  %2074 = vmatprep.subr.mxu0 0.0
  %2075 = vmatpush2.msra.mxu0 0.0
  %2076 = vmatprep.subr.mxu0 0.0
  %2077 = vmatpush2.msra.mxu0 0.0
  %2078 = vmatprep.subr.mxu0 0.0
  %2079 = vmatpush2.msra.mxu0 0.0
  %2080 = vmatprep.subr.mxu0 0.0
  %2081 = vmatpush2.msra.mxu0 0.0
  %2082 = vmatprep.subr.mxu0 0.0
  %2083 = vmatpush2.msra.mxu0 0.0
  %2084 = vmatprep.subr.mxu0 0.0
  %2085 = vmatpush2.msra.mxu0 0.0
  %2086 = vmatprep.subr.mxu0 0.0
  %2087 = vmatpush2.msra.mxu0 0.0
  %2088 = vmatprep.subr.mxu0 0.0
  %2089 = vmatpush2.msra.mxu0 0.0
  %2090 = vmatprep.subr.mxu0 0.0
  %2091 = vmatpush2.msra.mxu0 0.0
  %2092 = vmatprep.subr.mxu0 0.0
  %2093 = vmatpush2.msra.mxu0 0.0
  %2094 = vmatprep.subr.mxu0 0.0
  %2095 = vmatpush2.msra.mxu0 0.0
  %2096 = vmatprep.subr.mxu0 0.0
  %2097 = vmatpush2.msra.mxu0 0.0
  %2098 = vmatprep.mubr.f32.mxu0 0.0
  %2099 = vmatmul.mubr.f32.gmra.mxu0 %v2032
  %v2100 = vpop.f32.mrf.mxu0
  %v2101 = vadd.f32 0.0, %v2100
  %v2102 = vpop.f32.mrf.mxu0
  %2103 = vdwg.mxu0
  %v2104 = vpack.c.bf16 %v2101, %v2028
  %s2105 = scalar_lea.vmem %s11, 16
  %v2106 = vld [vmem:[%s2105] sm:$0xf]
  %v2107 = vld [vmem:[%s2105 + $0x4] sm:$0xf]
  %s2108 = scalar_lea.vmem %s5, 48
  %v2109 = vld [vmem:[%s2108] sm:$0xf]
  %v2110 = vld [vmem:[%s2108 + $0x4] sm:$0xf]
  %v2111 = vld [vmem:[%s2108 + $0x8] sm:$0xf]
  %v2112 = vld [vmem:[%s2108 + $0xc] sm:$0xf]
  %s2113 = scalar_lea.vmem %s8, 3
  %v2114 = vld [vmem:[%s2113] sm:$0x1]
  %v2116 = vlaneseq
  %v2117 = vshrl.u32 %v2116, 7
  %v2118 = vsub.s32 0, %v2117
  %v2119 = vrot.slane %v2114, %v2118
  %v2125 = vunpack.c.l.b16 %v2109
  %v2126 = vunpack.c.l.b16 %v2110
  %v2127 = vunpack.c.l.b16 %v2111
  %v2128 = vunpack.c.l.b16 %v2112
  %v2129 = vpack.c.b16 %v2126, %v2125
  %v2130 = vpack.c.b16 %v2128, %v2127
  %2133 = vmatprep.subr.bf16.mxu0 0
  %2134 = vmatpush1.bf16.msra.mxu0 0
  %2135 = vmatprep.subr.bf16.mxu0 0
  %2136 = vmatpush1.bf16.msra.mxu0 0
  %2137 = vmatprep.subr.bf16.mxu0 0
  %2138 = vmatpush1.bf16.msra.mxu0 0
  %2139 = vmatprep.subr.bf16.mxu0 0
  %2140 = vmatpush1.bf16.msra.mxu0 0
  %2141 = vmatprep.subr.bf16.mxu0 0
  %2142 = vmatpush1.bf16.msra.mxu0 0
  %2143 = vmatprep.subr.bf16.mxu0 0
  %2144 = vmatpush1.bf16.msra.mxu0 0
  %2145 = vmatprep.subr.bf16.mxu0 0
  %2146 = vmatpush1.bf16.msra.mxu0 %v2130
  %2147 = vmatprep.subr.bf16.mxu0 0
  %2148 = vmatpush1.bf16.msra.mxu0 %v2129
  %2149 = vmatprep.subr.bf16.mxu0 0
  %2150 = vmatpush2.bf16.msra.mxu0 0
  %2151 = vmatprep.subr.bf16.mxu0 0
  %2152 = vmatpush2.bf16.msra.mxu0 0
  %2153 = vmatprep.subr.bf16.mxu0 0
  %2154 = vmatpush2.bf16.msra.mxu0 0
  %2155 = vmatprep.subr.bf16.mxu0 0
  %2156 = vmatpush2.bf16.msra.mxu0 0
  %2157 = vmatprep.subr.bf16.mxu0 0
  %2158 = vmatpush2.bf16.msra.mxu0 0
  %2159 = vmatprep.subr.bf16.mxu0 0
  %2160 = vmatpush2.bf16.msra.mxu0 0
  %2161 = vmatprep.subr.bf16.mxu0 0
  %2162 = vmatpush2.bf16.msra.mxu0 0
  %2163 = vmatprep.subr.bf16.mxu0 0
  %2164 = vmatpush2.bf16.msra.mxu0 0
  %2165 = vmatprep.mubr.bf16.mxu0 0
  %2166 = vmatmul.mubr.bf16.gmra.mxu0 %v1607
  %v2167 = vpop.f32.mrf.mxu0
  %v2168 = vadd.f32 %v2119, %v2167
  %v2169 = vpop.f32.mrf.mxu0
  %v2170 = vpop.f32.mrf.mxu0
  %v2171 = vadd.f32 %v2119, %v2170
  %v2172 = vpop.f32.mrf.mxu0
  %2173 = vdwg.mxu0
  %s2174 = scalar_lea.vmem %s6, 48
  %v2175 = vld [vmem:[%s2174] sm:$0xf]
  %v2176 = vld [vmem:[%s2174 + $0x4] sm:$0xf]
  %v2177 = vld [vmem:[%s2174 + $0x8] sm:$0xf]
  %v2178 = vld [vmem:[%s2174 + $0xc] sm:$0xf]
  %s2179 = scalar_lea.vmem %s9, 3
  %v2180 = vld [vmem:[%s2179] sm:$0x1]
  %v2182 = vlaneseq
  %v2183 = vshrl.u32 %v2182, 7
  %v2184 = vsub.s32 0, %v2183
  %v2185 = vrot.slane %v2180, %v2184
  %v2191 = vunpack.c.l.b16 %v2175
  %v2192 = vunpack.c.l.b16 %v2176
  %v2193 = vunpack.c.l.b16 %v2177
  %v2194 = vunpack.c.l.b16 %v2178
  %v2195 = vpack.c.b16 %v2192, %v2191
  %v2196 = vpack.c.b16 %v2194, %v2193
  %2199 = vmatprep.subr.bf16.mxu0 0
  %2200 = vmatpush1.bf16.msra.mxu0 0
  %2201 = vmatprep.subr.bf16.mxu0 0
  %2202 = vmatpush1.bf16.msra.mxu0 0
  %2203 = vmatprep.subr.bf16.mxu0 0
  %2204 = vmatpush1.bf16.msra.mxu0 0
  %2205 = vmatprep.subr.bf16.mxu0 0
  %2206 = vmatpush1.bf16.msra.mxu0 0
  %2207 = vmatprep.subr.bf16.mxu0 0
  %2208 = vmatpush1.bf16.msra.mxu0 0
  %2209 = vmatprep.subr.bf16.mxu0 0
  %2210 = vmatpush1.bf16.msra.mxu0 0
  %2211 = vmatprep.subr.bf16.mxu0 0
  %2212 = vmatpush1.bf16.msra.mxu0 %v2196
  %2213 = vmatprep.subr.bf16.mxu0 0
  %2214 = vmatpush1.bf16.msra.mxu0 %v2195
  %2215 = vmatprep.subr.bf16.mxu0 0
  %2216 = vmatpush2.bf16.msra.mxu0 0
  %2217 = vmatprep.subr.bf16.mxu0 0
  %2218 = vmatpush2.bf16.msra.mxu0 0
  %2219 = vmatprep.subr.bf16.mxu0 0
  %2220 = vmatpush2.bf16.msra.mxu0 0
  %2221 = vmatprep.subr.bf16.mxu0 0
  %2222 = vmatpush2.bf16.msra.mxu0 0
  %2223 = vmatprep.subr.bf16.mxu0 0
  %2224 = vmatpush2.bf16.msra.mxu0 0
  %2225 = vmatprep.subr.bf16.mxu0 0
  %2226 = vmatpush2.bf16.msra.mxu0 0
  %2227 = vmatprep.subr.bf16.mxu0 0
  %2228 = vmatpush2.bf16.msra.mxu0 0
  %2229 = vmatprep.subr.bf16.mxu0 0
  %2230 = vmatpush2.bf16.msra.mxu0 0
  %2231 = vmatprep.mubr.bf16.mxu0 0
  %2232 = vmatmul.mubr.bf16.gmra.mxu0 %v1607
  %v2233 = vpop.f32.mrf.mxu0
  %v2234 = vadd.f32 %v2185, %v2233
  %v2235 = vpop.f32.mrf.mxu0
  %v2236 = vpop.f32.mrf.mxu0
  %v2237 = vadd.f32 %v2185, %v2236
  %v2238 = vpop.f32.mrf.mxu0
  %2239 = vdwg.mxu0
  %s2240 = scalar_lea.vmem %s7, 48
  %v2241 = vld [vmem:[%s2240] sm:$0xf]
  %v2242 = vld [vmem:[%s2240 + $0x4] sm:$0xf]
  %v2243 = vld [vmem:[%s2240 + $0x8] sm:$0xf]
  %v2244 = vld [vmem:[%s2240 + $0xc] sm:$0xf]
  %s2245 = scalar_lea.vmem %s10, 3
  %v2246 = vld [vmem:[%s2245] sm:$0x1]
  %v2248 = vlaneseq
  %v2249 = vshrl.u32 %v2248, 7
  %v2250 = vsub.s32 0, %v2249
  %v2251 = vrot.slane %v2246, %v2250
  %v2257 = vunpack.c.l.b16 %v2241
  %v2258 = vunpack.c.l.b16 %v2242
  %v2259 = vunpack.c.l.b16 %v2243
  %v2260 = vunpack.c.l.b16 %v2244
  %v2261 = vpack.c.b16 %v2258, %v2257
  %v2262 = vpack.c.b16 %v2260, %v2259
  %2265 = vmatprep.subr.bf16.mxu0 0
  %2266 = vmatpush1.bf16.msra.mxu0 0
  %2267 = vmatprep.subr.bf16.mxu0 0
  %2268 = vmatpush1.bf16.msra.mxu0 0
  %2269 = vmatprep.subr.bf16.mxu0 0
  %2270 = vmatpush1.bf16.msra.mxu0 0
  %2271 = vmatprep.subr.bf16.mxu0 0
  %2272 = vmatpush1.bf16.msra.mxu0 0
  %2273 = vmatprep.subr.bf16.mxu0 0
  %2274 = vmatpush1.bf16.msra.mxu0 0
  %2275 = vmatprep.subr.bf16.mxu0 0
  %2276 = vmatpush1.bf16.msra.mxu0 0
  %2277 = vmatprep.subr.bf16.mxu0 0
  %2278 = vmatpush1.bf16.msra.mxu0 %v2262
  %2279 = vmatprep.subr.bf16.mxu0 0
  %2280 = vmatpush1.bf16.msra.mxu0 %v2261
  %2281 = vmatprep.subr.bf16.mxu0 0
  %2282 = vmatpush2.bf16.msra.mxu0 0
  %2283 = vmatprep.subr.bf16.mxu0 0
  %2284 = vmatpush2.bf16.msra.mxu0 0
  %2285 = vmatprep.subr.bf16.mxu0 0
  %2286 = vmatpush2.bf16.msra.mxu0 0
  %2287 = vmatprep.subr.bf16.mxu0 0
  %2288 = vmatpush2.bf16.msra.mxu0 0
  %2289 = vmatprep.subr.bf16.mxu0 0
  %2290 = vmatpush2.bf16.msra.mxu0 0
  %2291 = vmatprep.subr.bf16.mxu0 0
  %2292 = vmatpush2.bf16.msra.mxu0 0
  %2293 = vmatprep.subr.bf16.mxu0 0
  %2294 = vmatpush2.bf16.msra.mxu0 0
  %2295 = vmatprep.subr.bf16.mxu0 0
  %2296 = vmatpush2.bf16.msra.mxu0 0
  %2297 = vmatprep.mubr.bf16.mxu0 0
  %2298 = vmatmul.mubr.bf16.gmra.mxu0 %v1607
  %v2299 = vpop.f32.mrf.mxu0
  %v2300 = vadd.f32 %v2251, %v2299
  %v2301 = vpop.f32.mrf.mxu0
  %v2302 = vpop.f32.mrf.mxu0
  %v2303 = vadd.f32 %v2251, %v2302
  %v2304 = vpop.f32.mrf.mxu0
  %2305 = vdwg.mxu0
  %v2306 = vmul.f32 %v2168, 0.25
  %v2307 = vmul.f32 %v2171, 0.25
  %v2309 = vsel %vm364, %v2306, 0
  %v2312 = vsel %vm364, %v2234, 0
  %2314 = vmatprep.subr.mxu0 0.0
  %2315 = vmatpush1.xpose.msra.mxu0 0.0
  %2316 = vmatprep.subr.mxu0 0.0
  %2317 = vmatpush1.xpose.msra.mxu0 0.0
  %2318 = vmatprep.subr.mxu0 0.0
  %2319 = vmatpush1.xpose.msra.mxu0 0.0
  %2320 = vmatprep.subr.mxu0 0.0
  %2321 = vmatpush1.xpose.msra.mxu0 0.0
  %2322 = vmatprep.subr.mxu0 0.0
  %2323 = vmatpush1.xpose.msra.mxu0 0.0
  %2324 = vmatprep.subr.mxu0 0.0
  %2325 = vmatpush1.xpose.msra.mxu0 0.0
  %2326 = vmatprep.subr.mxu0 0.0
  %2327 = vmatpush1.xpose.msra.mxu0 0.0
  %2328 = vmatprep.subr.mxu0 0.0
  %2329 = vmatpush1.xpose.msra.mxu0 0.0
  %2330 = vmatprep.subr.mxu0 0.0
  %2331 = vmatpush1.xpose.msra.mxu0 0.0
  %2332 = vmatprep.subr.mxu0 0.0
  %2333 = vmatpush1.xpose.msra.mxu0 0.0
  %2334 = vmatprep.subr.mxu0 0.0
  %2335 = vmatpush1.xpose.msra.mxu0 0.0
  %2336 = vmatprep.subr.mxu0 0.0
  %2337 = vmatpush1.xpose.msra.mxu0 0.0
  %2338 = vmatprep.subr.mxu0 0.0
  %2339 = vmatpush1.xpose.msra.mxu0 0.0
  %2340 = vmatprep.subr.mxu0 0.0
  %2341 = vmatpush1.xpose.msra.mxu0 0.0
  %2342 = vmatprep.subr.mxu0 0.0
  %2343 = vmatpush1.xpose.msra.mxu0 0.0
  %2344 = vmatprep.subr.mxu0 0.0
  %2345 = vmatpush1.xpose.msra.mxu0 %v2312
  %2346 = vmatprep.subr.mxu0 0.0
  %2347 = vmatpush2.xpose.msra.mxu0 0.0
  %2348 = vmatprep.subr.mxu0 0.0
  %2349 = vmatpush2.xpose.msra.mxu0 0.0
  %2350 = vmatprep.subr.mxu0 0.0
  %2351 = vmatpush2.xpose.msra.mxu0 0.0
  %2352 = vmatprep.subr.mxu0 0.0
  %2353 = vmatpush2.xpose.msra.mxu0 0.0
  %2354 = vmatprep.subr.mxu0 0.0
  %2355 = vmatpush2.xpose.msra.mxu0 0.0
  %2356 = vmatprep.subr.mxu0 0.0
  %2357 = vmatpush2.xpose.msra.mxu0 0.0
  %2358 = vmatprep.subr.mxu0 0.0
  %2359 = vmatpush2.xpose.msra.mxu0 0.0
  %2360 = vmatprep.subr.mxu0 0.0
  %2361 = vmatpush2.xpose.msra.mxu0 0.0
  %2362 = vmatprep.subr.mxu0 0.0
  %2363 = vmatpush2.xpose.msra.mxu0 0.0
  %2364 = vmatprep.subr.mxu0 0.0
  %2365 = vmatpush2.xpose.msra.mxu0 0.0
  %2366 = vmatprep.subr.mxu0 0.0
  %2367 = vmatpush2.xpose.msra.mxu0 0.0
  %2368 = vmatprep.subr.mxu0 0.0
  %2369 = vmatpush2.xpose.msra.mxu0 0.0
  %2370 = vmatprep.subr.mxu0 0.0
  %2371 = vmatpush2.xpose.msra.mxu0 0.0
  %2372 = vmatprep.subr.mxu0 0.0
  %2373 = vmatpush2.xpose.msra.mxu0 0.0
  %2374 = vmatprep.subr.mxu0 0.0
  %2375 = vmatpush2.xpose.msra.mxu0 0.0
  %2376 = vmatprep.subr.mxu0 0.0
  %2377 = vmatpush2.xpose.msra.mxu0 0.0
  %2378 = vmatprep.mubr.f32.mxu0 0.0
  %2379 = vmatmul.mubr.f32.gmra.mxu0 %v2309
  %v2380 = vpop.f32.mrf.mxu0
  %v2381 = vadd.f32 %v357, %v2380
  %v2382 = vpop.f32.mrf.mxu0
  %2383 = vdwg.mxu0
  %v2385 = vsel %vm364, %v2307, 0
  %v2388 = vsel %vm364, %v2237, 0
  %2390 = vmatprep.subr.mxu0 0.0
  %2391 = vmatpush1.xpose.msra.mxu0 0.0
  %2392 = vmatprep.subr.mxu0 0.0
  %2393 = vmatpush1.xpose.msra.mxu0 0.0
  %2394 = vmatprep.subr.mxu0 0.0
  %2395 = vmatpush1.xpose.msra.mxu0 0.0
  %2396 = vmatprep.subr.mxu0 0.0
  %2397 = vmatpush1.xpose.msra.mxu0 0.0
  %2398 = vmatprep.subr.mxu0 0.0
  %2399 = vmatpush1.xpose.msra.mxu0 0.0
  %2400 = vmatprep.subr.mxu0 0.0
  %2401 = vmatpush1.xpose.msra.mxu0 0.0
  %2402 = vmatprep.subr.mxu0 0.0
  %2403 = vmatpush1.xpose.msra.mxu0 0.0
  %2404 = vmatprep.subr.mxu0 0.0
  %2405 = vmatpush1.xpose.msra.mxu0 0.0
  %2406 = vmatprep.subr.mxu0 0.0
  %2407 = vmatpush1.xpose.msra.mxu0 0.0
  %2408 = vmatprep.subr.mxu0 0.0
  %2409 = vmatpush1.xpose.msra.mxu0 0.0
  %2410 = vmatprep.subr.mxu0 0.0
  %2411 = vmatpush1.xpose.msra.mxu0 0.0
  %2412 = vmatprep.subr.mxu0 0.0
  %2413 = vmatpush1.xpose.msra.mxu0 0.0
  %2414 = vmatprep.subr.mxu0 0.0
  %2415 = vmatpush1.xpose.msra.mxu0 0.0
  %2416 = vmatprep.subr.mxu0 0.0
  %2417 = vmatpush1.xpose.msra.mxu0 0.0
  %2418 = vmatprep.subr.mxu0 0.0
  %2419 = vmatpush1.xpose.msra.mxu0 0.0
  %2420 = vmatprep.subr.mxu0 0.0
  %2421 = vmatpush1.xpose.msra.mxu0 %v2388
  %2422 = vmatprep.subr.mxu0 0.0
  %2423 = vmatpush2.xpose.msra.mxu0 0.0
  %2424 = vmatprep.subr.mxu0 0.0
  %2425 = vmatpush2.xpose.msra.mxu0 0.0
  %2426 = vmatprep.subr.mxu0 0.0
  %2427 = vmatpush2.xpose.msra.mxu0 0.0
  %2428 = vmatprep.subr.mxu0 0.0
  %2429 = vmatpush2.xpose.msra.mxu0 0.0
  %2430 = vmatprep.subr.mxu0 0.0
  %2431 = vmatpush2.xpose.msra.mxu0 0.0
  %2432 = vmatprep.subr.mxu0 0.0
  %2433 = vmatpush2.xpose.msra.mxu0 0.0
  %2434 = vmatprep.subr.mxu0 0.0
  %2435 = vmatpush2.xpose.msra.mxu0 0.0
  %2436 = vmatprep.subr.mxu0 0.0
  %2437 = vmatpush2.xpose.msra.mxu0 0.0
  %2438 = vmatprep.subr.mxu0 0.0
  %2439 = vmatpush2.xpose.msra.mxu0 0.0
  %2440 = vmatprep.subr.mxu0 0.0
  %2441 = vmatpush2.xpose.msra.mxu0 0.0
  %2442 = vmatprep.subr.mxu0 0.0
  %2443 = vmatpush2.xpose.msra.mxu0 0.0
  %2444 = vmatprep.subr.mxu0 0.0
  %2445 = vmatpush2.xpose.msra.mxu0 0.0
  %2446 = vmatprep.subr.mxu0 0.0
  %2447 = vmatpush2.xpose.msra.mxu0 0.0
  %2448 = vmatprep.subr.mxu0 0.0
  %2449 = vmatpush2.xpose.msra.mxu0 0.0
  %2450 = vmatprep.subr.mxu0 0.0
  %2451 = vmatpush2.xpose.msra.mxu0 0.0
  %2452 = vmatprep.subr.mxu0 0.0
  %2453 = vmatpush2.xpose.msra.mxu0 0.0
  %2454 = vmatprep.mubr.f32.mxu0 0.0
  %2455 = vmatmul.mubr.f32.gmra.mxu0 %v2385
  %v2456 = vpop.f32.mrf.mxu0
  %v2457 = vadd.f32 %v361, %v2456
  %v2458 = vpop.f32.mrf.mxu0
  %2459 = vdwg.mxu0
  %v2460 = vsel %vm517, %v2381, -inf
  %2461 = vmax.xlane.f32.xlu0 %v2460
  %v2462 = vpop.xlane.xlu0 %2461
  %v2463 = vsel %vm517, %v2457, -inf
  %2464 = vmax.xlane.f32.xlu0 %v2463
  %v2465 = vpop.xlane.xlu0 %2464
  %v2466 = vsub.f32 %v2381, %v2462
  %v2467 = vsub.f32 %v2457, %v2465
  %v2468 = vmul.f32 %v2466, 1.442695
  %v2469 = vpow.pop %v2468
  %v2470 = vmul.f32 %v2467, 1.442695
  %v2471 = vpow.pop %v2470
  %v2472 = vsel %vm517, %v2469, 0.0
  %2473 = vadd.xlane.f32.xlu0 %v2472
  %v2474 = vpop.xlane.xlu0 %2473
  %v2475 = vsel %vm517, %v2471, 0.0
  %2476 = vadd.xlane.f32.xlu0 %v2475
  %v2477 = vpop.xlane.xlu0 %2476
  %v2478 = vrcp.pop %v2474
  %v2479 = vrcp.pop %v2477
  %v2480 = vmul.f32 %v2469, %v2478
  %v2481 = vmul.f32 %v2471, %v2479
  %v2483 = vsel %vm517, %v2480, 0
  %2485 = vmatprep.subr.mxu0 0.0
  %2486 = vmatpush1.msra.mxu0 0.0
  %2487 = vmatprep.subr.mxu0 0.0
  %2488 = vmatpush1.msra.mxu0 0.0
  %2489 = vmatprep.subr.mxu0 0.0
  %2490 = vmatpush1.msra.mxu0 0.0
  %2491 = vmatprep.subr.mxu0 0.0
  %2492 = vmatpush1.msra.mxu0 0.0
  %2493 = vmatprep.subr.mxu0 0.0
  %2494 = vmatpush1.msra.mxu0 0.0
  %2495 = vmatprep.subr.mxu0 0.0
  %2496 = vmatpush1.msra.mxu0 0.0
  %2497 = vmatprep.subr.mxu0 0.0
  %2498 = vmatpush1.msra.mxu0 0.0
  %2499 = vmatprep.subr.mxu0 0.0
  %2500 = vmatpush1.msra.mxu0 0.0
  %2501 = vmatprep.subr.mxu0 0.0
  %2502 = vmatpush1.msra.mxu0 0.0
  %2503 = vmatprep.subr.mxu0 0.0
  %2504 = vmatpush1.msra.mxu0 0.0
  %2505 = vmatprep.subr.mxu0 0.0
  %2506 = vmatpush1.msra.mxu0 0.0
  %2507 = vmatprep.subr.mxu0 0.0
  %2508 = vmatpush1.msra.mxu0 0.0
  %2509 = vmatprep.subr.mxu0 0.0
  %2510 = vmatpush1.msra.mxu0 0.0
  %2511 = vmatprep.subr.mxu0 0.0
  %2512 = vmatpush1.msra.mxu0 0.0
  %2513 = vmatprep.subr.mxu0 0.0
  %2514 = vmatpush1.msra.mxu0 0.0
  %2515 = vmatprep.subr.mxu0 0.0
  %2516 = vmatpush1.msra.mxu0 %v2300
  %2517 = vmatprep.subr.mxu0 0.0
  %2518 = vmatpush2.msra.mxu0 0.0
  %2519 = vmatprep.subr.mxu0 0.0
  %2520 = vmatpush2.msra.mxu0 0.0
  %2521 = vmatprep.subr.mxu0 0.0
  %2522 = vmatpush2.msra.mxu0 0.0
  %2523 = vmatprep.subr.mxu0 0.0
  %2524 = vmatpush2.msra.mxu0 0.0
  %2525 = vmatprep.subr.mxu0 0.0
  %2526 = vmatpush2.msra.mxu0 0.0
  %2527 = vmatprep.subr.mxu0 0.0
  %2528 = vmatpush2.msra.mxu0 0.0
  %2529 = vmatprep.subr.mxu0 0.0
  %2530 = vmatpush2.msra.mxu0 0.0
  %2531 = vmatprep.subr.mxu0 0.0
  %2532 = vmatpush2.msra.mxu0 0.0
  %2533 = vmatprep.subr.mxu0 0.0
  %2534 = vmatpush2.msra.mxu0 0.0
  %2535 = vmatprep.subr.mxu0 0.0
  %2536 = vmatpush2.msra.mxu0 0.0
  %2537 = vmatprep.subr.mxu0 0.0
  %2538 = vmatpush2.msra.mxu0 0.0
  %2539 = vmatprep.subr.mxu0 0.0
  %2540 = vmatpush2.msra.mxu0 0.0
  %2541 = vmatprep.subr.mxu0 0.0
  %2542 = vmatpush2.msra.mxu0 0.0
  %2543 = vmatprep.subr.mxu0 0.0
  %2544 = vmatpush2.msra.mxu0 0.0
  %2545 = vmatprep.subr.mxu0 0.0
  %2546 = vmatpush2.msra.mxu0 0.0
  %2547 = vmatprep.subr.mxu0 0.0
  %2548 = vmatpush2.msra.mxu0 0.0
  %2549 = vmatprep.mubr.f32.mxu0 0.0
  %2550 = vmatmul.mubr.f32.gmra.mxu0 %v2483
  %v2551 = vpop.f32.mrf.mxu0
  %v2552 = vadd.f32 0.0, %v2551
  %v2553 = vpop.f32.mrf.mxu0
  %2554 = vdwg.mxu0
  %v2556 = vsel %vm517, %v2481, 0
  %2558 = vmatprep.subr.mxu0 0.0
  %2559 = vmatpush1.msra.mxu0 0.0
  %2560 = vmatprep.subr.mxu0 0.0
  %2561 = vmatpush1.msra.mxu0 0.0
  %2562 = vmatprep.subr.mxu0 0.0
  %2563 = vmatpush1.msra.mxu0 0.0
  %2564 = vmatprep.subr.mxu0 0.0
  %2565 = vmatpush1.msra.mxu0 0.0
  %2566 = vmatprep.subr.mxu0 0.0
  %2567 = vmatpush1.msra.mxu0 0.0
  %2568 = vmatprep.subr.mxu0 0.0
  %2569 = vmatpush1.msra.mxu0 0.0
  %2570 = vmatprep.subr.mxu0 0.0
  %2571 = vmatpush1.msra.mxu0 0.0
  %2572 = vmatprep.subr.mxu0 0.0
  %2573 = vmatpush1.msra.mxu0 0.0
  %2574 = vmatprep.subr.mxu0 0.0
  %2575 = vmatpush1.msra.mxu0 0.0
  %2576 = vmatprep.subr.mxu0 0.0
  %2577 = vmatpush1.msra.mxu0 0.0
  %2578 = vmatprep.subr.mxu0 0.0
  %2579 = vmatpush1.msra.mxu0 0.0
  %2580 = vmatprep.subr.mxu0 0.0
  %2581 = vmatpush1.msra.mxu0 0.0
  %2582 = vmatprep.subr.mxu0 0.0
  %2583 = vmatpush1.msra.mxu0 0.0
  %2584 = vmatprep.subr.mxu0 0.0
  %2585 = vmatpush1.msra.mxu0 0.0
  %2586 = vmatprep.subr.mxu0 0.0
  %2587 = vmatpush1.msra.mxu0 0.0
  %2588 = vmatprep.subr.mxu0 0.0
  %2589 = vmatpush1.msra.mxu0 %v2303
  %2590 = vmatprep.subr.mxu0 0.0
  %2591 = vmatpush2.msra.mxu0 0.0
  %2592 = vmatprep.subr.mxu0 0.0
  %2593 = vmatpush2.msra.mxu0 0.0
  %2594 = vmatprep.subr.mxu0 0.0
  %2595 = vmatpush2.msra.mxu0 0.0
  %2596 = vmatprep.subr.mxu0 0.0
  %2597 = vmatpush2.msra.mxu0 0.0
  %2598 = vmatprep.subr.mxu0 0.0
  %2599 = vmatpush2.msra.mxu0 0.0
  %2600 = vmatprep.subr.mxu0 0.0
  %2601 = vmatpush2.msra.mxu0 0.0
  %2602 = vmatprep.subr.mxu0 0.0
  %2603 = vmatpush2.msra.mxu0 0.0
  %2604 = vmatprep.subr.mxu0 0.0
  %2605 = vmatpush2.msra.mxu0 0.0
  %2606 = vmatprep.subr.mxu0 0.0
  %2607 = vmatpush2.msra.mxu0 0.0
  %2608 = vmatprep.subr.mxu0 0.0
  %2609 = vmatpush2.msra.mxu0 0.0
  %2610 = vmatprep.subr.mxu0 0.0
  %2611 = vmatpush2.msra.mxu0 0.0
  %2612 = vmatprep.subr.mxu0 0.0
  %2613 = vmatpush2.msra.mxu0 0.0
  %2614 = vmatprep.subr.mxu0 0.0
  %2615 = vmatpush2.msra.mxu0 0.0
  %2616 = vmatprep.subr.mxu0 0.0
  %2617 = vmatpush2.msra.mxu0 0.0
  %2618 = vmatprep.subr.mxu0 0.0
  %2619 = vmatpush2.msra.mxu0 0.0
  %2620 = vmatprep.subr.mxu0 0.0
  %2621 = vmatpush2.msra.mxu0 0.0
  %2622 = vmatprep.mubr.f32.mxu0 0.0
  %2623 = vmatmul.mubr.f32.gmra.mxu0 %v2556
  %v2624 = vpop.f32.mrf.mxu0
  %v2625 = vadd.f32 0.0, %v2624
  %v2626 = vpop.f32.mrf.mxu0
  %2627 = vdwg.mxu0
  %v2628 = vpack.c.bf16 %v2625, %v2552
  %s2629 = scalar_lea.vmem %s11, 24
  %v2630 = vld [vmem:[%s2629] sm:$0xf]
  %v2631 = vld [vmem:[%s2629 + $0x4] sm:$0xf]
  %v2634 = vunpack.c.l.b16 %v2630
  %v2635 = vunpack.c.l.b16 %v2631
  %v2636 = vpack.c.b16 %v2635, %v2634
  %v2639 = vsel %vm364, %v2628, 0
  %2641 = vmatprep.subr.bf16.mxu0 0
  %2642 = vmatpush1.bf16.msra.mxu0 0
  %2643 = vmatprep.subr.bf16.mxu0 0
  %2644 = vmatpush1.bf16.msra.mxu0 0
  %2645 = vmatprep.subr.bf16.mxu0 0
  %2646 = vmatpush1.bf16.msra.mxu0 0
  %2647 = vmatprep.subr.bf16.mxu0 0
  %2648 = vmatpush1.bf16.msra.mxu0 0
  %2649 = vmatprep.subr.bf16.mxu0 0
  %2650 = vmatpush1.bf16.msra.mxu0 0
  %2651 = vmatprep.subr.bf16.mxu0 0
  %2652 = vmatpush1.bf16.msra.mxu0 0
  %2653 = vmatprep.subr.bf16.mxu0 0
  %2654 = vmatpush1.bf16.msra.mxu0 0
  %2655 = vmatprep.subr.bf16.mxu0 0
  %2656 = vmatpush1.bf16.msra.mxu0 %v2636
  %2657 = vmatprep.subr.bf16.mxu0 0
  %2658 = vmatpush2.bf16.msra.mxu0 0
  %2659 = vmatprep.subr.bf16.mxu0 0
  %2660 = vmatpush2.bf16.msra.mxu0 0
  %2661 = vmatprep.subr.bf16.mxu0 0
  %2662 = vmatpush2.bf16.msra.mxu0 0
  %2663 = vmatprep.subr.bf16.mxu0 0
  %2664 = vmatpush2.bf16.msra.mxu0 0
  %2665 = vmatprep.subr.bf16.mxu0 0
  %2666 = vmatpush2.bf16.msra.mxu0 0
  %2667 = vmatprep.subr.bf16.mxu0 0
  %2668 = vmatpush2.bf16.msra.mxu0 0
  %2669 = vmatprep.subr.bf16.mxu0 0
  %2670 = vmatpush2.bf16.msra.mxu0 0
  %2671 = vmatprep.subr.bf16.mxu0 0
  %2672 = vmatpush2.bf16.msra.mxu0 0
  %2673 = vmatprep.mubr.bf16.mxu0 0
  %2674 = vmatmul.mubr.bf16.gmra.mxu0 %v2639
  %v2675 = vpop.f32.mrf.mxu0
  %v2676 = vadd.f32 0.0, %v2675
  %v2677 = vpop.f32.mrf.mxu0
  %v2678 = vpop.f32.mrf.mxu0
  %v2679 = vadd.f32 0.0, %v2678
  %v2680 = vpop.f32.mrf.mxu0
  %2681 = vdwg.mxu0
  %v2684 = vunpack.c.l.b16 %v2106
  %v2685 = vunpack.c.l.b16 %v2107
  %v2686 = vpack.c.b16 %v2685, %v2684
  %v2689 = vsel %vm364, %v2104, 0
  %2691 = vmatprep.subr.bf16.mxu0 0
  %2692 = vmatpush1.bf16.msra.mxu0 0
  %2693 = vmatprep.subr.bf16.mxu0 0
  %2694 = vmatpush1.bf16.msra.mxu0 0
  %2695 = vmatprep.subr.bf16.mxu0 0
  %2696 = vmatpush1.bf16.msra.mxu0 0
  %2697 = vmatprep.subr.bf16.mxu0 0
  %2698 = vmatpush1.bf16.msra.mxu0 0
  %2699 = vmatprep.subr.bf16.mxu0 0
  %2700 = vmatpush1.bf16.msra.mxu0 0
  %2701 = vmatprep.subr.bf16.mxu0 0
  %2702 = vmatpush1.bf16.msra.mxu0 0
  %2703 = vmatprep.subr.bf16.mxu0 0
  %2704 = vmatpush1.bf16.msra.mxu0 0
  %2705 = vmatprep.subr.bf16.mxu0 0
  %2706 = vmatpush1.bf16.msra.mxu0 %v2686
  %2707 = vmatprep.subr.bf16.mxu0 0
  %2708 = vmatpush2.bf16.msra.mxu0 0
  %2709 = vmatprep.subr.bf16.mxu0 0
  %2710 = vmatpush2.bf16.msra.mxu0 0
  %2711 = vmatprep.subr.bf16.mxu0 0
  %2712 = vmatpush2.bf16.msra.mxu0 0
  %2713 = vmatprep.subr.bf16.mxu0 0
  %2714 = vmatpush2.bf16.msra.mxu0 0
  %2715 = vmatprep.subr.bf16.mxu0 0
  %2716 = vmatpush2.bf16.msra.mxu0 0
  %2717 = vmatprep.subr.bf16.mxu0 0
  %2718 = vmatpush2.bf16.msra.mxu0 0
  %2719 = vmatprep.subr.bf16.mxu0 0
  %2720 = vmatpush2.bf16.msra.mxu0 0
  %2721 = vmatprep.subr.bf16.mxu0 0
  %2722 = vmatpush2.bf16.msra.mxu0 0
  %2723 = vmatprep.mubr.bf16.mxu0 0
  %2724 = vmatmul.mubr.bf16.gmra.mxu0 %v2689
  %v2725 = vpop.f32.mrf.mxu0
  %v2726 = vadd.f32 %v2676, %v2725
  %v2727 = vpop.f32.mrf.mxu0
  %v2728 = vpop.f32.mrf.mxu0
  %v2729 = vadd.f32 %v2679, %v2728
  %v2730 = vpop.f32.mrf.mxu0
  %2731 = vdwg.mxu0
  %v2732 = vadd.f32 %v1537, %v2726
  %v2733 = vadd.f32 %v1538, %v2729
  %s2734 = scalar_lea.vmem %s12, 1
  %v2735 = vld [vmem:[%s2734] sm:$0x1]
  %v2737 = vlaneseq
  %v2738 = vshrl.u32 %v2737, 7
  %v2739 = vsub.s32 0, %v2738
  %v2740 = vrot.slane %v2735, %v2739
  %v2742 = vadd.f32 %v2732, %v2740
  %v2743 = vadd.f32 %v2733, %v2740
  %s2744 = scalar_lea.vmem %s13, 2
  %v2745 = vld [vmem:[%s2744] sm:$0x1]
  %v2746 = vld [vmem:[%s2744 + $0x1] sm:$0x1]
  %v2747 = vsel %vm74, %v2742, 0.0
  %2748 = vadd.xlane.f32.xlu0 %v2747
  %v2749 = vpop.xlane.xlu0 %2748
  %v2750 = vsel %vm74, %v2743, 0.0
  %2751 = vadd.xlane.f32.xlu0 %v2750
  %v2752 = vpop.xlane.xlu0 %2751
  %v2753 = vmul.f32 %v2749, %v81
  %v2754 = vmul.f32 %v2752, %v81
  %v2755 = vsub.f32 %v2742, %v2753
  %v2756 = vsub.f32 %v2743, %v2754
  %v2757 = vmul.f32 %v2755, %v2755
  %v2758 = vmul.f32 %v2756, %v2756
  %v2759 = vsel %vm74, %v2757, 0.0
  %2760 = vadd.xlane.f32.xlu0 %v2759
  %v2761 = vpop.xlane.xlu0 %2760
  %v2762 = vsel %vm74, %v2758, 0.0
  %2763 = vadd.xlane.f32.xlu0 %v2762
  %v2764 = vpop.xlane.xlu0 %2763
  %v2765 = vmul.f32 %v2761, %v81
  %v2766 = vmul.f32 %v2764, %v81
  %v2767 = vadd.f32 %v2765, 1e-05
  %v2768 = vadd.f32 %v2766, 1e-05
  %v2769 = vrsqrt.pop %v2767
  %v2770 = vrsqrt.pop %v2768
  %v2771 = vmul.f32 %v2755, %v2769
  %v2772 = vmul.f32 %v2756, %v2770
  %v2773 = vlaneseq
  %v2774 = vshrl.u32 %v2773, 7
  %v2775 = vsub.s32 0, %v2774
  %v2776 = vrot.slane %v2745, %v2775
  %v2777 = vmul.f32 %v2771, %v2776
  %v2778 = vmul.f32 %v2772, %v2776
  %v2779 = vlaneseq
  %v2780 = vshrl.u32 %v2779, 7
  %v2781 = vsub.s32 0, %v2780
  %v2782 = vrot.slane %v2746, %v2781
  %v2783 = vadd.f32 %v2777, %v2782
  %v2784 = vadd.f32 %v2778, %v2782
  %v2785 = vpack.c.bf16 %v2784, %v2783
  %s2786 = scalar_lea.vmem %s14, 16
  %v2787 = vld [vmem:[%s2786] sm:$0xf]
  %v2788 = vld [vmem:[%s2786 + $0x4] sm:$0xf]
  %v2789 = vld [vmem:[%s2786 + $0x8] sm:$0xf]
  %v2790 = vld [vmem:[%s2786 + $0xc] sm:$0xf]
  %s2791 = scalar_lea.vmem %s15, 1
  %v2792 = vld [vmem:[%s2791] sm:$0x1]
  %v2794 = vlaneseq
  %v2795 = vshrl.u32 %v2794, 7
  %v2796 = vsub.s32 0, %v2795
  %v2797 = vrot.slane %v2792, %v2796
  %v2803 = vunpack.c.l.b16 %v2787
  %v2804 = vunpack.c.l.b16 %v2788
  %v2805 = vunpack.c.l.b16 %v2789
  %v2806 = vunpack.c.l.b16 %v2790
  %v2807 = vpack.c.b16 %v2804, %v2803
  %v2808 = vpack.c.b16 %v2806, %v2805
  %v2812 = vsel %vm74, %v2785, 0
  %2814 = vmatprep.subr.bf16.mxu0 0
  %2815 = vmatpush1.bf16.msra.mxu0 0
  %2816 = vmatprep.subr.bf16.mxu0 0
  %2817 = vmatpush1.bf16.msra.mxu0 0
  %2818 = vmatprep.subr.bf16.mxu0 0
  %2819 = vmatpush1.bf16.msra.mxu0 0
  %2820 = vmatprep.subr.bf16.mxu0 0
  %2821 = vmatpush1.bf16.msra.mxu0 0
  %2822 = vmatprep.subr.bf16.mxu0 0
  %2823 = vmatpush1.bf16.msra.mxu0 0
  %2824 = vmatprep.subr.bf16.mxu0 0
  %2825 = vmatpush1.bf16.msra.mxu0 0
  %2826 = vmatprep.subr.bf16.mxu0 0
  %2827 = vmatpush1.bf16.msra.mxu0 %v2808
  %2828 = vmatprep.subr.bf16.mxu0 0
  %2829 = vmatpush1.bf16.msra.mxu0 %v2807
  %2830 = vmatprep.subr.bf16.mxu0 0
  %2831 = vmatpush2.bf16.msra.mxu0 0
  %2832 = vmatprep.subr.bf16.mxu0 0
  %2833 = vmatpush2.bf16.msra.mxu0 0
  %2834 = vmatprep.subr.bf16.mxu0 0
  %2835 = vmatpush2.bf16.msra.mxu0 0
  %2836 = vmatprep.subr.bf16.mxu0 0
  %2837 = vmatpush2.bf16.msra.mxu0 0
  %2838 = vmatprep.subr.bf16.mxu0 0
  %2839 = vmatpush2.bf16.msra.mxu0 0
  %2840 = vmatprep.subr.bf16.mxu0 0
  %2841 = vmatpush2.bf16.msra.mxu0 0
  %2842 = vmatprep.subr.bf16.mxu0 0
  %2843 = vmatpush2.bf16.msra.mxu0 0
  %2844 = vmatprep.subr.bf16.mxu0 0
  %2845 = vmatpush2.bf16.msra.mxu0 0
  %2846 = vmatprep.mubr.bf16.mxu0 0
  %2847 = vmatmul.mubr.bf16.gmra.mxu0 %v2812
  %v2848 = vpop.f32.mrf.mxu0
  %v2849 = vadd.f32 %v2797, %v2848
  %v2850 = vpop.f32.mrf.mxu0
  %v2851 = vpop.f32.mrf.mxu0
  %v2852 = vadd.f32 %v2797, %v2851
  %v2853 = vpop.f32.mrf.mxu0
  %2854 = vdwg.mxu0
  %v2855 = vmul.f32 %v2849, 0.5
  %v2856 = vmul.f32 %v2852, 0.5
  %v2857 = vmul.f32 %v2849, 0.044715
  %v2858 = vmul.f32 %v2852, 0.044715
  %v2859 = vmul.f32 %v2857, %v2849
  %v2860 = vmul.f32 %v2858, %v2852
  %v2861 = vmul.f32 %v2859, %v2849
  %v2862 = vmul.f32 %v2860, %v2852
  %v2863 = vadd.f32 %v2849, %v2861
  %v2864 = vadd.f32 %v2852, %v2862
  %v2865 = vmul.f32 %v2863, 0.7978846
  %v2866 = vmul.f32 %v2864, 0.7978846
  %v2867 = vtanh.pop %v2865
  %v2868 = vtanh.pop %v2866
  %v2869 = vadd.f32 %v2867, 1.0
  %v2870 = vadd.f32 %v2868, 1.0
  %v2871 = vmul.f32 %v2855, %v2869
  %v2872 = vmul.f32 %v2856, %v2870
  %v2873 = vpack.c.bf16 %v2872, %v2871
  %s2874 = scalar_lea.vmem %s16, 32
  %v2875 = vld [vmem:[%s2874] sm:$0xf]
  %v2876 = vld [vmem:[%s2874 + $0x4] sm:$0xf]
  %v2877 = vld [vmem:[%s2874 + $0x8] sm:$0xf]
  %v2878 = vld [vmem:[%s2874 + $0xc] sm:$0xf]
  %v2879 = vld [vmem:[%s2874 + $0x10] sm:$0xf]
  %v2880 = vld [vmem:[%s2874 + $0x14] sm:$0xf]
  %v2881 = vld [vmem:[%s2874 + $0x18] sm:$0xf]
  %v2882 = vld [vmem:[%s2874 + $0x1c] sm:$0xf]
  %v2891 = vunpack.c.l.b16 %v2875
  %v2892 = vunpack.c.l.b16 %v2876
  %v2893 = vunpack.c.l.b16 %v2877
  %v2894 = vunpack.c.l.b16 %v2878
  %v2895 = vunpack.c.l.b16 %v2879
  %v2896 = vunpack.c.l.b16 %v2880
  %v2897 = vunpack.c.l.b16 %v2881
  %v2898 = vunpack.c.l.b16 %v2882
  %v2899 = vpack.c.b16 %v2892, %v2891
  %v2900 = vpack.c.b16 %v2894, %v2893
  %v2901 = vpack.c.b16 %v2896, %v2895
  %v2902 = vpack.c.b16 %v2898, %v2897
  %v2908 = vsel %vm1483, %v2873, 0
  %2910 = vmatprep.subr.bf16.mxu0 0
  %2911 = vmatpush1.bf16.msra.mxu0 0
  %2912 = vmatprep.subr.bf16.mxu0 0
  %2913 = vmatpush1.bf16.msra.mxu0 0
  %2914 = vmatprep.subr.bf16.mxu0 0
  %2915 = vmatpush1.bf16.msra.mxu0 0
  %2916 = vmatprep.subr.bf16.mxu0 0
  %2917 = vmatpush1.bf16.msra.mxu0 0
  %2918 = vmatprep.subr.bf16.mxu0 0
  %2919 = vmatpush1.bf16.msra.mxu0 %v2902
  %2920 = vmatprep.subr.bf16.mxu0 0
  %2921 = vmatpush1.bf16.msra.mxu0 %v2901
  %2922 = vmatprep.subr.bf16.mxu0 0
  %2923 = vmatpush1.bf16.msra.mxu0 %v2900
  %2924 = vmatprep.subr.bf16.mxu0 0
  %2925 = vmatpush1.bf16.msra.mxu0 %v2899
  %2926 = vmatprep.subr.bf16.mxu0 0
  %2927 = vmatpush2.bf16.msra.mxu0 0
  %2928 = vmatprep.subr.bf16.mxu0 0
  %2929 = vmatpush2.bf16.msra.mxu0 0
  %2930 = vmatprep.subr.bf16.mxu0 0
  %2931 = vmatpush2.bf16.msra.mxu0 0
  %2932 = vmatprep.subr.bf16.mxu0 0
  %2933 = vmatpush2.bf16.msra.mxu0 0
  %2934 = vmatprep.subr.bf16.mxu0 0
  %2935 = vmatpush2.bf16.msra.mxu0 0
  %2936 = vmatprep.subr.bf16.mxu0 0
  %2937 = vmatpush2.bf16.msra.mxu0 0
  %2938 = vmatprep.subr.bf16.mxu0 0
  %2939 = vmatpush2.bf16.msra.mxu0 0
  %2940 = vmatprep.subr.bf16.mxu0 0
  %2941 = vmatpush2.bf16.msra.mxu0 0
  %2942 = vmatprep.mubr.bf16.mxu0 0
  %2943 = vmatmul.mubr.bf16.gmra.mxu0 %v2908
  %v2944 = vpop.f32.mrf.mxu0
  %v2945 = vadd.f32 0.0, %v2944
  %v2946 = vpop.f32.mrf.mxu0
  %v2947 = vpop.f32.mrf.mxu0
  %v2948 = vadd.f32 0.0, %v2947
  %v2949 = vpop.f32.mrf.mxu0
  %2950 = vdwg.mxu0
  %v2951 = vadd.f32 %v2742, %v2945
  %v2952 = vadd.f32 %v2743, %v2948
  %s2953 = scalar_lea.vmem %s17, 1
  %v2954 = vld [vmem:[%s2953] sm:$0x1]
  %v2956 = vlaneseq
  %v2957 = vshrl.u32 %v2956, 7
  %v2958 = vsub.s32 0, %v2957
  %v2959 = vrot.slane %v2954, %v2958
  %v2961 = vadd.f32 %v2951, %v2959
  %v2962 = vadd.f32 %v2952, %v2959
  %v2963 = vsel %vm74, %v2961, 0.0
  %2964 = vadd.xlane.f32.xlu0 %v2963
  %v2965 = vpop.xlane.xlu0 %2964
  %v2966 = vsel %vm74, %v2962, 0.0
  %2967 = vadd.xlane.f32.xlu0 %v2966
  %v2968 = vpop.xlane.xlu0 %2967
  %v2969 = vmul.f32 %v2965, %v81
  %v2970 = vmul.f32 %v2968, %v81
  %v2971 = vsub.f32 %v2961, %v2969
  %v2972 = vsub.f32 %v2962, %v2970
  %v2973 = vmul.f32 %v2971, %v2971
  %v2974 = vmul.f32 %v2972, %v2972
  %v2975 = vsel %vm74, %v2973, 0.0
  %2976 = vadd.xlane.f32.xlu0 %v2975
  %v2977 = vpop.xlane.xlu0 %2976
  %v2978 = vsel %vm74, %v2974, 0.0
  %2979 = vadd.xlane.f32.xlu0 %v2978
  %v2980 = vpop.xlane.xlu0 %2979
  %v2981 = vmul.f32 %v2977, %v81
  %v2982 = vmul.f32 %v2980, %v81
  %v2983 = vadd.f32 %v2981, 1e-05
  %v2984 = vadd.f32 %v2982, 1e-05
  %v2985 = vrsqrt.pop %v2983
  %v2986 = vrsqrt.pop %v2984
  %v2987 = vmul.f32 %v2971, %v2985
  %v2988 = vmul.f32 %v2972, %v2986
  %v2989 = vlaneseq
  %v2990 = vshrl.u32 %v2989, 7
  %v2991 = vsub.s32 2, %v2990
  %v2992 = vrot.slane %v66, %v2991
  %v2993 = vmul.f32 %v2987, %v2992
  %v2994 = vmul.f32 %v2988, %v2992
  %v2995 = vlaneseq
  %v2996 = vshrl.u32 %v2995, 7
  %v2997 = vsub.s32 3, %v2996
  %v2998 = vrot.slane %v66, %v2997
  %v2999 = vadd.f32 %v2993, %v2998
  %v3000 = vadd.f32 %v2994, %v2998
  %v3001 = vld [vmem:[%s18] sm:$0x3]
  %v3002 = vld [vmem:[%s19] sm:$0x1]
  %v3003 = vlaneseq
  %v3004 = vshrl.u32 %v3003, 7
  %v3005 = vsub.s32 0, %v3004
  %v3006 = vrot.slane %v3001, %v3005
  %v3007 = vmul.f32 %v2999, %v3006
  %v3008 = vmul.f32 %v3000, %v3006
  %v3010 = vlaneseq
  %v3011 = vshrl.u32 %v3010, 7
  %v3012 = vsub.s32 0, %v3011
  %v3013 = vrot.slane %v3002, %v3012
  %3014 = vset.pattern.permute.xlu0 0
  %3015 = vperm.xlu0 %3014, %v3013
  %v3016 = vpop.permute.xlu0 %3015
  %v3019 = vsel %vm74, %v3007, 0
  %v3022 = vsel %vm74, %v2999, 0
  %3024 = vmatprep.subr.mxu0 0.0
  %3025 = vmatpush1.xpose.msra.mxu0 0.0
  %3026 = vmatprep.subr.mxu0 0.0
  %3027 = vmatpush1.xpose.msra.mxu0 0.0
  %3028 = vmatprep.subr.mxu0 0.0
  %3029 = vmatpush1.xpose.msra.mxu0 0.0
  %3030 = vmatprep.subr.mxu0 0.0
  %3031 = vmatpush1.xpose.msra.mxu0 0.0
  %3032 = vmatprep.subr.mxu0 0.0
  %3033 = vmatpush1.xpose.msra.mxu0 0.0
  %3034 = vmatprep.subr.mxu0 0.0
  %3035 = vmatpush1.xpose.msra.mxu0 0.0
  %3036 = vmatprep.subr.mxu0 0.0
  %3037 = vmatpush1.xpose.msra.mxu0 0.0
  %3038 = vmatprep.subr.mxu0 0.0
  %3039 = vmatpush1.xpose.msra.mxu0 0.0
  %3040 = vmatprep.subr.mxu0 0.0
  %3041 = vmatpush1.xpose.msra.mxu0 0.0
  %3042 = vmatprep.subr.mxu0 0.0
  %3043 = vmatpush1.xpose.msra.mxu0 0.0
  %3044 = vmatprep.subr.mxu0 0.0
  %3045 = vmatpush1.xpose.msra.mxu0 0.0
  %3046 = vmatprep.subr.mxu0 0.0
  %3047 = vmatpush1.xpose.msra.mxu0 0.0
  %3048 = vmatprep.subr.mxu0 0.0
  %3049 = vmatpush1.xpose.msra.mxu0 0.0
  %3050 = vmatprep.subr.mxu0 0.0
  %3051 = vmatpush1.xpose.msra.mxu0 0.0
  %3052 = vmatprep.subr.mxu0 0.0
  %3053 = vmatpush1.xpose.msra.mxu0 0.0
  %3054 = vmatprep.subr.mxu0 0.0
  %3055 = vmatpush1.xpose.msra.mxu0 %v3022
  %3056 = vmatprep.subr.mxu0 0.0
  %3057 = vmatpush2.xpose.msra.mxu0 0.0
  %3058 = vmatprep.subr.mxu0 0.0
  %3059 = vmatpush2.xpose.msra.mxu0 0.0
  %3060 = vmatprep.subr.mxu0 0.0
  %3061 = vmatpush2.xpose.msra.mxu0 0.0
  %3062 = vmatprep.subr.mxu0 0.0
  %3063 = vmatpush2.xpose.msra.mxu0 0.0
  %3064 = vmatprep.subr.mxu0 0.0
  %3065 = vmatpush2.xpose.msra.mxu0 0.0
  %3066 = vmatprep.subr.mxu0 0.0
  %3067 = vmatpush2.xpose.msra.mxu0 0.0
  %3068 = vmatprep.subr.mxu0 0.0
  %3069 = vmatpush2.xpose.msra.mxu0 0.0
  %3070 = vmatprep.subr.mxu0 0.0
  %3071 = vmatpush2.xpose.msra.mxu0 0.0
  %3072 = vmatprep.subr.mxu0 0.0
  %3073 = vmatpush2.xpose.msra.mxu0 0.0
  %3074 = vmatprep.subr.mxu0 0.0
  %3075 = vmatpush2.xpose.msra.mxu0 0.0
  %3076 = vmatprep.subr.mxu0 0.0
  %3077 = vmatpush2.xpose.msra.mxu0 0.0
  %3078 = vmatprep.subr.mxu0 0.0
  %3079 = vmatpush2.xpose.msra.mxu0 0.0
  %3080 = vmatprep.subr.mxu0 0.0
  %3081 = vmatpush2.xpose.msra.mxu0 0.0
  %3082 = vmatprep.subr.mxu0 0.0
  %3083 = vmatpush2.xpose.msra.mxu0 0.0
  %3084 = vmatprep.subr.mxu0 0.0
  %3085 = vmatpush2.xpose.msra.mxu0 0.0
  %3086 = vmatprep.subr.mxu0 0.0
  %3087 = vmatpush2.xpose.msra.mxu0 0.0
  %3088 = vmatprep.mubr.f32.mxu0 0.0
  %3089 = vmatmul.mubr.f32.gmra.mxu0 %v3019
  %v3090 = vpop.f32.mrf.mxu0
  %v3091 = vadd.f32 %v3016, %v3090
  %v3092 = vpop.f32.mrf.mxu0
  %3093 = vdwg.mxu0
  %v3095 = vsel %vm74, %v3008, 0
  %v3098 = vsel %vm74, %v3000, 0
  %3100 = vmatprep.subr.mxu0 0.0
  %3101 = vmatpush1.xpose.msra.mxu0 0.0
  %3102 = vmatprep.subr.mxu0 0.0
  %3103 = vmatpush1.xpose.msra.mxu0 0.0
  %3104 = vmatprep.subr.mxu0 0.0
  %3105 = vmatpush1.xpose.msra.mxu0 0.0
  %3106 = vmatprep.subr.mxu0 0.0
  %3107 = vmatpush1.xpose.msra.mxu0 0.0
  %3108 = vmatprep.subr.mxu0 0.0
  %3109 = vmatpush1.xpose.msra.mxu0 0.0
  %3110 = vmatprep.subr.mxu0 0.0
  %3111 = vmatpush1.xpose.msra.mxu0 0.0
  %3112 = vmatprep.subr.mxu0 0.0
  %3113 = vmatpush1.xpose.msra.mxu0 0.0
  %3114 = vmatprep.subr.mxu0 0.0
  %3115 = vmatpush1.xpose.msra.mxu0 0.0
  %3116 = vmatprep.subr.mxu0 0.0
  %3117 = vmatpush1.xpose.msra.mxu0 0.0
  %3118 = vmatprep.subr.mxu0 0.0
  %3119 = vmatpush1.xpose.msra.mxu0 0.0
  %3120 = vmatprep.subr.mxu0 0.0
  %3121 = vmatpush1.xpose.msra.mxu0 0.0
  %3122 = vmatprep.subr.mxu0 0.0
  %3123 = vmatpush1.xpose.msra.mxu0 0.0
  %3124 = vmatprep.subr.mxu0 0.0
  %3125 = vmatpush1.xpose.msra.mxu0 0.0
  %3126 = vmatprep.subr.mxu0 0.0
  %3127 = vmatpush1.xpose.msra.mxu0 0.0
  %3128 = vmatprep.subr.mxu0 0.0
  %3129 = vmatpush1.xpose.msra.mxu0 0.0
  %3130 = vmatprep.subr.mxu0 0.0
  %3131 = vmatpush1.xpose.msra.mxu0 %v3098
  %3132 = vmatprep.subr.mxu0 0.0
  %3133 = vmatpush2.xpose.msra.mxu0 0.0
  %3134 = vmatprep.subr.mxu0 0.0
  %3135 = vmatpush2.xpose.msra.mxu0 0.0
  %3136 = vmatprep.subr.mxu0 0.0
  %3137 = vmatpush2.xpose.msra.mxu0 0.0
  %3138 = vmatprep.subr.mxu0 0.0
  %3139 = vmatpush2.xpose.msra.mxu0 0.0
  %3140 = vmatprep.subr.mxu0 0.0
  %3141 = vmatpush2.xpose.msra.mxu0 0.0
  %3142 = vmatprep.subr.mxu0 0.0
  %3143 = vmatpush2.xpose.msra.mxu0 0.0
  %3144 = vmatprep.subr.mxu0 0.0
  %3145 = vmatpush2.xpose.msra.mxu0 0.0
  %3146 = vmatprep.subr.mxu0 0.0
  %3147 = vmatpush2.xpose.msra.mxu0 0.0
  %3148 = vmatprep.subr.mxu0 0.0
  %3149 = vmatpush2.xpose.msra.mxu0 0.0
  %3150 = vmatprep.subr.mxu0 0.0
  %3151 = vmatpush2.xpose.msra.mxu0 0.0
  %3152 = vmatprep.subr.mxu0 0.0
  %3153 = vmatpush2.xpose.msra.mxu0 0.0
  %3154 = vmatprep.subr.mxu0 0.0
  %3155 = vmatpush2.xpose.msra.mxu0 0.0
  %3156 = vmatprep.subr.mxu0 0.0
  %3157 = vmatpush2.xpose.msra.mxu0 0.0
  %3158 = vmatprep.subr.mxu0 0.0
  %3159 = vmatpush2.xpose.msra.mxu0 0.0
  %3160 = vmatprep.subr.mxu0 0.0
  %3161 = vmatpush2.xpose.msra.mxu0 0.0
  %3162 = vmatprep.subr.mxu0 0.0
  %3163 = vmatpush2.xpose.msra.mxu0 0.0
  %3164 = vmatprep.mubr.f32.mxu0 0.0
  %3165 = vmatmul.mubr.f32.gmra.mxu0 %v3095
  %v3166 = vpop.f32.mrf.mxu0
  %v3167 = vadd.f32 %v3016, %v3166
  %v3168 = vpop.f32.mrf.mxu0
  %3169 = vdwg.mxu0
  %3170 = vst.msk [vmem:[%s20] sm:$0xff] %vm517, %v3091
  %3171 = vst.msk [vmem:[%s20 + $0x10] sm:$0xff] %vm517, %v3167
  %v3172 = vlaneseq
  %v3173 = vshrl.u32 %v3172, 7
  %v3174 = vsub.s32 1, %v3173
  %v3175 = vrot.slane %v3001, %v3174
  %v3176 = vmul.f32 %v2999, %v3175
  %v3177 = vmul.f32 %v3000, %v3175
  %3178 = vset.pattern.permute.xlu0 1
  %3179 = vperm.xlu0 %3178, %v3013
  %v3180 = vpop.permute.xlu0 %3179
  %v3183 = vsel %vm74, %v3176, 0
  %3185 = vmatprep.subr.mxu0 0.0
  %3186 = vmatpush1.xpose.msra.mxu0 0.0
  %3187 = vmatprep.subr.mxu0 0.0
  %3188 = vmatpush1.xpose.msra.mxu0 0.0
  %3189 = vmatprep.subr.mxu0 0.0
  %3190 = vmatpush1.xpose.msra.mxu0 0.0
  %3191 = vmatprep.subr.mxu0 0.0
  %3192 = vmatpush1.xpose.msra.mxu0 0.0
  %3193 = vmatprep.subr.mxu0 0.0
  %3194 = vmatpush1.xpose.msra.mxu0 0.0
  %3195 = vmatprep.subr.mxu0 0.0
  %3196 = vmatpush1.xpose.msra.mxu0 0.0
  %3197 = vmatprep.subr.mxu0 0.0
  %3198 = vmatpush1.xpose.msra.mxu0 0.0
  %3199 = vmatprep.subr.mxu0 0.0
  %3200 = vmatpush1.xpose.msra.mxu0 0.0
  %3201 = vmatprep.subr.mxu0 0.0
  %3202 = vmatpush1.xpose.msra.mxu0 0.0
  %3203 = vmatprep.subr.mxu0 0.0
  %3204 = vmatpush1.xpose.msra.mxu0 0.0
  %3205 = vmatprep.subr.mxu0 0.0
  %3206 = vmatpush1.xpose.msra.mxu0 0.0
  %3207 = vmatprep.subr.mxu0 0.0
  %3208 = vmatpush1.xpose.msra.mxu0 0.0
  %3209 = vmatprep.subr.mxu0 0.0
  %3210 = vmatpush1.xpose.msra.mxu0 0.0
  %3211 = vmatprep.subr.mxu0 0.0
  %3212 = vmatpush1.xpose.msra.mxu0 0.0
  %3213 = vmatprep.subr.mxu0 0.0
  %3214 = vmatpush1.xpose.msra.mxu0 0.0
  %3215 = vmatprep.subr.mxu0 0.0
  %3216 = vmatpush1.xpose.msra.mxu0 %v3022
  %3217 = vmatprep.subr.mxu0 0.0
  %3218 = vmatpush2.xpose.msra.mxu0 0.0
  %3219 = vmatprep.subr.mxu0 0.0
  %3220 = vmatpush2.xpose.msra.mxu0 0.0
  %3221 = vmatprep.subr.mxu0 0.0
  %3222 = vmatpush2.xpose.msra.mxu0 0.0
  %3223 = vmatprep.subr.mxu0 0.0
  %3224 = vmatpush2.xpose.msra.mxu0 0.0
  %3225 = vmatprep.subr.mxu0 0.0
  %3226 = vmatpush2.xpose.msra.mxu0 0.0
  %3227 = vmatprep.subr.mxu0 0.0
  %3228 = vmatpush2.xpose.msra.mxu0 0.0
  %3229 = vmatprep.subr.mxu0 0.0
  %3230 = vmatpush2.xpose.msra.mxu0 0.0
  %3231 = vmatprep.subr.mxu0 0.0
  %3232 = vmatpush2.xpose.msra.mxu0 0.0
  %3233 = vmatprep.subr.mxu0 0.0
  %3234 = vmatpush2.xpose.msra.mxu0 0.0
  %3235 = vmatprep.subr.mxu0 0.0
  %3236 = vmatpush2.xpose.msra.mxu0 0.0
  %3237 = vmatprep.subr.mxu0 0.0
  %3238 = vmatpush2.xpose.msra.mxu0 0.0
  %3239 = vmatprep.subr.mxu0 0.0
  %3240 = vmatpush2.xpose.msra.mxu0 0.0
  %3241 = vmatprep.subr.mxu0 0.0
  %3242 = vmatpush2.xpose.msra.mxu0 0.0
  %3243 = vmatprep.subr.mxu0 0.0
  %3244 = vmatpush2.xpose.msra.mxu0 0.0
  %3245 = vmatprep.subr.mxu0 0.0
  %3246 = vmatpush2.xpose.msra.mxu0 0.0
  %3247 = vmatprep.subr.mxu0 0.0
  %3248 = vmatpush2.xpose.msra.mxu0 0.0
  %3249 = vmatprep.mubr.f32.mxu0 0.0
  %3250 = vmatmul.mubr.f32.gmra.mxu0 %v3183
  %v3251 = vpop.f32.mrf.mxu0
  %v3252 = vadd.f32 %v3180, %v3251
  %v3253 = vpop.f32.mrf.mxu0
  %3254 = vdwg.mxu0
  %v3256 = vsel %vm74, %v3177, 0
  %3258 = vmatprep.subr.mxu0 0.0
  %3259 = vmatpush1.xpose.msra.mxu0 0.0
  %3260 = vmatprep.subr.mxu0 0.0
  %3261 = vmatpush1.xpose.msra.mxu0 0.0
  %3262 = vmatprep.subr.mxu0 0.0
  %3263 = vmatpush1.xpose.msra.mxu0 0.0
  %3264 = vmatprep.subr.mxu0 0.0
  %3265 = vmatpush1.xpose.msra.mxu0 0.0
  %3266 = vmatprep.subr.mxu0 0.0
  %3267 = vmatpush1.xpose.msra.mxu0 0.0
  %3268 = vmatprep.subr.mxu0 0.0
  %3269 = vmatpush1.xpose.msra.mxu0 0.0
  %3270 = vmatprep.subr.mxu0 0.0
  %3271 = vmatpush1.xpose.msra.mxu0 0.0
  %3272 = vmatprep.subr.mxu0 0.0
  %3273 = vmatpush1.xpose.msra.mxu0 0.0
  %3274 = vmatprep.subr.mxu0 0.0
  %3275 = vmatpush1.xpose.msra.mxu0 0.0
  %3276 = vmatprep.subr.mxu0 0.0
  %3277 = vmatpush1.xpose.msra.mxu0 0.0
  %3278 = vmatprep.subr.mxu0 0.0
  %3279 = vmatpush1.xpose.msra.mxu0 0.0
  %3280 = vmatprep.subr.mxu0 0.0
  %3281 = vmatpush1.xpose.msra.mxu0 0.0
  %3282 = vmatprep.subr.mxu0 0.0
  %3283 = vmatpush1.xpose.msra.mxu0 0.0
  %3284 = vmatprep.subr.mxu0 0.0
  %3285 = vmatpush1.xpose.msra.mxu0 0.0
  %3286 = vmatprep.subr.mxu0 0.0
  %3287 = vmatpush1.xpose.msra.mxu0 0.0
  %3288 = vmatprep.subr.mxu0 0.0
  %3289 = vmatpush1.xpose.msra.mxu0 %v3098
  %3290 = vmatprep.subr.mxu0 0.0
  %3291 = vmatpush2.xpose.msra.mxu0 0.0
  %3292 = vmatprep.subr.mxu0 0.0
  %3293 = vmatpush2.xpose.msra.mxu0 0.0
  %3294 = vmatprep.subr.mxu0 0.0
  %3295 = vmatpush2.xpose.msra.mxu0 0.0
  %3296 = vmatprep.subr.mxu0 0.0
  %3297 = vmatpush2.xpose.msra.mxu0 0.0
  %3298 = vmatprep.subr.mxu0 0.0
  %3299 = vmatpush2.xpose.msra.mxu0 0.0
  %3300 = vmatprep.subr.mxu0 0.0
  %3301 = vmatpush2.xpose.msra.mxu0 0.0
  %3302 = vmatprep.subr.mxu0 0.0
  %3303 = vmatpush2.xpose.msra.mxu0 0.0
  %3304 = vmatprep.subr.mxu0 0.0
  %3305 = vmatpush2.xpose.msra.mxu0 0.0
  %3306 = vmatprep.subr.mxu0 0.0
  %3307 = vmatpush2.xpose.msra.mxu0 0.0
  %3308 = vmatprep.subr.mxu0 0.0
  %3309 = vmatpush2.xpose.msra.mxu0 0.0
  %3310 = vmatprep.subr.mxu0 0.0
  %3311 = vmatpush2.xpose.msra.mxu0 0.0
  %3312 = vmatprep.subr.mxu0 0.0
  %3313 = vmatpush2.xpose.msra.mxu0 0.0
  %3314 = vmatprep.subr.mxu0 0.0
  %3315 = vmatpush2.xpose.msra.mxu0 0.0
  %3316 = vmatprep.subr.mxu0 0.0
  %3317 = vmatpush2.xpose.msra.mxu0 0.0
  %3318 = vmatprep.subr.mxu0 0.0
  %3319 = vmatpush2.xpose.msra.mxu0 0.0
  %3320 = vmatprep.subr.mxu0 0.0
  %3321 = vmatpush2.xpose.msra.mxu0 0.0
  %3322 = vmatprep.mubr.f32.mxu0 0.0
  %3323 = vmatmul.mubr.f32.gmra.mxu0 %v3256
  %v3324 = vpop.f32.mrf.mxu0
  %v3325 = vadd.f32 %v3180, %v3324
  %v3326 = vpop.f32.mrf.mxu0
  %3327 = vdwg.mxu0
  %s3328 = scalar_lea.vmem %s20, 8
  %3329 = vst.msk [vmem:[%s3328] sm:$0xff] %vm517, %v3252
  %3330 = vst.msk [vmem:[%s3328 + $0x10] sm:$0xff] %vm517, %v3325
  // Predicated region
  $region82: #{protein_bert_for_contact_prediction.1} parent=0 // pred_check
    _
  $region83: #{protein_bert_for_contact_prediction.1} parent=0 // pred_check_branch
    %3332 = sbr.rel (0) target = $region85
  $region84: #{protein_bert_for_contact_prediction.1} parent=0 // pred_region
    _
  $region85: #{protein_bert_for_contact_prediction.1} parent=0 // pred_fallthru
    _
  // Predicated region
  $region86: #{protein_bert_for_contact_prediction.1} parent=0 // pred_check
    _
  $region87: #{protein_bert_for_contact_prediction.1} parent=0 // pred_check_branch
    %3334 = sbr.rel (0) target = $region89
  $region88: #{protein_bert_for_contact_prediction.1} parent=0 // pred_region
    _
  $region89: #{protein_bert_for_contact_prediction.1} parent=0 // pred_fallthru
    _

</llo_original>
